<compile_context>
chip_gen: v7x
topology: tpu7x:2x2x1
jax: 0.10.0
libtpu: 0.0.40
codegen_flags: <defaults>
</compile_context>

<pallas_src>
import functools

import jax
import jax.numpy as jnp
from jax.experimental import pallas as pl
from jax.experimental.pallas import tpu as pltpu

BN_EPS = 1e-5


def _bn_train(h, gamma, beta, mask, inv_n):
    """BatchNorm1d with (row-masked) batch statistics, one-pass variance, f32 math."""
    hm = h * mask                                          # zero out padded batch rows
    mu = jnp.sum(hm, axis=0, keepdims=True) * inv_n
    ex2 = jnp.sum(hm * h, axis=0, keepdims=True) * inv_n
    var = ex2 - mu * mu                                    # biased variance (PyTorch train)
    return (h - mu) * jax.lax.rsqrt(var + BN_EPS) * gamma + beta


def _classifier_kernel(
    pooled_ref,                       # [Bp, 8]    bf16  (GAP'd image, channels padded 3->8)
    mask_ref,                         # [Bp, 1]    f32   (1.0 = real row, 0.0 = batch pad)
    ws_ref, bs_ref,                   # stand-in stem:  [8, 2048] bf16, [1, 2048] f32
    g0_ref, be0_ref,                  # bn_resnet:      [1, 2048] f32 x2
    w1_ref,                           # Linear 2048->1024, streamed K-block [tk, 1024] bf16
    g1_ref, be1_ref,                  # BN(1024)
    w2_ref, g2_ref, be2_ref,          # Linear 1024->512 bf16 + BN(512)
    w3_ref, g3_ref, be3_ref,          # Linear  512->256 bf16 + BN(256)
    w4_ref, b4_ref,                   # Linear  256->128 (3 padded) bf16, [1, 128] f32
    o_ref,                            # [Bp, 128]  f32
    feat_ref,                         # scratch [Bp, 2048] bf16  (bn_resnet output)
    acc_ref,                          # scratch [Bp, 1024] f32   (w1 accumulator)
    *, inv_n,
):
    k = pl.program_id(0)
    tk = w1_ref.shape[0]
    mask = mask_ref[...]

    # ---- first grid step: stand-in backbone tail + bn_resnet --------------------
    @pl.when(k == 0)
    def _():
        feat = jnp.dot(pooled_ref[...], ws_ref[...],
                       preferred_element_type=jnp.float32)
        feat = jnp.maximum(feat + bs_ref[...], 0.0)                     # [Bp, 2048]
        h0 = _bn_train(feat, g0_ref[...], be0_ref[...], mask, inv_n)
        feat_ref[...] = h0.astype(jnp.bfloat16)
        acc_ref[...] = jnp.zeros_like(acc_ref)

    # ---- K-tiled Linear(2048 -> 1024): one tk-chunk per grid step ----------------
    # (b1 bias omitted: exactly cancelled by the following batch-stat BN.)
    col = pl.multiple_of(k * tk, tk)
    acc_ref[...] += jnp.dot(feat_ref[:, pl.ds(col, tk)], w1_ref[...],
                            preferred_element_type=jnp.float32)

    # ---- last grid step: rest of the head (small weights, VMEM-resident) --------
    @pl.when(k == pl.num_programs(0) - 1)
    def _():
        h = _bn_train(acc_ref[...], g1_ref[...], be1_ref[...], mask, inv_n)
        h = jnp.maximum(h, 0.0).astype(jnp.bfloat16)

        h = jnp.dot(h, w2_ref[...], preferred_element_type=jnp.float32)
        h = _bn_train(h, g2_ref[...], be2_ref[...], mask, inv_n)
        h = jnp.maximum(h, 0.0).astype(jnp.bfloat16)

        h = jnp.dot(h, w3_ref[...], preferred_element_type=jnp.float32)
        h = _bn_train(h, g3_ref[...], be3_ref[...], mask, inv_n)
        h = jnp.maximum(h, 0.0).astype(jnp.bfloat16)

        o_ref[...] = (
            jnp.dot(h, w4_ref[...], preferred_element_type=jnp.float32) + b4_ref[...]
        )


def team_supervised_classifier(x_nchw, params, *, tk=512):
    """x_nchw: float32 [B, 3, H, W] -> logits [B, 3]."""
    B, C, H, W = x_nchw.shape
    assert C == 3

    # Stand-in backbone front-end (global average pool) with plain XLA, so the
    # raw image is never DMA'd into VMEM; pad channels 3 -> 8 for sublane layout.
    pooled = jnp.mean(x_nchw.astype(jnp.float32), axis=(2, 3))          # [B, 3]
    pooled = jnp.pad(pooled, ((0, 0), (0, 8 - C)))                      # [B, 8]

    # Pad the batch to a sublane multiple; the row mask keeps BN statistics exact.
    # NOTE: the batch is never tiled across the grid -- BN needs the whole batch.
    b_pad = pl.cdiv(B, 8) * 8
    if b_pad != B:
        pooled = jnp.pad(pooled, ((0, b_pad - B), (0, 0)))
    mask = (jnp.arange(b_pad) < B).astype(jnp.float32)[:, None]         # [Bp, 1]
    pooled = pooled.astype(jnp.bfloat16)

    w1 = params["w1"]
    K, N1 = w1.shape                                                    # 2048, 1024
    assert K % tk == 0
    kt = K // tk

    # Pad the 3-wide classifier to a lane-dense 128-wide output.
    w4 = params["w4"]
    n_cls = w4.shape[1]
    w4p = jnp.pad(w4, ((0, 0), (0, 128 - n_cls)))
    b4p = jnp.pad(params["b4"], ((0, 0), (0, 128 - n_cls)))

    def resident(arr):                       # same block every grid step -> DMA'd once
        return pl.BlockSpec(arr.shape, lambda k: (0, 0))

    args = (
        pooled, mask,
        params["w_stem"], params["b_stem"],
        params["g0"], params["be0"],
        w1,
        params["g1"], params["be1"],
        params["w2"], params["g2"], params["be2"],
        params["w3"], params["g3"], params["be3"],
        w4p, b4p,
    )
    in_specs = [
        resident(pooled), resident(mask),
        resident(params["w_stem"]), resident(params["b_stem"]),
        resident(params["g0"]), resident(params["be0"]),
        pl.BlockSpec((tk, N1), lambda k: (k, 0)),        # streamed, double-buffered w1
        resident(params["g1"]), resident(params["be1"]),
        resident(params["w2"]), resident(params["g2"]), resident(params["be2"]),
        resident(params["w3"]), resident(params["g3"]), resident(params["be3"]),
        resident(w4p), resident(b4p),
    ]

    out = pl.pallas_call(
        functools.partial(_classifier_kernel, inv_n=1.0 / B),
        out_shape=jax.ShapeDtypeStruct((b_pad, 128), jnp.float32),
        grid=(kt,),
        in_specs=in_specs,
        out_specs=pl.BlockSpec((b_pad, 128), lambda k: (0, 0)),
        scratch_shapes=[
            pltpu.VMEM((b_pad, K), jnp.bfloat16),        # bn_resnet output (matmul LHS)
            pltpu.VMEM((b_pad, N1), jnp.float32),        # Linear(2048->1024) accumulator
        ],
        compiler_params=pltpu.CompilerParams(
            dimension_semantics=("arbitrary",),          # K axis carries the accumulator
            vmem_limit_bytes=32 * 1024 * 1024,           # safe on v7x (64 MiB) too
        ),
    )(*args)
    return out[:B, :n_cls]


def make_params(key):
    """Deterministic synthetic parameters (shapes from the module's __init__)."""
    ks = jax.random.split(key, 8)

    def lin_w(k, fin, fout):
        w = jax.random.normal(k, (fin, fout), jnp.float32) / jnp.sqrt(jnp.float32(fin))
        return w.astype(jnp.bfloat16)

    # Stand-in backbone projection (only the first 3 channel rows are meaningful).
    w_stem = jnp.zeros((8, 2048), jnp.float32)
    w_stem = w_stem.at[:3].set(
        jax.random.normal(ks[0], (3, 2048), jnp.float32) / jnp.sqrt(3.0)
    ).astype(jnp.bfloat16)
    b_stem = jnp.zeros((1, 2048), jnp.float32)

    # b1/b2/b3 are intentionally not materialised: a per-feature bias feeding a
    # batch-stat BatchNorm is cancelled exactly by the mean subtraction.
    w1 = lin_w(ks[1], 2048, 1024)
    w2 = lin_w(ks[2], 1024, 512)
    w3 = lin_w(ks[3], 512, 256)
    w4 = lin_w(ks[4], 256, 3)
    b4 = jnp.zeros((1, 3), jnp.float32)

    def bn(n):  # PyTorch BatchNorm default init: weight=1, bias=0
        return jnp.ones((1, n), jnp.float32), jnp.zeros((1, n), jnp.float32)

    g0, be0 = bn(2048)
    g1, be1 = bn(1024)
    g2, be2 = bn(512)
    g3, be3 = bn(256)

    return dict(
        w_stem=w_stem, b_stem=b_stem,
        g0=g0, be0=be0,
        w1=w1, g1=g1, be1=be1,
        w2=w2, g2=g2, be2=be2,
        w3=w3, g3=g3, be3=be3,
        w4=w4, b4=b4,
    )


def _reference(x_nchw, p):
    """Pure-JAX reference of the same math (same bf16 casts) for correctness."""
    B, C = x_nchw.shape[0], x_nchw.shape[1]
    pooled = jnp.mean(x_nchw.astype(jnp.float32), axis=(2, 3))
    pooled = jnp.pad(pooled, ((0, 0), (0, 8 - C))).astype(jnp.bfloat16)
    ones = jnp.ones((B, 1), jnp.float32)
    inv_n = 1.0 / B

    feat = jnp.dot(pooled, p["w_stem"], preferred_element_type=jnp.float32)
    feat = jnp.maximum(feat + p["b_stem"], 0.0)
    h = _bn_train(feat, p["g0"], p["be0"], ones, inv_n)

    h = jnp.dot(h.astype(jnp.bfloat16), p["w1"], preferred_element_type=jnp.float32)
    h = jnp.maximum(_bn_train(h, p["g1"], p["be1"], ones, inv_n), 0.0)

    h = jnp.dot(h.astype(jnp.bfloat16), p["w2"], preferred_element_type=jnp.float32)
    h = jnp.maximum(_bn_train(h, p["g2"], p["be2"], ones, inv_n), 0.0)

    h = jnp.dot(h.astype(jnp.bfloat16), p["w3"], preferred_element_type=jnp.float32)
    h = jnp.maximum(_bn_train(h, p["g3"], p["be3"], ones, inv_n), 0.0)

    return jnp.dot(h.astype(jnp.bfloat16), p["w4"],
                   preferred_element_type=jnp.float32) + p["b4"]


if __name__ == "__main__":
    key = jax.random.PRNGKey(0)
    k_x, k_p = jax.random.split(key)

    B, C, H, W = 8, 3, 16, 16
    x = jax.random.normal(k_x, (B, C, H, W), jnp.float32)
    params = make_params(k_p)

    out = team_supervised_classifier(x, params)
    out = jax.block_until_ready(out)

    ref = _reference(x, params)
    assert out.shape == (B, 3)
    assert bool(jnp.all(jnp.isfinite(out)))
    assert bool(jnp.allclose(out, ref, atol=2e-3, rtol=2e-3))

    print("KERNEL_OK")
</pallas_src>

<mosaic_0001>
module attributes {stable_mosaic.version = 11 : i64} {
  func.func @_classifier_kernel(%arg0: i32, %arg1: memref<8x8xbf16, #tpu.memory_space<vmem>>, %arg2: memref<8x1xf32, #tpu.memory_space<vmem>>, %arg3: memref<8x2048xbf16, #tpu.memory_space<vmem>>, %arg4: memref<1x2048xf32, #tpu.memory_space<vmem>>, %arg5: memref<1x2048xf32, #tpu.memory_space<vmem>>, %arg6: memref<1x2048xf32, #tpu.memory_space<vmem>>, %arg7: memref<512x1024xbf16, #tpu.memory_space<vmem>>, %arg8: memref<1x1024xf32, #tpu.memory_space<vmem>>, %arg9: memref<1x1024xf32, #tpu.memory_space<vmem>>, %arg10: memref<1024x512xbf16, #tpu.memory_space<vmem>>, %arg11: memref<1x512xf32, #tpu.memory_space<vmem>>, %arg12: memref<1x512xf32, #tpu.memory_space<vmem>>, %arg13: memref<512x256xbf16, #tpu.memory_space<vmem>>, %arg14: memref<1x256xf32, #tpu.memory_space<vmem>>, %arg15: memref<1x256xf32, #tpu.memory_space<vmem>>, %arg16: memref<256x128xbf16, #tpu.memory_space<vmem>>, %arg17: memref<1x128xf32, #tpu.memory_space<vmem>>, %arg18: memref<8x128xf32, #tpu.memory_space<vmem>>, %arg19: memref<8x2048xbf16, #tpu.memory_space<vmem>>, %arg20: memref<8x1024xf32, #tpu.memory_space<vmem>>) attributes {dimension_semantics = [#tpu.dimension_semantics<arbitrary>], iteration_bounds = array<i64: 4>, scalar_prefetch = 0 : i64, scratch_operands = 2 : i64, tpu.core_type = #tpu.core_type<tc>, window_params = [{pipeline_mode = #tpu.pipeline_mode<synchronous>, transform_indices = @transform_0, window_bounds = array<i64: 8, 8>}, {pipeline_mode = #tpu.pipeline_mode<synchronous>, transform_indices = @transform_1, window_bounds = array<i64: 8, 1>}, {pipeline_mode = #tpu.pipeline_mode<synchronous>, transform_indices = @transform_2, window_bounds = array<i64: 8, 2048>}, {pipeline_mode = #tpu.pipeline_mode<synchronous>, transform_indices = @transform_3, window_bounds = array<i64: 1, 2048>}, {pipeline_mode = #tpu.pipeline_mode<synchronous>, transform_indices = @transform_4, window_bounds = array<i64: 1, 2048>}, {pipeline_mode = #tpu.pipeline_mode<synchronous>, transform_indices = @transform_5, window_bounds = array<i64: 1, 2048>}, {transform_indices = @transform_6, window_bounds = array<i64: 512, 1024>}, {pipeline_mode = #tpu.pipeline_mode<synchronous>, transform_indices = @transform_7, window_bounds = array<i64: 1, 1024>}, {pipeline_mode = #tpu.pipeline_mode<synchronous>, transform_indices = @transform_8, window_bounds = array<i64: 1, 1024>}, {pipeline_mode = #tpu.pipeline_mode<synchronous>, transform_indices = @transform_9, window_bounds = array<i64: 1024, 512>}, {pipeline_mode = #tpu.pipeline_mode<synchronous>, transform_indices = @transform_10, window_bounds = array<i64: 1, 512>}, {pipeline_mode = #tpu.pipeline_mode<synchronous>, transform_indices = @transform_11, window_bounds = array<i64: 1, 512>}, {pipeline_mode = #tpu.pipeline_mode<synchronous>, transform_indices = @transform_12, window_bounds = array<i64: 512, 256>}, {pipeline_mode = #tpu.pipeline_mode<synchronous>, transform_indices = @transform_13, window_bounds = array<i64: 1, 256>}, {pipeline_mode = #tpu.pipeline_mode<synchronous>, transform_indices = @transform_14, window_bounds = array<i64: 1, 256>}, {pipeline_mode = #tpu.pipeline_mode<synchronous>, transform_indices = @transform_15, window_bounds = array<i64: 256, 128>}, {pipeline_mode = #tpu.pipeline_mode<synchronous>, transform_indices = @transform_16, window_bounds = array<i64: 1, 128>}, {pipeline_mode = #tpu.pipeline_mode<synchronous>, transform_indices = @transform_17, window_bounds = array<i64: 8, 128>}]} {
    %c0 = arith.constant 0 : index
    %c0_0 = arith.constant 0 : index
    %0 = vector.load %arg2[%c0, %c0_0] : memref<8x1xf32, #tpu.memory_space<vmem>>, vector<8x1xf32>
    %c0_i32 = arith.constant 0 : i32
    %1 = arith.cmpi eq, %arg0, %c0_i32 : i32
    %2 = arith.extui %1 : i1 to i32
    %c0_i32_1 = arith.constant 0 : i32
    %3 = arith.cmpi ne, %2, %c0_i32_1 : i32
    scf.if %3 {
      %c0_10 = arith.constant 0 : index
      %c0_11 = arith.constant 0 : index
      %16 = vector.load %arg1[%c0_10, %c0_11] : memref<8x8xbf16, #tpu.memory_space<vmem>>, vector<8x8xbf16>
      %c0_12 = arith.constant 0 : index
      %c0_13 = arith.constant 0 : index
      %17 = vector.load %arg3[%c0_12, %c0_13] : memref<8x2048xbf16, #tpu.memory_space<vmem>>, vector<8x2048xbf16>
      %cst_14 = arith.constant dense<0.000000e+00> : vector<8x2048xf32>
      %18 = tpu.matmul %16, %17, %cst_14 {dimension_numbers = #tpu.dot_dimension_numbers<[1], [0], [0], [1], [0, 0, 1, 1], [], []>} : vector<8x8xbf16>, vector<8x2048xbf16>, vector<8x2048xf32> -> vector<8x2048xf32>
      %c0_15 = arith.constant 0 : index
      %c0_16 = arith.constant 0 : index
      %19 = vector.load %arg4[%c0_15, %c0_16] : memref<1x2048xf32, #tpu.memory_space<vmem>>, vector<1x2048xf32>
      %20 = vector.broadcast %19 : vector<1x2048xf32> to vector<8x2048xf32>
      %21 = arith.addf %18, %20 : vector<8x2048xf32>
      %cst_17 = arith.constant 0.000000e+00 : f32
      %22 = vector.broadcast %cst_17 : f32 to vector<8x2048xf32>
      %23 = arith.maximumf %21, %22 : vector<8x2048xf32>
      %c0_18 = arith.constant 0 : index
      %c0_19 = arith.constant 0 : index
      %24 = vector.load %arg5[%c0_18, %c0_19] : memref<1x2048xf32, #tpu.memory_space<vmem>>, vector<1x2048xf32>
      %c0_20 = arith.constant 0 : index
      %c0_21 = arith.constant 0 : index
      %25 = vector.load %arg6[%c0_20, %c0_21] : memref<1x2048xf32, #tpu.memory_space<vmem>>, vector<1x2048xf32>
      %26 = vector.broadcast %0 : vector<8x1xf32> to vector<8x2048xf32>
      %27 = arith.mulf %23, %26 : vector<8x2048xf32>
      %cst_22 = arith.constant dense<0.000000e+00> : vector<2048xf32>
      %28 = vector.multi_reduction <add>, %27, %cst_22 [0] : vector<8x2048xf32> to vector<2048xf32>
      %29 = vector.shape_cast %28 : vector<2048xf32> to vector<1x2048xf32>
      %cst_23 = arith.constant 1.250000e-01 : f32
      %30 = vector.broadcast %cst_23 : f32 to vector<1x2048xf32>
      %31 = arith.mulf %29, %30 : vector<1x2048xf32>
      %32 = arith.mulf %27, %23 : vector<8x2048xf32>
      %cst_24 = arith.constant dense<0.000000e+00> : vector<2048xf32>
      %33 = vector.multi_reduction <add>, %32, %cst_24 [0] : vector<8x2048xf32> to vector<2048xf32>
      %34 = vector.shape_cast %33 : vector<2048xf32> to vector<1x2048xf32>
      %cst_25 = arith.constant 1.250000e-01 : f32
      %35 = vector.broadcast %cst_25 : f32 to vector<1x2048xf32>
      %36 = arith.mulf %34, %35 : vector<1x2048xf32>
      %37 = arith.mulf %31, %31 : vector<1x2048xf32>
      %38 = arith.subf %36, %37 : vector<1x2048xf32>
      %39 = vector.broadcast %31 : vector<1x2048xf32> to vector<8x2048xf32>
      %40 = arith.subf %23, %39 : vector<8x2048xf32>
      %cst_26 = arith.constant 9.99999974E-6 : f32
      %41 = vector.broadcast %cst_26 : f32 to vector<1x2048xf32>
      %42 = arith.addf %38, %41 : vector<1x2048xf32>
      %43 = math.rsqrt %42 : vector<1x2048xf32>
      %44 = vector.broadcast %43 : vector<1x2048xf32> to vector<8x2048xf32>
      %45 = arith.mulf %40, %44 : vector<8x2048xf32>
      %46 = vector.broadcast %24 : vector<1x2048xf32> to vector<8x2048xf32>
      %47 = arith.mulf %45, %46 : vector<8x2048xf32>
      %48 = vector.broadcast %25 : vector<1x2048xf32> to vector<8x2048xf32>
      %49 = arith.addf %47, %48 : vector<8x2048xf32>
      %50 = arith.truncf %49 : vector<8x2048xf32> to vector<8x2048xbf16>
      %c0_27 = arith.constant 0 : index
      %c0_28 = arith.constant 0 : index
      %51 = vector.load %arg19[%c0_27, %c0_28] : memref<8x2048xbf16, #tpu.memory_space<vmem>>, vector<8x2048xbf16>
      tpu.vector_store %arg19[%c0_27, %c0_28], %50 {strides = array<i32>} : memref<8x2048xbf16, #tpu.memory_space<vmem>>, vector<8x2048xbf16>,
      %cst_29 = arith.constant 0.000000e+00 : f32
      %52 = vector.broadcast %cst_29 : f32 to vector<8x1024xf32>
      %c0_30 = arith.constant 0 : index
      %c0_31 = arith.constant 0 : index
      %53 = vector.load %arg20[%c0_30, %c0_31] : memref<8x1024xf32, #tpu.memory_space<vmem>>, vector<8x1024xf32>
      tpu.vector_store %arg20[%c0_30, %c0_31], %52 {strides = array<i32>} : memref<8x1024xf32, #tpu.memory_space<vmem>>, vector<8x1024xf32>,
    } else {
    }
    %c512_i32 = arith.constant 512 : i32
    %4 = arith.muli %arg0, %c512_i32 : i32
    %5 = tpu.assume_multiple %4, 512 : i32
    %c0_2 = arith.constant 0 : index
    %c0_3 = arith.constant 0 : index
    %6 = vector.load %arg20[%c0_2, %c0_3] : memref<8x1024xf32, #tpu.memory_space<vmem>>, vector<8x1024xf32>
    %c0_4 = arith.constant 0 : index
    %7 = arith.index_cast %5 : i32 to index
    %8 = vector.load %arg19[%c0_4, %7] : memref<8x2048xbf16, #tpu.memory_space<vmem>>, vector<8x512xbf16>
    %c0_5 = arith.constant 0 : index
    %c0_6 = arith.constant 0 : index
    %9 = vector.load %arg7[%c0_5, %c0_6] : memref<512x1024xbf16, #tpu.memory_space<vmem>>, vector<512x1024xbf16>
    %cst = arith.constant dense<0.000000e+00> : vector<8x1024xf32>
    %10 = tpu.matmul %8, %9, %cst {dimension_numbers = #tpu.dot_dimension_numbers<[1], [0], [0], [1], [0, 0, 1, 1], [], []>} : vector<8x512xbf16>, vector<512x1024xbf16>, vector<8x1024xf32> -> vector<8x1024xf32>
    %11 = arith.addf %6, %10 : vector<8x1024xf32>
    %c0_7 = arith.constant 0 : index
    %c0_8 = arith.constant 0 : index
    %12 = vector.load %arg20[%c0_7, %c0_8] : memref<8x1024xf32, #tpu.memory_space<vmem>>, vector<8x1024xf32>
    tpu.vector_store %arg20[%c0_7, %c0_8], %11 {strides = array<i32>} : memref<8x1024xf32, #tpu.memory_space<vmem>>, vector<8x1024xf32>,
    %c3_i32 = arith.constant 3 : i32
    %13 = arith.cmpi eq, %arg0, %c3_i32 : i32
    %14 = arith.extui %13 : i1 to i32
    %c0_i32_9 = arith.constant 0 : i32
    %15 = arith.cmpi ne, %14, %c0_i32_9 : i32
    scf.if %15 {
      %c0_10 = arith.constant 0 : index
      %c0_11 = arith.constant 0 : index
      %16 = vector.load %arg20[%c0_10, %c0_11] : memref<8x1024xf32, #tpu.memory_space<vmem>>, vector<8x1024xf32>
      %c0_12 = arith.constant 0 : index
      %c0_13 = arith.constant 0 : index
      %17 = vector.load %arg8[%c0_12, %c0_13] : memref<1x1024xf32, #tpu.memory_space<vmem>>, vector<1x1024xf32>
      %c0_14 = arith.constant 0 : index
      %c0_15 = arith.constant 0 : index
      %18 = vector.load %arg9[%c0_14, %c0_15] : memref<1x1024xf32, #tpu.memory_space<vmem>>, vector<1x1024xf32>
      %19 = vector.broadcast %0 : vector<8x1xf32> to vector<8x1024xf32>
      %20 = arith.mulf %16, %19 : vector<8x1024xf32>
      %cst_16 = arith.constant dense<0.000000e+00> : vector<1024xf32>
      %21 = vector.multi_reduction <add>, %20, %cst_16 [0] : vector<8x1024xf32> to vector<1024xf32>
      %22 = vector.shape_cast %21 : vector<1024xf32> to vector<1x1024xf32>
      %cst_17 = arith.constant 1.250000e-01 : f32
      %23 = vector.broadcast %cst_17 : f32 to vector<1x1024xf32>
      %24 = arith.mulf %22, %23 : vector<1x1024xf32>
      %25 = arith.mulf %20, %16 : vector<8x1024xf32>
      %cst_18 = arith.constant dense<0.000000e+00> : vector<1024xf32>
      %26 = vector.multi_reduction <add>, %25, %cst_18 [0] : vector<8x1024xf32> to vector<1024xf32>
      %27 = vector.shape_cast %26 : vector<1024xf32> to vector<1x1024xf32>
      %cst_19 = arith.constant 1.250000e-01 : f32
      %28 = vector.broadcast %cst_19 : f32 to vector<1x1024xf32>
      %29 = arith.mulf %27, %28 : vector<1x1024xf32>
      %30 = arith.mulf %24, %24 : vector<1x1024xf32>
      %31 = arith.subf %29, %30 : vector<1x1024xf32>
      %32 = vector.broadcast %24 : vector<1x1024xf32> to vector<8x1024xf32>
      %33 = arith.subf %16, %32 : vector<8x1024xf32>
      %cst_20 = arith.constant 9.99999974E-6 : f32
      %34 = vector.broadcast %cst_20 : f32 to vector<1x1024xf32>
      %35 = arith.addf %31, %34 : vector<1x1024xf32>
      %36 = math.rsqrt %35 : vector<1x1024xf32>
      %37 = vector.broadcast %36 : vector<1x1024xf32> to vector<8x1024xf32>
      %38 = arith.mulf %33, %37 : vector<8x1024xf32>
      %39 = vector.broadcast %17 : vector<1x1024xf32> to vector<8x1024xf32>
      %40 = arith.mulf %38, %39 : vector<8x1024xf32>
      %41 = vector.broadcast %18 : vector<1x1024xf32> to vector<8x1024xf32>
      %42 = arith.addf %40, %41 : vector<8x1024xf32>
      %cst_21 = arith.constant 0.000000e+00 : f32
      %43 = vector.broadcast %cst_21 : f32 to vector<8x1024xf32>
      %44 = arith.maximumf %42, %43 : vector<8x1024xf32>
      %45 = arith.truncf %44 : vector<8x1024xf32> to vector<8x1024xbf16>
      %c0_22 = arith.constant 0 : index
      %c0_23 = arith.constant 0 : index
      %46 = vector.load %arg10[%c0_22, %c0_23] : memref<1024x512xbf16, #tpu.memory_space<vmem>>, vector<1024x512xbf16>
      %cst_24 = arith.constant dense<0.000000e+00> : vector<8x512xf32>
      %47 = tpu.matmul %45, %46, %cst_24 {dimension_numbers = #tpu.dot_dimension_numbers<[1], [0], [0], [1], [0, 0, 1, 1], [], []>} : vector<8x1024xbf16>, vector<1024x512xbf16>, vector<8x512xf32> -> vector<8x512xf32>
      %c0_25 = arith.constant 0 : index
      %c0_26 = arith.constant 0 : index
      %48 = vector.load %arg11[%c0_25, %c0_26] : memref<1x512xf32, #tpu.memory_space<vmem>>, vector<1x512xf32>
      %c0_27 = arith.constant 0 : index
      %c0_28 = arith.constant 0 : index
      %49 = vector.load %arg12[%c0_27, %c0_28] : memref<1x512xf32, #tpu.memory_space<vmem>>, vector<1x512xf32>
      %50 = vector.broadcast %0 : vector<8x1xf32> to vector<8x512xf32>
      %51 = arith.mulf %47, %50 : vector<8x512xf32>
      %cst_29 = arith.constant dense<0.000000e+00> : vector<512xf32>
      %52 = vector.multi_reduction <add>, %51, %cst_29 [0] : vector<8x512xf32> to vector<512xf32>
      %53 = vector.shape_cast %52 : vector<512xf32> to vector<1x512xf32>
      %cst_30 = arith.constant 1.250000e-01 : f32
      %54 = vector.broadcast %cst_30 : f32 to vector<1x512xf32>
      %55 = arith.mulf %53, %54 : vector<1x512xf32>
      %56 = arith.mulf %51, %47 : vector<8x512xf32>
      %cst_31 = arith.constant dense<0.000000e+00> : vector<512xf32>
      %57 = vector.multi_reduction <add>, %56, %cst_31 [0] : vector<8x512xf32> to vector<512xf32>
      %58 = vector.shape_cast %57 : vector<512xf32> to vector<1x512xf32>
      %cst_32 = arith.constant 1.250000e-01 : f32
      %59 = vector.broadcast %cst_32 : f32 to vector<1x512xf32>
      %60 = arith.mulf %58, %59 : vector<1x512xf32>
      %61 = arith.mulf %55, %55 : vector<1x512xf32>
      %62 = arith.subf %60, %61 : vector<1x512xf32>
      %63 = vector.broadcast %55 : vector<1x512xf32> to vector<8x512xf32>
      %64 = arith.subf %47, %63 : vector<8x512xf32>
      %cst_33 = arith.constant 9.99999974E-6 : f32
      %65 = vector.broadcast %cst_33 : f32 to vector<1x512xf32>
      %66 = arith.addf %62, %65 : vector<1x512xf32>
      %67 = math.rsqrt %66 : vector<1x512xf32>
      %68 = vector.broadcast %67 : vector<1x512xf32> to vector<8x512xf32>
      %69 = arith.mulf %64, %68 : vector<8x512xf32>
      %70 = vector.broadcast %48 : vector<1x512xf32> to vector<8x512xf32>
      %71 = arith.mulf %69, %70 : vector<8x512xf32>
      %72 = vector.broadcast %49 : vector<1x512xf32> to vector<8x512xf32>
      %73 = arith.addf %71, %72 : vector<8x512xf32>
      %cst_34 = arith.constant 0.000000e+00 : f32
      %74 = vector.broadcast %cst_34 : f32 to vector<8x512xf32>
      %75 = arith.maximumf %73, %74 : vector<8x512xf32>
      %76 = arith.truncf %75 : vector<8x512xf32> to vector<8x512xbf16>
      %c0_35 = arith.constant 0 : index
      %c0_36 = arith.constant 0 : index
      %77 = vector.load %arg13[%c0_35, %c0_36] : memref<512x256xbf16, #tpu.memory_space<vmem>>, vector<512x256xbf16>
      %cst_37 = arith.constant dense<0.000000e+00> : vector<8x256xf32>
      %78 = tpu.matmul %76, %77, %cst_37 {dimension_numbers = #tpu.dot_dimension_numbers<[1], [0], [0], [1], [0, 0, 1, 1], [], []>} : vector<8x512xbf16>, vector<512x256xbf16>, vector<8x256xf32> -> vector<8x256xf32>
      %c0_38 = arith.constant 0 : index
      %c0_39 = arith.constant 0 : index
      %79 = vector.load %arg14[%c0_38, %c0_39] : memref<1x256xf32, #tpu.memory_space<vmem>>, vector<1x256xf32>
      %c0_40 = arith.constant 0 : index
      %c0_41 = arith.constant 0 : index
      %80 = vector.load %arg15[%c0_40, %c0_41] : memref<1x256xf32, #tpu.memory_space<vmem>>, vector<1x256xf32>
      %81 = vector.broadcast %0 : vector<8x1xf32> to vector<8x256xf32>
      %82 = arith.mulf %78, %81 : vector<8x256xf32>
      %cst_42 = arith.constant dense<0.000000e+00> : vector<256xf32>
      %83 = vector.multi_reduction <add>, %82, %cst_42 [0] : vector<8x256xf32> to vector<256xf32>
      %84 = vector.shape_cast %83 : vector<256xf32> to vector<1x256xf32>
      %cst_43 = arith.constant 1.250000e-01 : f32
      %85 = vector.broadcast %cst_43 : f32 to vector<1x256xf32>
      %86 = arith.mulf %84, %85 : vector<1x256xf32>
      %87 = arith.mulf %82, %78 : vector<8x256xf32>
      %cst_44 = arith.constant dense<0.000000e+00> : vector<256xf32>
      %88 = vector.multi_reduction <add>, %87, %cst_44 [0] : vector<8x256xf32> to vector<256xf32>
      %89 = vector.shape_cast %88 : vector<256xf32> to vector<1x256xf32>
      %cst_45 = arith.constant 1.250000e-01 : f32
      %90 = vector.broadcast %cst_45 : f32 to vector<1x256xf32>
      %91 = arith.mulf %89, %90 : vector<1x256xf32>
      %92 = arith.mulf %86, %86 : vector<1x256xf32>
      %93 = arith.subf %91, %92 : vector<1x256xf32>
      %94 = vector.broadcast %86 : vector<1x256xf32> to vector<8x256xf32>
      %95 = arith.subf %78, %94 : vector<8x256xf32>
      %cst_46 = arith.constant 9.99999974E-6 : f32
      %96 = vector.broadcast %cst_46 : f32 to vector<1x256xf32>
      %97 = arith.addf %93, %96 : vector<1x256xf32>
      %98 = math.rsqrt %97 : vector<1x256xf32>
      %99 = vector.broadcast %98 : vector<1x256xf32> to vector<8x256xf32>
      %100 = arith.mulf %95, %99 : vector<8x256xf32>
      %101 = vector.broadcast %79 : vector<1x256xf32> to vector<8x256xf32>
      %102 = arith.mulf %100, %101 : vector<8x256xf32>
      %103 = vector.broadcast %80 : vector<1x256xf32> to vector<8x256xf32>
      %104 = arith.addf %102, %103 : vector<8x256xf32>
      %cst_47 = arith.constant 0.000000e+00 : f32
      %105 = vector.broadcast %cst_47 : f32 to vector<8x256xf32>
      %106 = arith.maximumf %104, %105 : vector<8x256xf32>
      %107 = arith.truncf %106 : vector<8x256xf32> to vector<8x256xbf16>
      %c0_48 = arith.constant 0 : index
      %c0_49 = arith.constant 0 : index
      %108 = vector.load %arg16[%c0_48, %c0_49] : memref<256x128xbf16, #tpu.memory_space<vmem>>, vector<256x128xbf16>
      %cst_50 = arith.constant dense<0.000000e+00> : vector<8x128xf32>
      %109 = tpu.matmul %107, %108, %cst_50 {dimension_numbers = #tpu.dot_dimension_numbers<[1], [0], [0], [1], [0, 0, 1, 1], [], []>} : vector<8x256xbf16>, vector<256x128xbf16>, vector<8x128xf32> -> vector<8x128xf32>
      %c0_51 = arith.constant 0 : index
      %c0_52 = arith.constant 0 : index
      %110 = vector.load %arg17[%c0_51, %c0_52] : memref<1x128xf32, #tpu.memory_space<vmem>>, vector<1x128xf32>
      %111 = vector.broadcast %110 : vector<1x128xf32> to vector<8x128xf32>
      %112 = arith.addf %109, %111 : vector<8x128xf32>
      %c0_53 = arith.constant 0 : index
      %c0_54 = arith.constant 0 : index
      %113 = vector.load %arg18[%c0_53, %c0_54] : memref<8x128xf32, #tpu.memory_space<vmem>>, vector<8x128xf32>
      tpu.vector_store %arg18[%c0_53, %c0_54], %112 {strides = array<i32>} : memref<8x128xf32, #tpu.memory_space<vmem>>, vector<8x128xf32>,
    } else {
    }
    return
  }
  func.func @transform_0(%arg0: i32) -> (i32, i32) {
    %c0_i32 = arith.constant 0 : i32
    %c0_i32_0 = arith.constant 0 : i32
    %c0_i32_1 = arith.constant 0 : i32
    return %c0_i32, %c0_i32_0 : i32, i32
  }
  func.func @transform_1(%arg0: i32) -> (i32, i32) {
    %c0_i32 = arith.constant 0 : i32
    %c0_i32_0 = arith.constant 0 : i32
    %c0_i32_1 = arith.constant 0 : i32
    return %c0_i32, %c0_i32_0 : i32, i32
  }
  func.func @transform_2(%arg0: i32) -> (i32, i32) {
    %c0_i32 = arith.constant 0 : i32
    %c0_i32_0 = arith.constant 0 : i32
    %c0_i32_1 = arith.constant 0 : i32
    return %c0_i32, %c0_i32_0 : i32, i32
  }
  func.func @transform_3(%arg0: i32) -> (i32, i32) {
    %c0_i32 = arith.constant 0 : i32
    %c0_i32_0 = arith.constant 0 : i32
    %c0_i32_1 = arith.constant 0 : i32
    return %c0_i32, %c0_i32_0 : i32, i32
  }
  func.func @transform_4(%arg0: i32) -> (i32, i32) {
    %c0_i32 = arith.constant 0 : i32
    %c0_i32_0 = arith.constant 0 : i32
    %c0_i32_1 = arith.constant 0 : i32
    return %c0_i32, %c0_i32_0 : i32, i32
  }
  func.func @transform_5(%arg0: i32) -> (i32, i32) {
    %c0_i32 = arith.constant 0 : i32
    %c0_i32_0 = arith.constant 0 : i32
    %c0_i32_1 = arith.constant 0 : i32
    return %c0_i32, %c0_i32_0 : i32, i32
  }
  func.func @transform_6(%arg0: i32) -> (i32, i32) {
    %c0_i32 = arith.constant 0 : i32
    %c0_i32_0 = arith.constant 0 : i32
    return %arg0, %c0_i32 : i32, i32
  }
  func.func @transform_7(%arg0: i32) -> (i32, i32) {
    %c0_i32 = arith.constant 0 : i32
    %c0_i32_0 = arith.constant 0 : i32
    %c0_i32_1 = arith.constant 0 : i32
    return %c0_i32, %c0_i32_0 : i32, i32
  }
  func.func @transform_8(%arg0: i32) -> (i32, i32) {
    %c0_i32 = arith.constant 0 : i32
    %c0_i32_0 = arith.constant 0 : i32
    %c0_i32_1 = arith.constant 0 : i32
    return %c0_i32, %c0_i32_0 : i32, i32
  }
  func.func @transform_9(%arg0: i32) -> (i32, i32) {
    %c0_i32 = arith.constant 0 : i32
    %c0_i32_0 = arith.constant 0 : i32
    %c0_i32_1 = arith.constant 0 : i32
    return %c0_i32, %c0_i32_0 : i32, i32
  }
  func.func @transform_10(%arg0: i32) -> (i32, i32) {
    %c0_i32 = arith.constant 0 : i32
    %c0_i32_0 = arith.constant 0 : i32
    %c0_i32_1 = arith.constant 0 : i32
    return %c0_i32, %c0_i32_0 : i32, i32
  }
  func.func @transform_11(%arg0: i32) -> (i32, i32) {
    %c0_i32 = arith.constant 0 : i32
    %c0_i32_0 = arith.constant 0 : i32
    %c0_i32_1 = arith.constant 0 : i32
    return %c0_i32, %c0_i32_0 : i32, i32
  }
  func.func @transform_12(%arg0: i32) -> (i32, i32) {
    %c0_i32 = arith.constant 0 : i32
    %c0_i32_0 = arith.constant 0 : i32
    %c0_i32_1 = arith.constant 0 : i32
    return %c0_i32, %c0_i32_0 : i32, i32
  }
  func.func @transform_13(%arg0: i32) -> (i32, i32) {
    %c0_i32 = arith.constant 0 : i32
    %c0_i32_0 = arith.constant 0 : i32
    %c0_i32_1 = arith.constant 0 : i32
    return %c0_i32, %c0_i32_0 : i32, i32
  }
  func.func @transform_14(%arg0: i32) -> (i32, i32) {
    %c0_i32 = arith.constant 0 : i32
    %c0_i32_0 = arith.constant 0 : i32
    %c0_i32_1 = arith.constant 0 : i32
    return %c0_i32, %c0_i32_0 : i32, i32
  }
  func.func @transform_15(%arg0: i32) -> (i32, i32) {
    %c0_i32 = arith.constant 0 : i32
    %c0_i32_0 = arith.constant 0 : i32
    %c0_i32_1 = arith.constant 0 : i32
    return %c0_i32, %c0_i32_0 : i32, i32
  }
  func.func @transform_16(%arg0: i32) -> (i32, i32) {
    %c0_i32 = arith.constant 0 : i32
    %c0_i32_0 = arith.constant 0 : i32
    %c0_i32_1 = arith.constant 0 : i32
    return %c0_i32, %c0_i32_0 : i32, i32
  }
  func.func @transform_17(%arg0: i32) -> (i32, i32) {
    %c0_i32 = arith.constant 0 : i32
    %c0_i32_0 = arith.constant 0 : i32
    %c0_i32_1 = arith.constant 0 : i32
    return %c0_i32, %c0_i32_0 : i32, i32
  }
}

</mosaic_0001>

<llo_original>
// kernel: tpu_custom_call.1
$region0: #{tpu_custom_call.1}
  #allocation0 [shape = 'u32[]', space=smem, size = 0x4, offset = 0x4, fixed_abs, tag = 'smem constant byte address 0x4 - core index']
  #allocation1 [shape = 'u32[144,128]{1,0:T(1,128)}', space=vmem, size = 0x12000, scoped, tag = 'internal scratch']
  #allocation2 [shape = 'bf16[8,2048]{1,0:T(8,128)(2,1)}', space=vmem, size = 0x8000, scoped, tag = 'scratch operand']
  #allocation3 [shape = 'f32[8,1024]{1,0:T(8,128)}', space=vmem, size = 0x8000, scoped, tag = 'scratch operand']
  %s0 = inlined_call_operand.hbm [shape: bf16[8,8], index: 0, kind: input, shape index: {}]
  %s1 = inlined_call_operand.vmem [shape: f32[8,1], index: 1, kind: input, shape index: {}]
  %s2 = inlined_call_operand.hbm [shape: bf16[8,2048], index: 2, kind: input, shape index: {}]
  %s3 = inlined_call_operand.hbm [shape: f32[1,2048], index: 3, kind: input, shape index: {}]
  %s4 = inlined_call_operand.hbm [shape: f32[1,2048], index: 4, kind: input, shape index: {}]
  %s5 = inlined_call_operand.hbm [shape: f32[1,2048], index: 5, kind: input, shape index: {}]
  %s6 = inlined_call_operand.hbm [shape: bf16[2048,1024], index: 6, kind: input, shape index: {}]
  %s7 = inlined_call_operand.hbm [shape: f32[1,1024], index: 7, kind: input, shape index: {}]
  %s8 = inlined_call_operand.hbm [shape: f32[1,1024], index: 8, kind: input, shape index: {}]
  %s9 = inlined_call_operand.hbm [shape: bf16[1024,512], index: 9, kind: input, shape index: {}]
  %s10 = inlined_call_operand.hbm [shape: f32[1,512], index: 10, kind: input, shape index: {}]
  %s11 = inlined_call_operand.hbm [shape: f32[1,512], index: 11, kind: input, shape index: {}]
  %s12 = inlined_call_operand.hbm [shape: bf16[512,256], index: 12, kind: input, shape index: {}]
  %s13 = inlined_call_operand.hbm [shape: f32[1,256], index: 13, kind: input, shape index: {}]
  %s14 = inlined_call_operand.hbm [shape: f32[1,256], index: 14, kind: input, shape index: {}]
  %s15 = inlined_call_operand.hbm [shape: bf16[256,128], index: 15, kind: input, shape index: {}]
  %s16 = inlined_call_operand.hbm [shape: f32[1,128], index: 16, kind: input, shape index: {}]
  %s17 = inlined_call_operand.hbm [shape: f32[8,128], index: 17, kind: output, shape index: {}]
  %s18 = sld [smem:[#allocation0]]
  $region173: #{tpu_custom_call.1} parent=0
    _
  %s20 = ssub.s32 1, %s18
  %s21 = scalar_select 0, %s20, %s18
  $region1: #{tpu_custom_call.1} parent=0
    #allocation4 [shape = 'u8[2048]{0}', space=vmem, size = 0x800, scoped, tag = 'input window, operand 0, single buffered']
    #allocation5 [shape = 's32[2]{0}', space=sflag, size = 0x8, scoped, tag = 'scoped memory for tpu_custom_call.1']
    #allocation6 [shape = 's32[2]{0}', space=sflag, size = 0x8, scoped, tag = 'scoped memory for tpu_custom_call.1']
    #allocation7 [shape = 'u8[32768]{0}', space=vmem, size = 0x8000, scoped, tag = 'input window, operand 2, single buffered']
    #allocation8 [shape = 's32[1]{0}', space=sflag, size = 0x4, scoped, tag = 'scoped memory for tpu_custom_call.1']
    #allocation9 [shape = 'u8[8192]{0}', space=vmem, size = 0x2000, scoped, tag = 'input window, operand 3, single buffered']
    #allocation10 [shape = 'u8[8192]{0}', space=vmem, size = 0x2000, scoped, tag = 'input window, operand 4, single buffered']
    #allocation11 [shape = 's32[1]{0}', space=sflag, size = 0x4, scoped, tag = 'scoped memory for tpu_custom_call.1']
    #allocation12 [shape = 'u8[8192]{0}', space=vmem, size = 0x2000, scoped, tag = 'input window, operand 5, single buffered']
    #allocation13 [shape = 'u8[2097152]{0}', space=vmem, size = 0x200000, scoped, tag = 'input window, operand 6']
    #allocation14 [shape = 's32[2]{0}', space=sflag, size = 0x8, scoped, tag = 'scoped memory for tpu_custom_call.1']
    #allocation15 [shape = 'u8[4096]{0}', space=vmem, size = 0x1000, scoped, tag = 'input window, operand 7, single buffered']
    #allocation16 [shape = 'u8[4096]{0}', space=vmem, size = 0x1000, scoped, tag = 'input window, operand 8, single buffered']
    #allocation17 [shape = 's32[1]{0}', space=sflag, size = 0x4, scoped, tag = 'scoped memory for tpu_custom_call.1']
    #allocation18 [shape = 'u8[1048576]{0}', space=vmem, size = 0x100000, scoped, tag = 'input window, operand 9, single buffered']
    #allocation19 [shape = 'u8[2048]{0}', space=vmem, size = 0x800, scoped, tag = 'input window, operand 10, single buffered']
    #allocation20 [shape = 's32[1]{0}', space=sflag, size = 0x4, scoped, tag = 'scoped memory for tpu_custom_call.1']
    #allocation21 [shape = 'u8[2048]{0}', space=vmem, size = 0x800, scoped, tag = 'input window, operand 11, single buffered']
    #allocation22 [shape = 'u8[262144]{0}', space=vmem, size = 0x40000, scoped, tag = 'input window, operand 12, single buffered']
    #allocation23 [shape = 's32[1]{0}', space=sflag, size = 0x4, scoped, tag = 'scoped memory for tpu_custom_call.1']
    #allocation24 [shape = 'u8[1024]{0}', space=vmem, size = 0x400, scoped, tag = 'input window, operand 13, single buffered']
    #allocation25 [shape = 'u8[1024]{0}', space=vmem, size = 0x400, scoped, tag = 'input window, operand 14, single buffered']
    #allocation26 [shape = 's32[1]{0}', space=sflag, size = 0x4, scoped, tag = 'scoped memory for tpu_custom_call.1']
    #allocation27 [shape = 'u8[65536]{0}', space=vmem, size = 0x10000, scoped, tag = 'input window, operand 15, single buffered']
    #allocation28 [shape = 'u8[512]{0}', space=vmem, size = 0x400, scoped, tag = 'input window, operand 16, single buffered']
    #allocation29 [shape = 's32[1]{0}', space=sflag, size = 0x4, scoped, tag = 'scoped memory for tpu_custom_call.1']
    #allocation30 [shape = 'u8[4096]{0}', space=vmem, size = 0x1000, scoped, tag = 'output window, operand 0, single buffered']
    %22 = vsyncpa [#allocation5], 0
    %23 = vsyncpa [#allocation8], 0
    %24 = vsyncpa [#allocation11], 0
    %25 = vsyncpa [#allocation14], 0
    %s26 = scalar_lea.sflag [#allocation14], 1
    %27 = vsyncpa %s26, 0
    %28 = vsyncpa [#allocation17], 0
    %29 = vsyncpa [#allocation20], 0
    %30 = vsyncpa [#allocation23], 0
    %31 = vsyncpa [#allocation26], 0
    %32 = vsyncpa [#allocation29], 0
    %33 = vsyncpa [#allocation6], 0
    loop: start=0, step=1, limit=6
    $region2: #{tpu_custom_call.1} parent=1 // loop_pre_header
      _
    $region3: #{tpu_custom_call.1} parent=1 // loop_header
      %s35 = sphi 0, %s39
      %p36 = scmp.ge.s32.totalorder %s35, 6
      %s43 = sphi 0, %s43
      %s45 = sphi 0, %s43
      %s46 = sphi 0, %s45
      %s60 = sphi 0, %s46
      %s64 = sphi 0, %s64
      %s66 = sphi 0, %s64
      %s67 = sphi 0, %s66
      %s81 = sphi 0, %s67
      %s85 = sphi 0, %s85
      %s87 = sphi 0, %s85
      %s88 = sphi 0, %s87
      %s102 = sphi 0, %s88
      %s106 = sphi 0, %s106
      %s108 = sphi 0, %s106
      %s109 = sphi 0, %s108
      %s123 = sphi 0, %s109
      %s127 = sphi 0, %s127
      %s129 = sphi 0, %s127
      %s130 = sphi 0, %s129
      %s144 = sphi 0, %s130
      %s148 = sphi 0, %s148
      %s150 = sphi 0, %s148
      %s151 = sphi 0, %s150
      %s165 = sphi 0, %s151
      %s171 = sphi 0, %s173
      %s174 = sphi 0, %s171
      %s175 = sphi 0, %s174
      %s191 = sphi 0, %s175
      %s195 = sphi 0, %s195
      %s197 = sphi 0, %s195
      %s198 = sphi 0, %s197
      %s212 = sphi 0, %s198
      %s216 = sphi 0, %s216
      %s218 = sphi 0, %s216
      %s219 = sphi 0, %s218
      %s233 = sphi 0, %s219
      %s237 = sphi 0, %s237
      %s239 = sphi 0, %s237
      %s240 = sphi 0, %s239
      %s254 = sphi 0, %s240
      %s258 = sphi 0, %s258
      %s260 = sphi 0, %s258
      %s261 = sphi 0, %s260
      %s275 = sphi 0, %s261
      %s279 = sphi 0, %s279
      %s281 = sphi 0, %s279
      %s282 = sphi 0, %s281
      %s296 = sphi 0, %s282
      %s300 = sphi 0, %s300
      %s302 = sphi 0, %s300
      %s303 = sphi 0, %s302
      %s317 = sphi 0, %s303
      %s321 = sphi 0, %s321
      %s323 = sphi 0, %s321
      %s324 = sphi 0, %s323
      %s338 = sphi 0, %s324
      %s342 = sphi 0, %s342
      %s344 = sphi 0, %s342
      %s345 = sphi 0, %s344
      %s359 = sphi 0, %s345
      %s363 = sphi 0, %s363
      %s365 = sphi 0, %s363
      %s366 = sphi 0, %s365
      %s380 = sphi 0, %s366
      %s384 = sphi 0, %s384
      %s386 = sphi 0, %s384
      %s387 = sphi 0, %s386
      %s401 = sphi 0, %s387
      %s405 = sphi 0, %s405
      %s407 = sphi 0, %s405
      %s408 = sphi 0, %s407
      %s422 = sphi 0, %s408
    $region4: #{tpu_custom_call.1} parent=1 // loop_header_branch
      %38 = sbr.rel (%p36) target = $region8
    $region5: #{tpu_custom_call.1} parent=1 // loop_body
      %s40 = ssub.s32 %s35, 1
      %s41 = ssub.s32 %s35, 2
      %s42 = sadd.s32 %s35, 1
      %s44 = sadd.s32 %s43, 1
      %p47 = scmp.eq.s32.totalorder %s35, 3
      %p48 = scmp.ne.s32.totalorder %s43, %s45
      %p49 = scmp.eq.s32.totalorder %s35, 0
      %p50 = por %p48, %p49
      %p51 = scmp.ne.s32.totalorder %s43, %s45
      %p52 = scmp.eq.s32.totalorder %s40, 3
      %p53 = por %p51, %p52
      %p54 = scmp.ne.s32.totalorder %s45, %s46
      %p55 = scmp.eq.s32.totalorder %s40, 0
      %p56 = por %p54, %p55
      %p57 = scmp.ne.s32.totalorder %s45, %s46
      %p58 = scmp.eq.s32.totalorder %s41, 3
      %p59 = por %p57, %p58
      %p61 = scmp.ne.s32.totalorder %s46, %s60
      %p62 = scmp.eq.s32.totalorder %s41, 0
      %p63 = por %p61, %p62
      %s65 = sadd.s32 %s64, 1
      %p68 = scmp.eq.s32.totalorder %s35, 3
      %p69 = scmp.ne.s32.totalorder %s64, %s66
      %p70 = scmp.eq.s32.totalorder %s35, 0
      %p71 = por %p69, %p70
      %p72 = scmp.ne.s32.totalorder %s64, %s66
      %p73 = scmp.eq.s32.totalorder %s40, 3
      %p74 = por %p72, %p73
      %p75 = scmp.ne.s32.totalorder %s66, %s67
      %p76 = scmp.eq.s32.totalorder %s40, 0
      %p77 = por %p75, %p76
      %p78 = scmp.ne.s32.totalorder %s66, %s67
      %p79 = scmp.eq.s32.totalorder %s41, 3
      %p80 = por %p78, %p79
      %p82 = scmp.ne.s32.totalorder %s67, %s81
      %p83 = scmp.eq.s32.totalorder %s41, 0
      %p84 = por %p82, %p83
      %s86 = sadd.s32 %s85, 1
      %p89 = scmp.eq.s32.totalorder %s35, 3
      %p90 = scmp.ne.s32.totalorder %s85, %s87
      %p91 = scmp.eq.s32.totalorder %s35, 0
      %p92 = por %p90, %p91
      %p93 = scmp.ne.s32.totalorder %s85, %s87
      %p94 = scmp.eq.s32.totalorder %s40, 3
      %p95 = por %p93, %p94
      %p96 = scmp.ne.s32.totalorder %s87, %s88
      %p97 = scmp.eq.s32.totalorder %s40, 0
      %p98 = por %p96, %p97
      %p99 = scmp.ne.s32.totalorder %s87, %s88
      %p100 = scmp.eq.s32.totalorder %s41, 3
      %p101 = por %p99, %p100
      %p103 = scmp.ne.s32.totalorder %s88, %s102
      %p104 = scmp.eq.s32.totalorder %s41, 0
      %p105 = por %p103, %p104
      %s107 = sadd.s32 %s106, 1
      %p110 = scmp.eq.s32.totalorder %s35, 3
      %p111 = scmp.ne.s32.totalorder %s106, %s108
      %p112 = scmp.eq.s32.totalorder %s35, 0
      %p113 = por %p111, %p112
      %p114 = scmp.ne.s32.totalorder %s106, %s108
      %p115 = scmp.eq.s32.totalorder %s40, 3
      %p116 = por %p114, %p115
      %p117 = scmp.ne.s32.totalorder %s108, %s109
      %p118 = scmp.eq.s32.totalorder %s40, 0
      %p119 = por %p117, %p118
      %p120 = scmp.ne.s32.totalorder %s108, %s109
      %p121 = scmp.eq.s32.totalorder %s41, 3
      %p122 = por %p120, %p121
      %p124 = scmp.ne.s32.totalorder %s109, %s123
      %p125 = scmp.eq.s32.totalorder %s41, 0
      %p126 = por %p124, %p125
      %s128 = sadd.s32 %s127, 1
      %p131 = scmp.eq.s32.totalorder %s35, 3
      %p132 = scmp.ne.s32.totalorder %s127, %s129
      %p133 = scmp.eq.s32.totalorder %s35, 0
      %p134 = por %p132, %p133
      %p135 = scmp.ne.s32.totalorder %s127, %s129
      %p136 = scmp.eq.s32.totalorder %s40, 3
      %p137 = por %p135, %p136
      %p138 = scmp.ne.s32.totalorder %s129, %s130
      %p139 = scmp.eq.s32.totalorder %s40, 0
      %p140 = por %p138, %p139
      %p141 = scmp.ne.s32.totalorder %s129, %s130
      %p142 = scmp.eq.s32.totalorder %s41, 3
      %p143 = por %p141, %p142
      %p145 = scmp.ne.s32.totalorder %s130, %s144
      %p146 = scmp.eq.s32.totalorder %s41, 0
      %p147 = por %p145, %p146
      %s149 = sadd.s32 %s148, 1
      %p152 = scmp.eq.s32.totalorder %s35, 3
      %p153 = scmp.ne.s32.totalorder %s148, %s150
      %p154 = scmp.eq.s32.totalorder %s35, 0
      %p155 = por %p153, %p154
      %p156 = scmp.ne.s32.totalorder %s148, %s150
      %p157 = scmp.eq.s32.totalorder %s40, 3
      %p158 = por %p156, %p157
      %p159 = scmp.ne.s32.totalorder %s150, %s151
      %p160 = scmp.eq.s32.totalorder %s40, 0
      %p161 = por %p159, %p160
      %p162 = scmp.ne.s32.totalorder %s150, %s151
      %p163 = scmp.eq.s32.totalorder %s41, 3
      %p164 = por %p162, %p163
      %p166 = scmp.ne.s32.totalorder %s151, %s165
      %p167 = scmp.eq.s32.totalorder %s41, 0
      %p168 = por %p166, %p167
      %s169 = ssub.s32 %s35, %s42
      %p170 = scmp.eq.s32.totalorder %s169, 0
      %s172 = sadd.s32 %s171, 1
      %s173 = scalar_select %p170, %s171, %s172
      %p176 = pneg %p170
      %p177 = scmp.eq.s32.totalorder %s35, 3
      %p178 = por %p176, %p177
      %p179 = scmp.ne.s32.totalorder %s171, %s174
      %p180 = scmp.eq.s32.totalorder %s35, 0
      %p181 = por %p179, %p180
      %p182 = scmp.ne.s32.totalorder %s171, %s174
      %p183 = scmp.eq.s32.totalorder %s40, 3
      %p184 = por %p182, %p183
      %p185 = scmp.ne.s32.totalorder %s174, %s175
      %p186 = scmp.eq.s32.totalorder %s40, 0
      %p187 = por %p185, %p186
      %p188 = scmp.ne.s32.totalorder %s174, %s175
      %p189 = scmp.eq.s32.totalorder %s41, 3
      %p190 = por %p188, %p189
      %p192 = scmp.ne.s32.totalorder %s175, %s191
      %p193 = scmp.eq.s32.totalorder %s41, 0
      %p194 = por %p192, %p193
      %s196 = sadd.s32 %s195, 1
      %p199 = scmp.eq.s32.totalorder %s35, 3
      %p200 = scmp.ne.s32.totalorder %s195, %s197
      %p201 = scmp.eq.s32.totalorder %s35, 0
      %p202 = por %p200, %p201
      %p203 = scmp.ne.s32.totalorder %s195, %s197
      %p204 = scmp.eq.s32.totalorder %s40, 3
      %p205 = por %p203, %p204
      %p206 = scmp.ne.s32.totalorder %s197, %s198
      %p207 = scmp.eq.s32.totalorder %s40, 0
      %p208 = por %p206, %p207
      %p209 = scmp.ne.s32.totalorder %s197, %s198
      %p210 = scmp.eq.s32.totalorder %s41, 3
      %p211 = por %p209, %p210
      %p213 = scmp.ne.s32.totalorder %s198, %s212
      %p214 = scmp.eq.s32.totalorder %s41, 0
      %p215 = por %p213, %p214
      %s217 = sadd.s32 %s216, 1
      %p220 = scmp.eq.s32.totalorder %s35, 3
      %p221 = scmp.ne.s32.totalorder %s216, %s218
      %p222 = scmp.eq.s32.totalorder %s35, 0
      %p223 = por %p221, %p222
      %p224 = scmp.ne.s32.totalorder %s216, %s218
      %p225 = scmp.eq.s32.totalorder %s40, 3
      %p226 = por %p224, %p225
      %p227 = scmp.ne.s32.totalorder %s218, %s219
      %p228 = scmp.eq.s32.totalorder %s40, 0
      %p229 = por %p227, %p228
      %p230 = scmp.ne.s32.totalorder %s218, %s219
      %p231 = scmp.eq.s32.totalorder %s41, 3
      %p232 = por %p230, %p231
      %p234 = scmp.ne.s32.totalorder %s219, %s233
      %p235 = scmp.eq.s32.totalorder %s41, 0
      %p236 = por %p234, %p235
      %s238 = sadd.s32 %s237, 1
      %p241 = scmp.eq.s32.totalorder %s35, 3
      %p242 = scmp.ne.s32.totalorder %s237, %s239
      %p243 = scmp.eq.s32.totalorder %s35, 0
      %p244 = por %p242, %p243
      %p245 = scmp.ne.s32.totalorder %s237, %s239
      %p246 = scmp.eq.s32.totalorder %s40, 3
      %p247 = por %p245, %p246
      %p248 = scmp.ne.s32.totalorder %s239, %s240
      %p249 = scmp.eq.s32.totalorder %s40, 0
      %p250 = por %p248, %p249
      %p251 = scmp.ne.s32.totalorder %s239, %s240
      %p252 = scmp.eq.s32.totalorder %s41, 3
      %p253 = por %p251, %p252
      %p255 = scmp.ne.s32.totalorder %s240, %s254
      %p256 = scmp.eq.s32.totalorder %s41, 0
      %p257 = por %p255, %p256
      %s259 = sadd.s32 %s258, 1
      %p262 = scmp.eq.s32.totalorder %s35, 3
      %p263 = scmp.ne.s32.totalorder %s258, %s260
      %p264 = scmp.eq.s32.totalorder %s35, 0
      %p265 = por %p263, %p264
      %p266 = scmp.ne.s32.totalorder %s258, %s260
      %p267 = scmp.eq.s32.totalorder %s40, 3
      %p268 = por %p266, %p267
      %p269 = scmp.ne.s32.totalorder %s260, %s261
      %p270 = scmp.eq.s32.totalorder %s40, 0
      %p271 = por %p269, %p270
      %p272 = scmp.ne.s32.totalorder %s260, %s261
      %p273 = scmp.eq.s32.totalorder %s41, 3
      %p274 = por %p272, %p273
      %p276 = scmp.ne.s32.totalorder %s261, %s275
      %p277 = scmp.eq.s32.totalorder %s41, 0
      %p278 = por %p276, %p277
      %s280 = sadd.s32 %s279, 1
      %p283 = scmp.eq.s32.totalorder %s35, 3
      %p284 = scmp.ne.s32.totalorder %s279, %s281
      %p285 = scmp.eq.s32.totalorder %s35, 0
      %p286 = por %p284, %p285
      %p287 = scmp.ne.s32.totalorder %s279, %s281
      %p288 = scmp.eq.s32.totalorder %s40, 3
      %p289 = por %p287, %p288
      %p290 = scmp.ne.s32.totalorder %s281, %s282
      %p291 = scmp.eq.s32.totalorder %s40, 0
      %p292 = por %p290, %p291
      %p293 = scmp.ne.s32.totalorder %s281, %s282
      %p294 = scmp.eq.s32.totalorder %s41, 3
      %p295 = por %p293, %p294
      %p297 = scmp.ne.s32.totalorder %s282, %s296
      %p298 = scmp.eq.s32.totalorder %s41, 0
      %p299 = por %p297, %p298
      %s301 = sadd.s32 %s300, 1
      %p304 = scmp.eq.s32.totalorder %s35, 3
      %p305 = scmp.ne.s32.totalorder %s300, %s302
      %p306 = scmp.eq.s32.totalorder %s35, 0
      %p307 = por %p305, %p306
      %p308 = scmp.ne.s32.totalorder %s300, %s302
      %p309 = scmp.eq.s32.totalorder %s40, 3
      %p310 = por %p308, %p309
      %p311 = scmp.ne.s32.totalorder %s302, %s303
      %p312 = scmp.eq.s32.totalorder %s40, 0
      %p313 = por %p311, %p312
      %p314 = scmp.ne.s32.totalorder %s302, %s303
      %p315 = scmp.eq.s32.totalorder %s41, 3
      %p316 = por %p314, %p315
      %p318 = scmp.ne.s32.totalorder %s303, %s317
      %p319 = scmp.eq.s32.totalorder %s41, 0
      %p320 = por %p318, %p319
      %s322 = sadd.s32 %s321, 1
      %p325 = scmp.eq.s32.totalorder %s35, 3
      %p326 = scmp.ne.s32.totalorder %s321, %s323
      %p327 = scmp.eq.s32.totalorder %s35, 0
      %p328 = por %p326, %p327
      %p329 = scmp.ne.s32.totalorder %s321, %s323
      %p330 = scmp.eq.s32.totalorder %s40, 3
      %p331 = por %p329, %p330
      %p332 = scmp.ne.s32.totalorder %s323, %s324
      %p333 = scmp.eq.s32.totalorder %s40, 0
      %p334 = por %p332, %p333
      %p335 = scmp.ne.s32.totalorder %s323, %s324
      %p336 = scmp.eq.s32.totalorder %s41, 3
      %p337 = por %p335, %p336
      %p339 = scmp.ne.s32.totalorder %s324, %s338
      %p340 = scmp.eq.s32.totalorder %s41, 0
      %p341 = por %p339, %p340
      %s343 = sadd.s32 %s342, 1
      %p346 = scmp.eq.s32.totalorder %s35, 3
      %p347 = scmp.ne.s32.totalorder %s342, %s344
      %p348 = scmp.eq.s32.totalorder %s35, 0
      %p349 = por %p347, %p348
      %p350 = scmp.ne.s32.totalorder %s342, %s344
      %p351 = scmp.eq.s32.totalorder %s40, 3
      %p352 = por %p350, %p351
      %p353 = scmp.ne.s32.totalorder %s344, %s345
      %p354 = scmp.eq.s32.totalorder %s40, 0
      %p355 = por %p353, %p354
      %p356 = scmp.ne.s32.totalorder %s344, %s345
      %p357 = scmp.eq.s32.totalorder %s41, 3
      %p358 = por %p356, %p357
      %p360 = scmp.ne.s32.totalorder %s345, %s359
      %p361 = scmp.eq.s32.totalorder %s41, 0
      %p362 = por %p360, %p361
      %s364 = sadd.s32 %s363, 1
      %p367 = scmp.eq.s32.totalorder %s35, 3
      %p368 = scmp.ne.s32.totalorder %s363, %s365
      %p369 = scmp.eq.s32.totalorder %s35, 0
      %p370 = por %p368, %p369
      %p371 = scmp.ne.s32.totalorder %s363, %s365
      %p372 = scmp.eq.s32.totalorder %s40, 3
      %p373 = por %p371, %p372
      %p374 = scmp.ne.s32.totalorder %s365, %s366
      %p375 = scmp.eq.s32.totalorder %s40, 0
      %p376 = por %p374, %p375
      %p377 = scmp.ne.s32.totalorder %s365, %s366
      %p378 = scmp.eq.s32.totalorder %s41, 3
      %p379 = por %p377, %p378
      %p381 = scmp.ne.s32.totalorder %s366, %s380
      %p382 = scmp.eq.s32.totalorder %s41, 0
      %p383 = por %p381, %p382
      %s385 = sadd.s32 %s384, 1
      %p388 = scmp.eq.s32.totalorder %s35, 3
      %p389 = scmp.ne.s32.totalorder %s384, %s386
      %p390 = scmp.eq.s32.totalorder %s35, 0
      %p391 = por %p389, %p390
      %p392 = scmp.ne.s32.totalorder %s384, %s386
      %p393 = scmp.eq.s32.totalorder %s40, 3
      %p394 = por %p392, %p393
      %p395 = scmp.ne.s32.totalorder %s386, %s387
      %p396 = scmp.eq.s32.totalorder %s40, 0
      %p397 = por %p395, %p396
      %p398 = scmp.ne.s32.totalorder %s386, %s387
      %p399 = scmp.eq.s32.totalorder %s41, 3
      %p400 = por %p398, %p399
      %p402 = scmp.ne.s32.totalorder %s387, %s401
      %p403 = scmp.eq.s32.totalorder %s41, 0
      %p404 = por %p402, %p403
      %s406 = sadd.s32 %s405, 1
      %p409 = scmp.eq.s32.totalorder %s35, 3
      %p410 = scmp.ne.s32.totalorder %s405, %s407
      %p411 = scmp.eq.s32.totalorder %s35, 0
      %p412 = por %p410, %p411
      %p413 = scmp.ne.s32.totalorder %s405, %s407
      %p414 = scmp.eq.s32.totalorder %s40, 3
      %p415 = por %p413, %p414
      %p416 = scmp.ne.s32.totalorder %s407, %s408
      %p417 = scmp.eq.s32.totalorder %s40, 0
      %p418 = por %p416, %p417
      %p419 = scmp.ne.s32.totalorder %s407, %s408
      %p420 = scmp.eq.s32.totalorder %s41, 3
      %p421 = por %p419, %p420
      %p423 = scmp.ne.s32.totalorder %s408, %s422
      %p424 = scmp.eq.s32.totalorder %s41, 0
      %p425 = por %p423, %p424
      %p426 = scmp.le.s32.totalorder 1, %s35
      %p427 = scmp.lt.s32.totalorder %s35, 5
      %p428 = pnand %p426, %p427
      %p429 = pneg %p428
      // Predicated region
      $region9: #{tpu_custom_call.1} parent=5 // pred_check
        _
      $region10: #{tpu_custom_call.1} parent=5 // pred_check_branch
        %431 = sbr.rel (%p428) target = $region12
      $region11: #{tpu_custom_call.1} parent=5 // pred_region
        %s432 = ssub.s32 %s35, 1
        // Predicated region
        $region13: #{tpu_custom_call.1} parent=11 // pred_check
          %p433 = pneg %p56
        $region14: #{tpu_custom_call.1} parent=11 // pred_check_branch
          %435 = sbr.rel (%p433) target = $region16
        $region15: #{tpu_custom_call.1} parent=11 // pred_region
          %s437 = ssub.s32 64, 64
          %438 = vsyncadd [#allocation5], %s437
          %s440 = sshll.u32 [#allocation4], 4
          %s441 = int_to_ptr.vmem [resolvable:$true] %s440
          %443 = dma.hbm_to_vmem [thread:$0]  %s0, 64, %s441, [#allocation5]
        $region16: #{tpu_custom_call.1} parent=11 // pred_fallthru
          _
        // Predicated region
        $region17: #{tpu_custom_call.1} parent=11 // pred_check
          %p444 = pneg %p77
        $region18: #{tpu_custom_call.1} parent=11 // pred_check_branch
          %446 = sbr.rel (%p444) target = $region20
        $region19: #{tpu_custom_call.1} parent=11 // pred_region
          _
        $region20: #{tpu_custom_call.1} parent=11 // pred_fallthru
          _
        // Predicated region
        $region21: #{tpu_custom_call.1} parent=11 // pred_check
          %p447 = pneg %p98
        $region22: #{tpu_custom_call.1} parent=11 // pred_check_branch
          %449 = sbr.rel (%p447) target = $region24
        $region23: #{tpu_custom_call.1} parent=11 // pred_region
          %s451 = ssub.s32 1024, 1024
          %452 = vsyncadd [#allocation8], %s451
          %s454 = sshll.u32 [#allocation7], 4
          %s455 = int_to_ptr.vmem [resolvable:$true] %s454
          %457 = dma.hbm_to_vmem [thread:$0]  %s2, 1024, %s455, [#allocation8]
        $region24: #{tpu_custom_call.1} parent=11 // pred_fallthru
          _
        // Predicated region
        $region25: #{tpu_custom_call.1} parent=11 // pred_check
          %p458 = pneg %p119
        $region26: #{tpu_custom_call.1} parent=11 // pred_check_branch
          %460 = sbr.rel (%p458) target = $region28
        $region27: #{tpu_custom_call.1} parent=11 // pred_region
          %s462 = ssub.s32 256, 256
          %463 = vsyncadd [#allocation8], %s462
          %s465 = sshll.u32 [#allocation9], 4
          %s466 = int_to_ptr.vmem [resolvable:$true] %s465
          %468 = dma.hbm_to_vmem [thread:$0]  %s3, 256, %s466, [#allocation8]
        $region28: #{tpu_custom_call.1} parent=11 // pred_fallthru
          _
        // Predicated region
        $region29: #{tpu_custom_call.1} parent=11 // pred_check
          %p469 = pneg %p140
        $region30: #{tpu_custom_call.1} parent=11 // pred_check_branch
          %471 = sbr.rel (%p469) target = $region32
        $region31: #{tpu_custom_call.1} parent=11 // pred_region
          %s473 = ssub.s32 256, 256
          %474 = vsyncadd [#allocation11], %s473
          %s476 = sshll.u32 [#allocation10], 4
          %s477 = int_to_ptr.vmem [resolvable:$true] %s476
          %479 = dma.hbm_to_vmem [thread:$0]  %s4, 256, %s477, [#allocation11]
        $region32: #{tpu_custom_call.1} parent=11 // pred_fallthru
          _
        // Predicated region
        $region33: #{tpu_custom_call.1} parent=11 // pred_check
          %p480 = pneg %p161
        $region34: #{tpu_custom_call.1} parent=11 // pred_check_branch
          %482 = sbr.rel (%p480) target = $region36
        $region35: #{tpu_custom_call.1} parent=11 // pred_region
          %s484 = ssub.s32 256, 256
          %485 = vsyncadd [#allocation11], %s484
          %s487 = sshll.u32 [#allocation12], 4
          %s488 = int_to_ptr.vmem [resolvable:$true] %s487
          %490 = dma.hbm_to_vmem [thread:$0]  %s5, 256, %s488, [#allocation11]
        $region36: #{tpu_custom_call.1} parent=11 // pred_fallthru
          _
        // Predicated region
        $region37: #{tpu_custom_call.1} parent=11 // pred_check
          %p491 = pneg %p208
        $region38: #{tpu_custom_call.1} parent=11 // pred_check_branch
          %493 = sbr.rel (%p491) target = $region40
        $region39: #{tpu_custom_call.1} parent=11 // pred_region
          %s495 = ssub.s32 128, 128
          %496 = vsyncadd [#allocation14], %s495
          %s498 = sshll.u32 [#allocation15], 4
          %s499 = int_to_ptr.vmem [resolvable:$true] %s498
          %501 = dma.hbm_to_vmem [thread:$0]  %s7, 128, %s499, [#allocation14]
        $region40: #{tpu_custom_call.1} parent=11 // pred_fallthru
          _
        // Predicated region
        $region41: #{tpu_custom_call.1} parent=11 // pred_check
          %p502 = pneg %p229
        $region42: #{tpu_custom_call.1} parent=11 // pred_check_branch
          %504 = sbr.rel (%p502) target = $region44
        $region43: #{tpu_custom_call.1} parent=11 // pred_region
          %s506 = ssub.s32 128, 128
          %507 = vsyncadd [#allocation17], %s506
          %s509 = sshll.u32 [#allocation16], 4
          %s510 = int_to_ptr.vmem [resolvable:$true] %s509
          %512 = dma.hbm_to_vmem [thread:$0]  %s8, 128, %s510, [#allocation17]
        $region44: #{tpu_custom_call.1} parent=11 // pred_fallthru
          _
        // Predicated region
        $region45: #{tpu_custom_call.1} parent=11 // pred_check
          %p513 = pneg %p250
        $region46: #{tpu_custom_call.1} parent=11 // pred_check_branch
          %515 = sbr.rel (%p513) target = $region48
        $region47: #{tpu_custom_call.1} parent=11 // pred_region
          %s517 = ssub.s32 32768, 32768
          %518 = vsyncadd [#allocation17], %s517
          %s519 = sshll.u32 [#allocation18], 4
          %s520 = int_to_ptr.vmem [resolvable:$true] %s519
          %525 = dma.hbm_to_vmem [thread:$0]  %s9, 32768, %s520, [#allocation17], 256, 256, 16
        $region48: #{tpu_custom_call.1} parent=11 // pred_fallthru
          _
        // Predicated region
        $region49: #{tpu_custom_call.1} parent=11 // pred_check
          %p526 = pneg %p271
        $region50: #{tpu_custom_call.1} parent=11 // pred_check_branch
          %528 = sbr.rel (%p526) target = $region52
        $region51: #{tpu_custom_call.1} parent=11 // pred_region
          %s530 = ssub.s32 64, 64
          %531 = vsyncadd [#allocation20], %s530
          %s533 = sshll.u32 [#allocation19], 4
          %s534 = int_to_ptr.vmem [resolvable:$true] %s533
          %536 = dma.hbm_to_vmem [thread:$0]  %s10, 64, %s534, [#allocation20]
        $region52: #{tpu_custom_call.1} parent=11 // pred_fallthru
          _
        // Predicated region
        $region53: #{tpu_custom_call.1} parent=11 // pred_check
          %p537 = pneg %p292
        $region54: #{tpu_custom_call.1} parent=11 // pred_check_branch
          %539 = sbr.rel (%p537) target = $region56
        $region55: #{tpu_custom_call.1} parent=11 // pred_region
          %s541 = ssub.s32 64, 64
          %542 = vsyncadd [#allocation20], %s541
          %s544 = sshll.u32 [#allocation21], 4
          %s545 = int_to_ptr.vmem [resolvable:$true] %s544
          %547 = dma.hbm_to_vmem [thread:$0]  %s11, 64, %s545, [#allocation20]
        $region56: #{tpu_custom_call.1} parent=11 // pred_fallthru
          _
        // Predicated region
        $region57: #{tpu_custom_call.1} parent=11 // pred_check
          %p548 = pneg %p313
        $region58: #{tpu_custom_call.1} parent=11 // pred_check_branch
          %550 = sbr.rel (%p548) target = $region60
        $region59: #{tpu_custom_call.1} parent=11 // pred_region
          %s552 = ssub.s32 8192, 8192
          %553 = vsyncadd [#allocation23], %s552
          %s554 = sshll.u32 [#allocation22], 4
          %s555 = int_to_ptr.vmem [resolvable:$true] %s554
          %560 = dma.hbm_to_vmem [thread:$0]  %s12, 8192, %s555, [#allocation23], 128, 128, 8
        $region60: #{tpu_custom_call.1} parent=11 // pred_fallthru
          _
        // Predicated region
        $region61: #{tpu_custom_call.1} parent=11 // pred_check
          %p561 = pneg %p334
        $region62: #{tpu_custom_call.1} parent=11 // pred_check_branch
          %563 = sbr.rel (%p561) target = $region64
        $region63: #{tpu_custom_call.1} parent=11 // pred_region
          %s565 = ssub.s32 32, 32
          %566 = vsyncadd [#allocation23], %s565
          %s568 = sshll.u32 [#allocation24], 4
          %s569 = int_to_ptr.vmem [resolvable:$true] %s568
          %571 = dma.hbm_to_vmem [thread:$0]  %s13, 32, %s569, [#allocation23]
        $region64: #{tpu_custom_call.1} parent=11 // pred_fallthru
          _
        // Predicated region
        $region65: #{tpu_custom_call.1} parent=11 // pred_check
          %p572 = pneg %p355
        $region66: #{tpu_custom_call.1} parent=11 // pred_check_branch
          %574 = sbr.rel (%p572) target = $region68
        $region67: #{tpu_custom_call.1} parent=11 // pred_region
          %s576 = ssub.s32 32, 32
          %577 = vsyncadd [#allocation26], %s576
          %s579 = sshll.u32 [#allocation25], 4
          %s580 = int_to_ptr.vmem [resolvable:$true] %s579
          %582 = dma.hbm_to_vmem [thread:$0]  %s14, 32, %s580, [#allocation26]
        $region68: #{tpu_custom_call.1} parent=11 // pred_fallthru
          _
        // Predicated region
        $region69: #{tpu_custom_call.1} parent=11 // pred_check
          %p583 = pneg %p376
        $region70: #{tpu_custom_call.1} parent=11 // pred_check_branch
          %585 = sbr.rel (%p583) target = $region72
        $region71: #{tpu_custom_call.1} parent=11 // pred_region
          %s587 = ssub.s32 2048, 2048
          %588 = vsyncadd [#allocation26], %s587
          %s589 = sshll.u32 [#allocation27], 4
          %s590 = int_to_ptr.vmem [resolvable:$true] %s589
          %595 = dma.hbm_to_vmem [thread:$0]  %s15, 2048, %s590, [#allocation26], 64, 64, 4
        $region72: #{tpu_custom_call.1} parent=11 // pred_fallthru
          _
        // Predicated region
        $region73: #{tpu_custom_call.1} parent=11 // pred_check
          %p596 = pneg %p397
        $region74: #{tpu_custom_call.1} parent=11 // pred_check_branch
          %598 = sbr.rel (%p596) target = $region76
        $region75: #{tpu_custom_call.1} parent=11 // pred_region
          %s600 = ssub.s32 16, 16
          %601 = vsyncadd [#allocation29], %s600
          %s603 = sshll.u32 [#allocation28], 4
          %s604 = int_to_ptr.vmem [resolvable:$true] %s603
          %606 = dma.hbm_to_vmem [thread:$0]  %s16, 16, %s604, [#allocation29]
        $region76: #{tpu_custom_call.1} parent=11 // pred_fallthru
          _
      $region12: #{tpu_custom_call.1} parent=5 // pred_fallthru
        _
      %p607 = scmp.lt.s32.totalorder %s35, 4
      // Predicated region
      $region77: #{tpu_custom_call.1} parent=5 // pred_check
        %p608 = pneg %p607
      $region78: #{tpu_custom_call.1} parent=5 // pred_check_branch
        %610 = sbr.rel (%p608) target = $region80
      $region79: #{tpu_custom_call.1} parent=5 // pred_region
        // Predicated region
        $region81: #{tpu_custom_call.1} parent=79 // pred_check
          %p611 = pneg %p181
        $region82: #{tpu_custom_call.1} parent=79 // pred_check_branch
          %613 = sbr.rel (%p611) target = $region84
        $region83: #{tpu_custom_call.1} parent=79 // pred_region
          %s614 = sand.u32 %s35, 1
          %s615 = scalar_lea.sflag [#allocation14], %s614
          %s616 = sand.u32 %s171, 1
          %s617 = smul.addr %s616, 2048
          %s618 = scalar_lea.vmem [#allocation13], %s617
          %s619 = smul.u32 64, %s35
          %s621 = ssub.s32 32768, 32768
          %622 = vsyncadd %s615, %s621
          %s623 = smul.addr %s619, 8
          %s624 = smul.addr %s623, 64
          %s625 = scalar_lea.hbm %s6, %s624
          %s626 = sshll.u32 %s618, 4
          %s627 = int_to_ptr.vmem [resolvable:$true] %s626
          %632 = dma.hbm_to_vmem [thread:$0]  %s625, 32768, %s627, %s615, 512, 512, 32
        $region84: #{tpu_custom_call.1} parent=79 // pred_fallthru
          _
      $region80: #{tpu_custom_call.1} parent=5 // pred_fallthru
        _
      %p633 = scmp.le.s32.totalorder 1, %s35
      %p634 = scmp.lt.s32.totalorder %s35, 5
      %p635 = pnand %p633, %p634
      %p636 = pneg %p635
      // Predicated region
      $region85: #{tpu_custom_call.1} parent=5 // pred_check
        _
      $region86: #{tpu_custom_call.1} parent=5 // pred_check_branch
        %638 = sbr.rel (%p635) target = $region88
      $region87: #{tpu_custom_call.1} parent=5 // pred_region
        %s639 = ssub.s32 %s35, 1
        // Predicated region
        $region89: #{tpu_custom_call.1} parent=87 // pred_check
          %p640 = pneg %p56
        $region90: #{tpu_custom_call.1} parent=87 // pred_check_branch
          %642 = sbr.rel (%p640) target = $region92
        $region91: #{tpu_custom_call.1} parent=87 // pred_region
          %643 = dma.done [#allocation5], 64
        $region92: #{tpu_custom_call.1} parent=87 // pred_fallthru
          _
        // Predicated region
        $region93: #{tpu_custom_call.1} parent=87 // pred_check
          %p644 = pneg %p98
        $region94: #{tpu_custom_call.1} parent=87 // pred_check_branch
          %646 = sbr.rel (%p644) target = $region96
        $region95: #{tpu_custom_call.1} parent=87 // pred_region
          %647 = dma.done [#allocation8], 1024
        $region96: #{tpu_custom_call.1} parent=87 // pred_fallthru
          _
        // Predicated region
        $region97: #{tpu_custom_call.1} parent=87 // pred_check
          %p648 = pneg %p119
        $region98: #{tpu_custom_call.1} parent=87 // pred_check_branch
          %650 = sbr.rel (%p648) target = $region100
        $region99: #{tpu_custom_call.1} parent=87 // pred_region
          %651 = dma.done [#allocation8], 256
        $region100: #{tpu_custom_call.1} parent=87 // pred_fallthru
          _
        // Predicated region
        $region101: #{tpu_custom_call.1} parent=87 // pred_check
          %p652 = pneg %p140
        $region102: #{tpu_custom_call.1} parent=87 // pred_check_branch
          %654 = sbr.rel (%p652) target = $region104
        $region103: #{tpu_custom_call.1} parent=87 // pred_region
          %655 = dma.done [#allocation11], 256
        $region104: #{tpu_custom_call.1} parent=87 // pred_fallthru
          _
        // Predicated region
        $region105: #{tpu_custom_call.1} parent=87 // pred_check
          %p656 = pneg %p161
        $region106: #{tpu_custom_call.1} parent=87 // pred_check_branch
          %658 = sbr.rel (%p656) target = $region108
        $region107: #{tpu_custom_call.1} parent=87 // pred_region
          %659 = dma.done [#allocation11], 256
        $region108: #{tpu_custom_call.1} parent=87 // pred_fallthru
          _
        %s660 = sand.u32 %s40, 1
        %s661 = scalar_lea.sflag [#allocation14], %s660
        %s662 = sand.u32 %s174, 1
        %s663 = smul.addr %s662, 2048
        %s664 = scalar_lea.vmem [#allocation13], %s663
        // Predicated region
        $region109: #{tpu_custom_call.1} parent=87 // pred_check
          %p665 = pneg %p187
        $region110: #{tpu_custom_call.1} parent=87 // pred_check_branch
          %667 = sbr.rel (%p665) target = $region112
        $region111: #{tpu_custom_call.1} parent=87 // pred_region
          %668 = dma.done %s661, 32768
        $region112: #{tpu_custom_call.1} parent=87 // pred_fallthru
          _
        // Predicated region
        $region113: #{tpu_custom_call.1} parent=87 // pred_check
          %p669 = pneg %p208
        $region114: #{tpu_custom_call.1} parent=87 // pred_check_branch
          %671 = sbr.rel (%p669) target = $region116
        $region115: #{tpu_custom_call.1} parent=87 // pred_region
          %672 = dma.done [#allocation14], 128
        $region116: #{tpu_custom_call.1} parent=87 // pred_fallthru
          _
        // Predicated region
        $region117: #{tpu_custom_call.1} parent=87 // pred_check
          %p673 = pneg %p229
        $region118: #{tpu_custom_call.1} parent=87 // pred_check_branch
          %675 = sbr.rel (%p673) target = $region120
        $region119: #{tpu_custom_call.1} parent=87 // pred_region
          %676 = dma.done [#allocation17], 128
        $region120: #{tpu_custom_call.1} parent=87 // pred_fallthru
          _
        // Predicated region
        $region121: #{tpu_custom_call.1} parent=87 // pred_check
          %p677 = pneg %p250
        $region122: #{tpu_custom_call.1} parent=87 // pred_check_branch
          %679 = sbr.rel (%p677) target = $region124
        $region123: #{tpu_custom_call.1} parent=87 // pred_region
          %680 = dma.done [#allocation17], 32768
        $region124: #{tpu_custom_call.1} parent=87 // pred_fallthru
          _
        // Predicated region
        $region125: #{tpu_custom_call.1} parent=87 // pred_check
          %p681 = pneg %p271
        $region126: #{tpu_custom_call.1} parent=87 // pred_check_branch
          %683 = sbr.rel (%p681) target = $region128
        $region127: #{tpu_custom_call.1} parent=87 // pred_region
          %684 = dma.done [#allocation20], 64
        $region128: #{tpu_custom_call.1} parent=87 // pred_fallthru
          _
        // Predicated region
        $region129: #{tpu_custom_call.1} parent=87 // pred_check
          %p685 = pneg %p292
        $region130: #{tpu_custom_call.1} parent=87 // pred_check_branch
          %687 = sbr.rel (%p685) target = $region132
        $region131: #{tpu_custom_call.1} parent=87 // pred_region
          %688 = dma.done [#allocation20], 64
        $region132: #{tpu_custom_call.1} parent=87 // pred_fallthru
          _
        // Predicated region
        $region133: #{tpu_custom_call.1} parent=87 // pred_check
          %p689 = pneg %p313
        $region134: #{tpu_custom_call.1} parent=87 // pred_check_branch
          %691 = sbr.rel (%p689) target = $region136
        $region135: #{tpu_custom_call.1} parent=87 // pred_region
          %692 = dma.done [#allocation23], 8192
        $region136: #{tpu_custom_call.1} parent=87 // pred_fallthru
          _
        // Predicated region
        $region137: #{tpu_custom_call.1} parent=87 // pred_check
          %p693 = pneg %p334
        $region138: #{tpu_custom_call.1} parent=87 // pred_check_branch
          %695 = sbr.rel (%p693) target = $region140
        $region139: #{tpu_custom_call.1} parent=87 // pred_region
          %696 = dma.done [#allocation23], 32
        $region140: #{tpu_custom_call.1} parent=87 // pred_fallthru
          _
        // Predicated region
        $region141: #{tpu_custom_call.1} parent=87 // pred_check
          %p697 = pneg %p355
        $region142: #{tpu_custom_call.1} parent=87 // pred_check_branch
          %699 = sbr.rel (%p697) target = $region144
        $region143: #{tpu_custom_call.1} parent=87 // pred_region
          %700 = dma.done [#allocation26], 32
        $region144: #{tpu_custom_call.1} parent=87 // pred_fallthru
          _
        // Predicated region
        $region145: #{tpu_custom_call.1} parent=87 // pred_check
          %p701 = pneg %p376
        $region146: #{tpu_custom_call.1} parent=87 // pred_check_branch
          %703 = sbr.rel (%p701) target = $region148
        $region147: #{tpu_custom_call.1} parent=87 // pred_region
          %704 = dma.done [#allocation26], 2048
        $region148: #{tpu_custom_call.1} parent=87 // pred_fallthru
          _
        // Predicated region
        $region149: #{tpu_custom_call.1} parent=87 // pred_check
          %p705 = pneg %p397
        $region150: #{tpu_custom_call.1} parent=87 // pred_check_branch
          %707 = sbr.rel (%p705) target = $region152
        $region151: #{tpu_custom_call.1} parent=87 // pred_region
          %708 = dma.done [#allocation29], 16
        $region152: #{tpu_custom_call.1} parent=87 // pred_fallthru
          _
        %p709 = pneg %p56
        %p710 = pneg %p53
        %p711 = pneg %p77
        %p712 = pneg %p74
        %p713 = pneg %p98
        %p714 = pneg %p95
        %p715 = pneg %p119
        %p716 = pneg %p116
        %p717 = pneg %p140
        %p718 = pneg %p137
        %p719 = pneg %p161
        %p720 = pneg %p158
        %s721 = sand.u32 %s40, 1
        %s722 = scalar_lea.sflag [#allocation14], %s721
        %s723 = sand.u32 %s174, 1
        %s724 = smul.addr %s723, 2048
        %s725 = scalar_lea.vmem [#allocation13], %s724
        %p726 = pneg %p187
        %p727 = pneg %p184
        %p728 = pneg %p208
        %p729 = pneg %p205
        %p730 = pneg %p229
        %p731 = pneg %p226
        %p732 = pneg %p250
        %p733 = pneg %p247
        %p734 = pneg %p271
        %p735 = pneg %p268
        %p736 = pneg %p292
        %p737 = pneg %p289
        %p738 = pneg %p313
        %p739 = pneg %p310
        %p740 = pneg %p334
        %p741 = pneg %p331
        %p742 = pneg %p355
        %p743 = pneg %p352
        %p744 = pneg %p376
        %p745 = pneg %p373
        %p746 = pneg %p397
        %p747 = pneg %p394
        %p748 = pneg %p418
        %p749 = pneg %p415
        %s750 = smul.u32 64, %s40
        %v752 = vld [vmem:[%s1] sm:$0xff]
        %p753 = scmp.eq.s32.totalorder %s40, 0
        // Predicated region
        $region153: #{tpu_custom_call.1} parent=87 // pred_check
          %p754 = pneg %p753
        $region154: #{tpu_custom_call.1} parent=87 // pred_check_branch
          %756 = sbr.rel (%p754) target = $region156
        $region155: #{tpu_custom_call.1} parent=87 // pred_region
          %v757 = vld [vmem:[#allocation4] sm:$0xf]
          %v758 = vld [vmem:[#allocation7] sm:$0xff]
          %v759 = vld [vmem:[#allocation7 + $0x8] sm:$0xff]
          %v760 = vld [vmem:[#allocation7 + $0x10] sm:$0xff]
          %v761 = vld [vmem:[#allocation7 + $0x18] sm:$0xff]
          %v762 = vld [vmem:[#allocation7 + $0x20] sm:$0xff]
          %v763 = vld [vmem:[#allocation7 + $0x28] sm:$0xff]
          %v764 = vld [vmem:[#allocation7 + $0x30] sm:$0xff]
          %v765 = vld [vmem:[#allocation7 + $0x38] sm:$0xff]
          %v766 = vld [vmem:[#allocation9] sm:$0xff]
          %v767 = vld [vmem:[#allocation9 + $0x8] sm:$0xff]
          %v770 = vlaneseq
          %v771 = vshrl.u32 %v770, 7
          %v772 = vsub.s32 0, %v771
          %v773 = vrot.slane %v766, %v772
          %v774 = vlaneseq
          %v775 = vshrl.u32 %v774, 7
          %v776 = vsub.s32 1, %v775
          %v777 = vrot.slane %v766, %v776
          %v778 = vlaneseq
          %v779 = vshrl.u32 %v778, 7
          %v780 = vsub.s32 2, %v779
          %v781 = vrot.slane %v766, %v780
          %v782 = vlaneseq
          %v783 = vshrl.u32 %v782, 7
          %v784 = vsub.s32 3, %v783
          %v785 = vrot.slane %v766, %v784
          %v786 = vlaneseq
          %v787 = vshrl.u32 %v786, 7
          %v788 = vsub.s32 4, %v787
          %v789 = vrot.slane %v766, %v788
          %v790 = vlaneseq
          %v791 = vshrl.u32 %v790, 7
          %v792 = vsub.s32 5, %v791
          %v793 = vrot.slane %v766, %v792
          %v794 = vlaneseq
          %v795 = vshrl.u32 %v794, 7
          %v796 = vsub.s32 6, %v795
          %v797 = vrot.slane %v766, %v796
          %v798 = vlaneseq
          %v799 = vshrl.u32 %v798, 7
          %v800 = vsub.s32 7, %v799
          %v801 = vrot.slane %v766, %v800
          %v802 = vlaneseq
          %v803 = vshrl.u32 %v802, 7
          %v804 = vsub.s32 0, %v803
          %v805 = vrot.slane %v767, %v804
          %v806 = vlaneseq
          %v807 = vshrl.u32 %v806, 7
          %v808 = vsub.s32 1, %v807
          %v809 = vrot.slane %v767, %v808
          %v810 = vlaneseq
          %v811 = vshrl.u32 %v810, 7
          %v812 = vsub.s32 2, %v811
          %v813 = vrot.slane %v767, %v812
          %v814 = vlaneseq
          %v815 = vshrl.u32 %v814, 7
          %v816 = vsub.s32 3, %v815
          %v817 = vrot.slane %v767, %v816
          %v818 = vlaneseq
          %v819 = vshrl.u32 %v818, 7
          %v820 = vsub.s32 4, %v819
          %v821 = vrot.slane %v767, %v820
          %v822 = vlaneseq
          %v823 = vshrl.u32 %v822, 7
          %v824 = vsub.s32 5, %v823
          %v825 = vrot.slane %v767, %v824
          %v826 = vlaneseq
          %v827 = vshrl.u32 %v826, 7
          %v828 = vsub.s32 6, %v827
          %v829 = vrot.slane %v767, %v828
          %v830 = vlaneseq
          %v831 = vshrl.u32 %v830, 7
          %v832 = vsub.s32 7, %v831
          %v833 = vrot.slane %v767, %v832
          %v858 = vunpack.c.l.b16 %v758
          %v859 = vunpack.c.h.b16 %v758
          %v860 = vunpack.c.l.b16 %v759
          %v861 = vunpack.c.h.b16 %v759
          %v862 = vunpack.c.l.b16 %v760
          %v863 = vunpack.c.h.b16 %v760
          %v864 = vunpack.c.l.b16 %v761
          %v865 = vunpack.c.h.b16 %v761
          %v866 = vunpack.c.l.b16 %v762
          %v867 = vunpack.c.h.b16 %v762
          %v868 = vunpack.c.l.b16 %v763
          %v869 = vunpack.c.h.b16 %v763
          %v870 = vunpack.c.l.b16 %v764
          %v871 = vunpack.c.h.b16 %v764
          %v872 = vunpack.c.l.b16 %v765
          %v873 = vunpack.c.h.b16 %v765
          %v874 = vpack.c.b16 %v858, %v858
          %v875 = vpack.c.b16 %v859, %v859
          %v876 = vpack.c.b16 %v860, %v860
          %v877 = vpack.c.b16 %v861, %v861
          %v878 = vpack.c.b16 %v862, %v862
          %v879 = vpack.c.b16 %v863, %v863
          %v880 = vpack.c.b16 %v864, %v864
          %v881 = vpack.c.b16 %v865, %v865
          %v882 = vpack.c.b16 %v866, %v866
          %v883 = vpack.c.b16 %v867, %v867
          %v884 = vpack.c.b16 %v868, %v868
          %v885 = vpack.c.b16 %v869, %v869
          %v886 = vpack.c.b16 %v870, %v870
          %v887 = vpack.c.b16 %v871, %v871
          %v888 = vpack.c.b16 %v872, %v872
          %v889 = vpack.c.b16 %v873, %v873
          %vm890 = vcmask 64512
          %v892 = vsel %vm890, %v757, 0
          %vm894 = vcmask 1043456
          %v896 = vsel %vm894, %v874, 0
          %v899 = vsel %vm894, %v875, 0
          %v902 = vsel %vm894, %v876, 0
          %v905 = vsel %vm894, %v877, 0
          %v908 = vsel %vm894, %v878, 0
          %v911 = vsel %vm894, %v879, 0
          %v914 = vsel %vm894, %v880, 0
          %v917 = vsel %vm894, %v881, 0
          %v920 = vsel %vm894, %v882, 0
          %v923 = vsel %vm894, %v883, 0
          %v926 = vsel %vm894, %v884, 0
          %v929 = vsel %vm894, %v885, 0
          %v932 = vsel %vm894, %v886, 0
          %v935 = vsel %vm894, %v887, 0
          %v938 = vsel %vm894, %v888, 0
          %v941 = vsel %vm894, %v889, 0
          %943 = vmatprep.subr.bf16.mxu0 %v899
          %944 = vmatpush1.bf16.msra.mxu0 %v896
          %945 = vmatprep.subr.bf16.mxu0 0
          %946 = vmatpush1.bf16.msra.mxu0 0
          %947 = vmatprep.subr.bf16.mxu0 0
          %948 = vmatpush1.bf16.msra.mxu0 0
          %949 = vmatprep.subr.bf16.mxu0 0
          %950 = vmatpush1.bf16.msra.mxu0 0
          %951 = vmatprep.subr.bf16.mxu0 0
          %952 = vmatpush1.bf16.msra.mxu0 0
          %953 = vmatprep.subr.bf16.mxu0 0
          %954 = vmatpush1.bf16.msra.mxu0 0
          %955 = vmatprep.subr.bf16.mxu0 0
          %956 = vmatpush1.bf16.msra.mxu0 0
          %957 = vmatprep.subr.bf16.mxu0 0
          %958 = vmatpush1.bf16.msra.mxu0 0
          %959 = vmatprep.subr.bf16.mxu0 0
          %960 = vmatpush1.bf16.msra.mxu0 0
          %961 = vmatprep.subr.bf16.mxu0 0
          %962 = vmatpush1.bf16.msra.mxu0 0
          %963 = vmatprep.subr.bf16.mxu0 0
          %964 = vmatpush1.bf16.msra.mxu0 0
          %965 = vmatprep.subr.bf16.mxu0 0
          %966 = vmatpush1.bf16.msra.mxu0 0
          %967 = vmatprep.subr.bf16.mxu0 0
          %968 = vmatpush1.bf16.msra.mxu0 0
          %969 = vmatprep.subr.bf16.mxu0 0
          %970 = vmatpush1.bf16.msra.mxu0 0
          %971 = vmatprep.subr.bf16.mxu0 0
          %972 = vmatpush1.bf16.msra.mxu0 0
          %973 = vmatprep.subr.bf16.mxu0 0
          %974 = vmatpush1.bf16.msra.mxu0 0
          %975 = vmatprep.mubr.bf16.mxu0 0
          %976 = vmatmul.mubr.bf16.gmra.mrb[0].mxu0 %v892
          %v977 = vpop.f32.mrb[0].mxu0
          %v978 = vadd.f32 %v773, %v977
          %v979 = vpop.f32.mrb[0].mxu0
          %v980 = vadd.f32 %v777, %v979
          %v981 = vpop.f32.mrb[0].mxu0
          %v982 = vpop.f32.mrb[0].mxu0
          %983 = vdwg.mxu0
          %984 = vmatprep.subr.bf16.mxu0 %v905
          %985 = vmatpush1.bf16.msra.mxu0 %v902
          %986 = vmatprep.subr.bf16.mxu0 0
          %987 = vmatpush1.bf16.msra.mxu0 0
          %988 = vmatprep.subr.bf16.mxu0 0
          %989 = vmatpush1.bf16.msra.mxu0 0
          %990 = vmatprep.subr.bf16.mxu0 0
          %991 = vmatpush1.bf16.msra.mxu0 0
          %992 = vmatprep.subr.bf16.mxu0 0
          %993 = vmatpush1.bf16.msra.mxu0 0
          %994 = vmatprep.subr.bf16.mxu0 0
          %995 = vmatpush1.bf16.msra.mxu0 0
          %996 = vmatprep.subr.bf16.mxu0 0
          %997 = vmatpush1.bf16.msra.mxu0 0
          %998 = vmatprep.subr.bf16.mxu0 0
          %999 = vmatpush1.bf16.msra.mxu0 0
          %1000 = vmatprep.subr.bf16.mxu0 0
          %1001 = vmatpush1.bf16.msra.mxu0 0
          %1002 = vmatprep.subr.bf16.mxu0 0
          %1003 = vmatpush1.bf16.msra.mxu0 0
          %1004 = vmatprep.subr.bf16.mxu0 0
          %1005 = vmatpush1.bf16.msra.mxu0 0
          %1006 = vmatprep.subr.bf16.mxu0 0
          %1007 = vmatpush1.bf16.msra.mxu0 0
          %1008 = vmatprep.subr.bf16.mxu0 0
          %1009 = vmatpush1.bf16.msra.mxu0 0
          %1010 = vmatprep.subr.bf16.mxu0 0
          %1011 = vmatpush1.bf16.msra.mxu0 0
          %1012 = vmatprep.subr.bf16.mxu0 0
          %1013 = vmatpush1.bf16.msra.mxu0 0
          %1014 = vmatprep.subr.bf16.mxu0 0
          %1015 = vmatpush1.bf16.msra.mxu0 0
          %1016 = vmatprep.mubr.bf16.mxu0 0
          %1017 = vmatmul.mubr.bf16.gmra.mrb[0].mxu0 %v892
          %v1018 = vpop.f32.mrb[0].mxu0
          %v1019 = vadd.f32 %v781, %v1018
          %v1020 = vpop.f32.mrb[0].mxu0
          %v1021 = vadd.f32 %v785, %v1020
          %v1022 = vpop.f32.mrb[0].mxu0
          %v1023 = vpop.f32.mrb[0].mxu0
          %1024 = vdwg.mxu0
          %1025 = vmatprep.subr.bf16.mxu0 %v911
          %1026 = vmatpush1.bf16.msra.mxu0 %v908
          %1027 = vmatprep.subr.bf16.mxu0 0
          %1028 = vmatpush1.bf16.msra.mxu0 0
          %1029 = vmatprep.subr.bf16.mxu0 0
          %1030 = vmatpush1.bf16.msra.mxu0 0
          %1031 = vmatprep.subr.bf16.mxu0 0
          %1032 = vmatpush1.bf16.msra.mxu0 0
          %1033 = vmatprep.subr.bf16.mxu0 0
          %1034 = vmatpush1.bf16.msra.mxu0 0
          %1035 = vmatprep.subr.bf16.mxu0 0
          %1036 = vmatpush1.bf16.msra.mxu0 0
          %1037 = vmatprep.subr.bf16.mxu0 0
          %1038 = vmatpush1.bf16.msra.mxu0 0
          %1039 = vmatprep.subr.bf16.mxu0 0
          %1040 = vmatpush1.bf16.msra.mxu0 0
          %1041 = vmatprep.subr.bf16.mxu0 0
          %1042 = vmatpush1.bf16.msra.mxu0 0
          %1043 = vmatprep.subr.bf16.mxu0 0
          %1044 = vmatpush1.bf16.msra.mxu0 0
          %1045 = vmatprep.subr.bf16.mxu0 0
          %1046 = vmatpush1.bf16.msra.mxu0 0
          %1047 = vmatprep.subr.bf16.mxu0 0
          %1048 = vmatpush1.bf16.msra.mxu0 0
          %1049 = vmatprep.subr.bf16.mxu0 0
          %1050 = vmatpush1.bf16.msra.mxu0 0
          %1051 = vmatprep.subr.bf16.mxu0 0
          %1052 = vmatpush1.bf16.msra.mxu0 0
          %1053 = vmatprep.subr.bf16.mxu0 0
          %1054 = vmatpush1.bf16.msra.mxu0 0
          %1055 = vmatprep.subr.bf16.mxu0 0
          %1056 = vmatpush1.bf16.msra.mxu0 0
          %1057 = vmatprep.mubr.bf16.mxu0 0
          %1058 = vmatmul.mubr.bf16.gmra.mrb[0].mxu0 %v892
          %v1059 = vpop.f32.mrb[0].mxu0
          %v1060 = vadd.f32 %v789, %v1059
          %v1061 = vpop.f32.mrb[0].mxu0
          %v1062 = vadd.f32 %v793, %v1061
          %v1063 = vpop.f32.mrb[0].mxu0
          %v1064 = vpop.f32.mrb[0].mxu0
          %1065 = vdwg.mxu0
          %1066 = vmatprep.subr.bf16.mxu0 %v917
          %1067 = vmatpush1.bf16.msra.mxu0 %v914
          %1068 = vmatprep.subr.bf16.mxu0 0
          %1069 = vmatpush1.bf16.msra.mxu0 0
          %1070 = vmatprep.subr.bf16.mxu0 0
          %1071 = vmatpush1.bf16.msra.mxu0 0
          %1072 = vmatprep.subr.bf16.mxu0 0
          %1073 = vmatpush1.bf16.msra.mxu0 0
          %1074 = vmatprep.subr.bf16.mxu0 0
          %1075 = vmatpush1.bf16.msra.mxu0 0
          %1076 = vmatprep.subr.bf16.mxu0 0
          %1077 = vmatpush1.bf16.msra.mxu0 0
          %1078 = vmatprep.subr.bf16.mxu0 0
          %1079 = vmatpush1.bf16.msra.mxu0 0
          %1080 = vmatprep.subr.bf16.mxu0 0
          %1081 = vmatpush1.bf16.msra.mxu0 0
          %1082 = vmatprep.subr.bf16.mxu0 0
          %1083 = vmatpush1.bf16.msra.mxu0 0
          %1084 = vmatprep.subr.bf16.mxu0 0
          %1085 = vmatpush1.bf16.msra.mxu0 0
          %1086 = vmatprep.subr.bf16.mxu0 0
          %1087 = vmatpush1.bf16.msra.mxu0 0
          %1088 = vmatprep.subr.bf16.mxu0 0
          %1089 = vmatpush1.bf16.msra.mxu0 0
          %1090 = vmatprep.subr.bf16.mxu0 0
          %1091 = vmatpush1.bf16.msra.mxu0 0
          %1092 = vmatprep.subr.bf16.mxu0 0
          %1093 = vmatpush1.bf16.msra.mxu0 0
          %1094 = vmatprep.subr.bf16.mxu0 0
          %1095 = vmatpush1.bf16.msra.mxu0 0
          %1096 = vmatprep.subr.bf16.mxu0 0
          %1097 = vmatpush1.bf16.msra.mxu0 0
          %1098 = vmatprep.mubr.bf16.mxu0 0
          %1099 = vmatmul.mubr.bf16.gmra.mrb[0].mxu0 %v892
          %v1100 = vpop.f32.mrb[0].mxu0
          %v1101 = vadd.f32 %v797, %v1100
          %v1102 = vpop.f32.mrb[0].mxu0
          %v1103 = vadd.f32 %v801, %v1102
          %v1104 = vpop.f32.mrb[0].mxu0
          %v1105 = vpop.f32.mrb[0].mxu0
          %1106 = vdwg.mxu0
          %1107 = vmatprep.subr.bf16.mxu0 %v923
          %1108 = vmatpush1.bf16.msra.mxu0 %v920
          %1109 = vmatprep.subr.bf16.mxu0 0
          %1110 = vmatpush1.bf16.msra.mxu0 0
          %1111 = vmatprep.subr.bf16.mxu0 0
          %1112 = vmatpush1.bf16.msra.mxu0 0
          %1113 = vmatprep.subr.bf16.mxu0 0
          %1114 = vmatpush1.bf16.msra.mxu0 0
          %1115 = vmatprep.subr.bf16.mxu0 0
          %1116 = vmatpush1.bf16.msra.mxu0 0
          %1117 = vmatprep.subr.bf16.mxu0 0
          %1118 = vmatpush1.bf16.msra.mxu0 0
          %1119 = vmatprep.subr.bf16.mxu0 0
          %1120 = vmatpush1.bf16.msra.mxu0 0
          %1121 = vmatprep.subr.bf16.mxu0 0
          %1122 = vmatpush1.bf16.msra.mxu0 0
          %1123 = vmatprep.subr.bf16.mxu0 0
          %1124 = vmatpush1.bf16.msra.mxu0 0
          %1125 = vmatprep.subr.bf16.mxu0 0
          %1126 = vmatpush1.bf16.msra.mxu0 0
          %1127 = vmatprep.subr.bf16.mxu0 0
          %1128 = vmatpush1.bf16.msra.mxu0 0
          %1129 = vmatprep.subr.bf16.mxu0 0
          %1130 = vmatpush1.bf16.msra.mxu0 0
          %1131 = vmatprep.subr.bf16.mxu0 0
          %1132 = vmatpush1.bf16.msra.mxu0 0
          %1133 = vmatprep.subr.bf16.mxu0 0
          %1134 = vmatpush1.bf16.msra.mxu0 0
          %1135 = vmatprep.subr.bf16.mxu0 0
          %1136 = vmatpush1.bf16.msra.mxu0 0
          %1137 = vmatprep.subr.bf16.mxu0 0
          %1138 = vmatpush1.bf16.msra.mxu0 0
          %1139 = vmatprep.mubr.bf16.mxu0 0
          %1140 = vmatmul.mubr.bf16.gmra.mrb[0].mxu0 %v892
          %v1141 = vpop.f32.mrb[0].mxu0
          %v1142 = vadd.f32 %v805, %v1141
          %v1143 = vpop.f32.mrb[0].mxu0
          %v1144 = vadd.f32 %v809, %v1143
          %v1145 = vpop.f32.mrb[0].mxu0
          %v1146 = vpop.f32.mrb[0].mxu0
          %1147 = vdwg.mxu0
          %1148 = vmatprep.subr.bf16.mxu0 %v929
          %1149 = vmatpush1.bf16.msra.mxu0 %v926
          %1150 = vmatprep.subr.bf16.mxu0 0
          %1151 = vmatpush1.bf16.msra.mxu0 0
          %1152 = vmatprep.subr.bf16.mxu0 0
          %1153 = vmatpush1.bf16.msra.mxu0 0
          %1154 = vmatprep.subr.bf16.mxu0 0
          %1155 = vmatpush1.bf16.msra.mxu0 0
          %1156 = vmatprep.subr.bf16.mxu0 0
          %1157 = vmatpush1.bf16.msra.mxu0 0
          %1158 = vmatprep.subr.bf16.mxu0 0
          %1159 = vmatpush1.bf16.msra.mxu0 0
          %1160 = vmatprep.subr.bf16.mxu0 0
          %1161 = vmatpush1.bf16.msra.mxu0 0
          %1162 = vmatprep.subr.bf16.mxu0 0
          %1163 = vmatpush1.bf16.msra.mxu0 0
          %1164 = vmatprep.subr.bf16.mxu0 0
          %1165 = vmatpush1.bf16.msra.mxu0 0
          %1166 = vmatprep.subr.bf16.mxu0 0
          %1167 = vmatpush1.bf16.msra.mxu0 0
          %1168 = vmatprep.subr.bf16.mxu0 0
          %1169 = vmatpush1.bf16.msra.mxu0 0
          %1170 = vmatprep.subr.bf16.mxu0 0
          %1171 = vmatpush1.bf16.msra.mxu0 0
          %1172 = vmatprep.subr.bf16.mxu0 0
          %1173 = vmatpush1.bf16.msra.mxu0 0
          %1174 = vmatprep.subr.bf16.mxu0 0
          %1175 = vmatpush1.bf16.msra.mxu0 0
          %1176 = vmatprep.subr.bf16.mxu0 0
          %1177 = vmatpush1.bf16.msra.mxu0 0
          %1178 = vmatprep.subr.bf16.mxu0 0
          %1179 = vmatpush1.bf16.msra.mxu0 0
          %1180 = vmatprep.mubr.bf16.mxu0 0
          %1181 = vmatmul.mubr.bf16.gmra.mrb[0].mxu0 %v892
          %v1182 = vpop.f32.mrb[0].mxu0
          %v1183 = vadd.f32 %v813, %v1182
          %v1184 = vpop.f32.mrb[0].mxu0
          %v1185 = vadd.f32 %v817, %v1184
          %v1186 = vpop.f32.mrb[0].mxu0
          %v1187 = vpop.f32.mrb[0].mxu0
          %1188 = vdwg.mxu0
          %1189 = vmatprep.subr.bf16.mxu0 %v935
          %1190 = vmatpush1.bf16.msra.mxu0 %v932
          %1191 = vmatprep.subr.bf16.mxu0 0
          %1192 = vmatpush1.bf16.msra.mxu0 0
          %1193 = vmatprep.subr.bf16.mxu0 0
          %1194 = vmatpush1.bf16.msra.mxu0 0
          %1195 = vmatprep.subr.bf16.mxu0 0
          %1196 = vmatpush1.bf16.msra.mxu0 0
          %1197 = vmatprep.subr.bf16.mxu0 0
          %1198 = vmatpush1.bf16.msra.mxu0 0
          %1199 = vmatprep.subr.bf16.mxu0 0
          %1200 = vmatpush1.bf16.msra.mxu0 0
          %1201 = vmatprep.subr.bf16.mxu0 0
          %1202 = vmatpush1.bf16.msra.mxu0 0
          %1203 = vmatprep.subr.bf16.mxu0 0
          %1204 = vmatpush1.bf16.msra.mxu0 0
          %1205 = vmatprep.subr.bf16.mxu0 0
          %1206 = vmatpush1.bf16.msra.mxu0 0
          %1207 = vmatprep.subr.bf16.mxu0 0
          %1208 = vmatpush1.bf16.msra.mxu0 0
          %1209 = vmatprep.subr.bf16.mxu0 0
          %1210 = vmatpush1.bf16.msra.mxu0 0
          %1211 = vmatprep.subr.bf16.mxu0 0
          %1212 = vmatpush1.bf16.msra.mxu0 0
          %1213 = vmatprep.subr.bf16.mxu0 0
          %1214 = vmatpush1.bf16.msra.mxu0 0
          %1215 = vmatprep.subr.bf16.mxu0 0
          %1216 = vmatpush1.bf16.msra.mxu0 0
          %1217 = vmatprep.subr.bf16.mxu0 0
          %1218 = vmatpush1.bf16.msra.mxu0 0
          %1219 = vmatprep.subr.bf16.mxu0 0
          %1220 = vmatpush1.bf16.msra.mxu0 0
          %1221 = vmatprep.mubr.bf16.mxu0 0
          %1222 = vmatmul.mubr.bf16.gmra.mrb[0].mxu0 %v892
          %v1223 = vpop.f32.mrb[0].mxu0
          %v1224 = vadd.f32 %v821, %v1223
          %v1225 = vpop.f32.mrb[0].mxu0
          %v1226 = vadd.f32 %v825, %v1225
          %v1227 = vpop.f32.mrb[0].mxu0
          %v1228 = vpop.f32.mrb[0].mxu0
          %1229 = vdwg.mxu0
          %1230 = vmatprep.subr.bf16.mxu0 %v941
          %1231 = vmatpush1.bf16.msra.mxu0 %v938
          %1232 = vmatprep.subr.bf16.mxu0 0
          %1233 = vmatpush1.bf16.msra.mxu0 0
          %1234 = vmatprep.subr.bf16.mxu0 0
          %1235 = vmatpush1.bf16.msra.mxu0 0
          %1236 = vmatprep.subr.bf16.mxu0 0
          %1237 = vmatpush1.bf16.msra.mxu0 0
          %1238 = vmatprep.subr.bf16.mxu0 0
          %1239 = vmatpush1.bf16.msra.mxu0 0
          %1240 = vmatprep.subr.bf16.mxu0 0
          %1241 = vmatpush1.bf16.msra.mxu0 0
          %1242 = vmatprep.subr.bf16.mxu0 0
          %1243 = vmatpush1.bf16.msra.mxu0 0
          %1244 = vmatprep.subr.bf16.mxu0 0
          %1245 = vmatpush1.bf16.msra.mxu0 0
          %1246 = vmatprep.subr.bf16.mxu0 0
          %1247 = vmatpush1.bf16.msra.mxu0 0
          %1248 = vmatprep.subr.bf16.mxu0 0
          %1249 = vmatpush1.bf16.msra.mxu0 0
          %1250 = vmatprep.subr.bf16.mxu0 0
          %1251 = vmatpush1.bf16.msra.mxu0 0
          %1252 = vmatprep.subr.bf16.mxu0 0
          %1253 = vmatpush1.bf16.msra.mxu0 0
          %1254 = vmatprep.subr.bf16.mxu0 0
          %1255 = vmatpush1.bf16.msra.mxu0 0
          %1256 = vmatprep.subr.bf16.mxu0 0
          %1257 = vmatpush1.bf16.msra.mxu0 0
          %1258 = vmatprep.subr.bf16.mxu0 0
          %1259 = vmatpush1.bf16.msra.mxu0 0
          %1260 = vmatprep.subr.bf16.mxu0 0
          %1261 = vmatpush1.bf16.msra.mxu0 0
          %1262 = vmatprep.mubr.bf16.mxu0 0
          %1263 = vmatmul.mubr.bf16.gmra.mrb[0].mxu0 %v892
          %v1264 = vpop.f32.mrb[0].mxu0
          %v1265 = vadd.f32 %v829, %v1264
          %v1266 = vpop.f32.mrb[0].mxu0
          %v1267 = vadd.f32 %v833, %v1266
          %v1268 = vpop.f32.mrb[0].mxu0
          %v1269 = vpop.f32.mrb[0].mxu0
          %1270 = vdwg.mxu0
          %v1271 = vmax.f32 %v978, 0.0
          %v1272 = vmax.f32 %v980, 0.0
          %v1273 = vmax.f32 %v1019, 0.0
          %v1274 = vmax.f32 %v1021, 0.0
          %v1275 = vmax.f32 %v1060, 0.0
          %v1276 = vmax.f32 %v1062, 0.0
          %v1277 = vmax.f32 %v1101, 0.0
          %v1278 = vmax.f32 %v1103, 0.0
          %v1279 = vmax.f32 %v1142, 0.0
          %v1280 = vmax.f32 %v1144, 0.0
          %v1281 = vmax.f32 %v1183, 0.0
          %v1282 = vmax.f32 %v1185, 0.0
          %v1283 = vmax.f32 %v1224, 0.0
          %v1284 = vmax.f32 %v1226, 0.0
          %v1285 = vmax.f32 %v1265, 0.0
          %v1286 = vmax.f32 %v1267, 0.0
          %v1287 = vld [vmem:[#allocation10] sm:$0xff]
          %v1288 = vld [vmem:[#allocation10 + $0x8] sm:$0xff]
          %v1289 = vld [vmem:[#allocation12] sm:$0xff]
          %v1290 = vld [vmem:[#allocation12 + $0x8] sm:$0xff]
          %1292 = vset.pattern.permute.xlu0 0
          %1293 = vperm.xlu0 %1292, %v752
          %v1294 = vpop.permute.xlu0 %1293
          %v1296 = vmul.f32 %v1271, %v1294
          %v1297 = vmul.f32 %v1272, %v1294
          %v1298 = vmul.f32 %v1273, %v1294
          %v1299 = vmul.f32 %v1274, %v1294
          %v1300 = vmul.f32 %v1275, %v1294
          %v1301 = vmul.f32 %v1276, %v1294
          %v1302 = vmul.f32 %v1277, %v1294
          %v1303 = vmul.f32 %v1278, %v1294
          %v1304 = vmul.f32 %v1279, %v1294
          %v1305 = vmul.f32 %v1280, %v1294
          %v1306 = vmul.f32 %v1281, %v1294
          %v1307 = vmul.f32 %v1282, %v1294
          %v1308 = vmul.f32 %v1283, %v1294
          %v1309 = vmul.f32 %v1284, %v1294
          %v1310 = vmul.f32 %v1285, %v1294
          %v1311 = vmul.f32 %v1286, %v1294
          %v1312 = vrot.slane %v1296, 4
          %v1313 = vadd.f32 %v1296, %v1312
          %v1314 = vrot.slane %v1313, 2
          %v1315 = vadd.f32 %v1313, %v1314
          %v1316 = vrot.slane %v1315, 1
          %v1317 = vadd.f32 %v1315, %v1316
          %v1318 = vrot.slane %v1297, 4
          %v1319 = vadd.f32 %v1297, %v1318
          %v1320 = vrot.slane %v1319, 2
          %v1321 = vadd.f32 %v1319, %v1320
          %v1322 = vrot.slane %v1321, 1
          %v1323 = vadd.f32 %v1321, %v1322
          %v1324 = vrot.slane %v1298, 4
          %v1325 = vadd.f32 %v1298, %v1324
          %v1326 = vrot.slane %v1325, 2
          %v1327 = vadd.f32 %v1325, %v1326
          %v1328 = vrot.slane %v1327, 1
          %v1329 = vadd.f32 %v1327, %v1328
          %v1330 = vrot.slane %v1299, 4
          %v1331 = vadd.f32 %v1299, %v1330
          %v1332 = vrot.slane %v1331, 2
          %v1333 = vadd.f32 %v1331, %v1332
          %v1334 = vrot.slane %v1333, 1
          %v1335 = vadd.f32 %v1333, %v1334
          %v1336 = vrot.slane %v1300, 4
          %v1337 = vadd.f32 %v1300, %v1336
          %v1338 = vrot.slane %v1337, 2
          %v1339 = vadd.f32 %v1337, %v1338
          %v1340 = vrot.slane %v1339, 1
          %v1341 = vadd.f32 %v1339, %v1340
          %v1342 = vrot.slane %v1301, 4
          %v1343 = vadd.f32 %v1301, %v1342
          %v1344 = vrot.slane %v1343, 2
          %v1345 = vadd.f32 %v1343, %v1344
          %v1346 = vrot.slane %v1345, 1
          %v1347 = vadd.f32 %v1345, %v1346
          %v1348 = vrot.slane %v1302, 4
          %v1349 = vadd.f32 %v1302, %v1348
          %v1350 = vrot.slane %v1349, 2
          %v1351 = vadd.f32 %v1349, %v1350
          %v1352 = vrot.slane %v1351, 1
          %v1353 = vadd.f32 %v1351, %v1352
          %v1354 = vrot.slane %v1303, 4
          %v1355 = vadd.f32 %v1303, %v1354
          %v1356 = vrot.slane %v1355, 2
          %v1357 = vadd.f32 %v1355, %v1356
          %v1358 = vrot.slane %v1357, 1
          %v1359 = vadd.f32 %v1357, %v1358
          %v1360 = vrot.slane %v1304, 4
          %v1361 = vadd.f32 %v1304, %v1360
          %v1362 = vrot.slane %v1361, 2
          %v1363 = vadd.f32 %v1361, %v1362
          %v1364 = vrot.slane %v1363, 1
          %v1365 = vadd.f32 %v1363, %v1364
          %v1366 = vrot.slane %v1305, 4
          %v1367 = vadd.f32 %v1305, %v1366
          %v1368 = vrot.slane %v1367, 2
          %v1369 = vadd.f32 %v1367, %v1368
          %v1370 = vrot.slane %v1369, 1
          %v1371 = vadd.f32 %v1369, %v1370
          %v1372 = vrot.slane %v1306, 4
          %v1373 = vadd.f32 %v1306, %v1372
          %v1374 = vrot.slane %v1373, 2
          %v1375 = vadd.f32 %v1373, %v1374
          %v1376 = vrot.slane %v1375, 1
          %v1377 = vadd.f32 %v1375, %v1376
          %v1378 = vrot.slane %v1307, 4
          %v1379 = vadd.f32 %v1307, %v1378
          %v1380 = vrot.slane %v1379, 2
          %v1381 = vadd.f32 %v1379, %v1380
          %v1382 = vrot.slane %v1381, 1
          %v1383 = vadd.f32 %v1381, %v1382
          %v1384 = vrot.slane %v1308, 4
          %v1385 = vadd.f32 %v1308, %v1384
          %v1386 = vrot.slane %v1385, 2
          %v1387 = vadd.f32 %v1385, %v1386
          %v1388 = vrot.slane %v1387, 1
          %v1389 = vadd.f32 %v1387, %v1388
          %v1390 = vrot.slane %v1309, 4
          %v1391 = vadd.f32 %v1309, %v1390
          %v1392 = vrot.slane %v1391, 2
          %v1393 = vadd.f32 %v1391, %v1392
          %v1394 = vrot.slane %v1393, 1
          %v1395 = vadd.f32 %v1393, %v1394
          %v1396 = vrot.slane %v1310, 4
          %v1397 = vadd.f32 %v1310, %v1396
          %v1398 = vrot.slane %v1397, 2
          %v1399 = vadd.f32 %v1397, %v1398
          %v1400 = vrot.slane %v1399, 1
          %v1401 = vadd.f32 %v1399, %v1400
          %v1402 = vrot.slane %v1311, 4
          %v1403 = vadd.f32 %v1311, %v1402
          %v1404 = vrot.slane %v1403, 2
          %v1405 = vadd.f32 %v1403, %v1404
          %v1406 = vrot.slane %v1405, 1
          %v1407 = vadd.f32 %v1405, %v1406
          %v1408 = vmul.f32 %v1317, 0.125
          %v1409 = vmul.f32 %v1323, 0.125
          %v1410 = vmul.f32 %v1329, 0.125
          %v1411 = vmul.f32 %v1335, 0.125
          %v1412 = vmul.f32 %v1341, 0.125
          %v1413 = vmul.f32 %v1347, 0.125
          %v1414 = vmul.f32 %v1353, 0.125
          %v1415 = vmul.f32 %v1359, 0.125
          %v1416 = vmul.f32 %v1365, 0.125
          %v1417 = vmul.f32 %v1371, 0.125
          %v1418 = vmul.f32 %v1377, 0.125
          %v1419 = vmul.f32 %v1383, 0.125
          %v1420 = vmul.f32 %v1389, 0.125
          %v1421 = vmul.f32 %v1395, 0.125
          %v1422 = vmul.f32 %v1401, 0.125
          %v1423 = vmul.f32 %v1407, 0.125
          %v1424 = vmul.f32 %v1296, %v1271
          %v1425 = vmul.f32 %v1297, %v1272
          %v1426 = vmul.f32 %v1298, %v1273
          %v1427 = vmul.f32 %v1299, %v1274
          %v1428 = vmul.f32 %v1300, %v1275
          %v1429 = vmul.f32 %v1301, %v1276
          %v1430 = vmul.f32 %v1302, %v1277
          %v1431 = vmul.f32 %v1303, %v1278
          %v1432 = vmul.f32 %v1304, %v1279
          %v1433 = vmul.f32 %v1305, %v1280
          %v1434 = vmul.f32 %v1306, %v1281
          %v1435 = vmul.f32 %v1307, %v1282
          %v1436 = vmul.f32 %v1308, %v1283
          %v1437 = vmul.f32 %v1309, %v1284
          %v1438 = vmul.f32 %v1310, %v1285
          %v1439 = vmul.f32 %v1311, %v1286
          %v1440 = vrot.slane %v1424, 4
          %v1441 = vadd.f32 %v1424, %v1440
          %v1442 = vrot.slane %v1441, 2
          %v1443 = vadd.f32 %v1441, %v1442
          %v1444 = vrot.slane %v1443, 1
          %v1445 = vadd.f32 %v1443, %v1444
          %v1446 = vrot.slane %v1425, 4
          %v1447 = vadd.f32 %v1425, %v1446
          %v1448 = vrot.slane %v1447, 2
          %v1449 = vadd.f32 %v1447, %v1448
          %v1450 = vrot.slane %v1449, 1
          %v1451 = vadd.f32 %v1449, %v1450
          %v1452 = vrot.slane %v1426, 4
          %v1453 = vadd.f32 %v1426, %v1452
          %v1454 = vrot.slane %v1453, 2
          %v1455 = vadd.f32 %v1453, %v1454
          %v1456 = vrot.slane %v1455, 1
          %v1457 = vadd.f32 %v1455, %v1456
          %v1458 = vrot.slane %v1427, 4
          %v1459 = vadd.f32 %v1427, %v1458
          %v1460 = vrot.slane %v1459, 2
          %v1461 = vadd.f32 %v1459, %v1460
          %v1462 = vrot.slane %v1461, 1
          %v1463 = vadd.f32 %v1461, %v1462
          %v1464 = vrot.slane %v1428, 4
          %v1465 = vadd.f32 %v1428, %v1464
          %v1466 = vrot.slane %v1465, 2
          %v1467 = vadd.f32 %v1465, %v1466
          %v1468 = vrot.slane %v1467, 1
          %v1469 = vadd.f32 %v1467, %v1468
          %v1470 = vrot.slane %v1429, 4
          %v1471 = vadd.f32 %v1429, %v1470
          %v1472 = vrot.slane %v1471, 2
          %v1473 = vadd.f32 %v1471, %v1472
          %v1474 = vrot.slane %v1473, 1
          %v1475 = vadd.f32 %v1473, %v1474
          %v1476 = vrot.slane %v1430, 4
          %v1477 = vadd.f32 %v1430, %v1476
          %v1478 = vrot.slane %v1477, 2
          %v1479 = vadd.f32 %v1477, %v1478
          %v1480 = vrot.slane %v1479, 1
          %v1481 = vadd.f32 %v1479, %v1480
          %v1482 = vrot.slane %v1431, 4
          %v1483 = vadd.f32 %v1431, %v1482
          %v1484 = vrot.slane %v1483, 2
          %v1485 = vadd.f32 %v1483, %v1484
          %v1486 = vrot.slane %v1485, 1
          %v1487 = vadd.f32 %v1485, %v1486
          %v1488 = vrot.slane %v1432, 4
          %v1489 = vadd.f32 %v1432, %v1488
          %v1490 = vrot.slane %v1489, 2
          %v1491 = vadd.f32 %v1489, %v1490
          %v1492 = vrot.slane %v1491, 1
          %v1493 = vadd.f32 %v1491, %v1492
          %v1494 = vrot.slane %v1433, 4
          %v1495 = vadd.f32 %v1433, %v1494
          %v1496 = vrot.slane %v1495, 2
          %v1497 = vadd.f32 %v1495, %v1496
          %v1498 = vrot.slane %v1497, 1
          %v1499 = vadd.f32 %v1497, %v1498
          %v1500 = vrot.slane %v1434, 4
          %v1501 = vadd.f32 %v1434, %v1500
          %v1502 = vrot.slane %v1501, 2
          %v1503 = vadd.f32 %v1501, %v1502
          %v1504 = vrot.slane %v1503, 1
          %v1505 = vadd.f32 %v1503, %v1504
          %v1506 = vrot.slane %v1435, 4
          %v1507 = vadd.f32 %v1435, %v1506
          %v1508 = vrot.slane %v1507, 2
          %v1509 = vadd.f32 %v1507, %v1508
          %v1510 = vrot.slane %v1509, 1
          %v1511 = vadd.f32 %v1509, %v1510
          %v1512 = vrot.slane %v1436, 4
          %v1513 = vadd.f32 %v1436, %v1512
          %v1514 = vrot.slane %v1513, 2
          %v1515 = vadd.f32 %v1513, %v1514
          %v1516 = vrot.slane %v1515, 1
          %v1517 = vadd.f32 %v1515, %v1516
          %v1518 = vrot.slane %v1437, 4
          %v1519 = vadd.f32 %v1437, %v1518
          %v1520 = vrot.slane %v1519, 2
          %v1521 = vadd.f32 %v1519, %v1520
          %v1522 = vrot.slane %v1521, 1
          %v1523 = vadd.f32 %v1521, %v1522
          %v1524 = vrot.slane %v1438, 4
          %v1525 = vadd.f32 %v1438, %v1524
          %v1526 = vrot.slane %v1525, 2
          %v1527 = vadd.f32 %v1525, %v1526
          %v1528 = vrot.slane %v1527, 1
          %v1529 = vadd.f32 %v1527, %v1528
          %v1530 = vrot.slane %v1439, 4
          %v1531 = vadd.f32 %v1439, %v1530
          %v1532 = vrot.slane %v1531, 2
          %v1533 = vadd.f32 %v1531, %v1532
          %v1534 = vrot.slane %v1533, 1
          %v1535 = vadd.f32 %v1533, %v1534
          %v1536 = vmul.f32 %v1445, 0.125
          %v1537 = vmul.f32 %v1451, 0.125
          %v1538 = vmul.f32 %v1457, 0.125
          %v1539 = vmul.f32 %v1463, 0.125
          %v1540 = vmul.f32 %v1469, 0.125
          %v1541 = vmul.f32 %v1475, 0.125
          %v1542 = vmul.f32 %v1481, 0.125
          %v1543 = vmul.f32 %v1487, 0.125
          %v1544 = vmul.f32 %v1493, 0.125
          %v1545 = vmul.f32 %v1499, 0.125
          %v1546 = vmul.f32 %v1505, 0.125
          %v1547 = vmul.f32 %v1511, 0.125
          %v1548 = vmul.f32 %v1517, 0.125
          %v1549 = vmul.f32 %v1523, 0.125
          %v1550 = vmul.f32 %v1529, 0.125
          %v1551 = vmul.f32 %v1535, 0.125
          %v1552 = vmul.f32 %v1408, %v1408
          %v1553 = vmul.f32 %v1409, %v1409
          %v1554 = vmul.f32 %v1410, %v1410
          %v1555 = vmul.f32 %v1411, %v1411
          %v1556 = vmul.f32 %v1412, %v1412
          %v1557 = vmul.f32 %v1413, %v1413
          %v1558 = vmul.f32 %v1414, %v1414
          %v1559 = vmul.f32 %v1415, %v1415
          %v1560 = vmul.f32 %v1416, %v1416
          %v1561 = vmul.f32 %v1417, %v1417
          %v1562 = vmul.f32 %v1418, %v1418
          %v1563 = vmul.f32 %v1419, %v1419
          %v1564 = vmul.f32 %v1420, %v1420
          %v1565 = vmul.f32 %v1421, %v1421
          %v1566 = vmul.f32 %v1422, %v1422
          %v1567 = vmul.f32 %v1423, %v1423
          %v1568 = vsub.f32 %v1536, %v1552
          %v1569 = vsub.f32 %v1537, %v1553
          %v1570 = vsub.f32 %v1538, %v1554
          %v1571 = vsub.f32 %v1539, %v1555
          %v1572 = vsub.f32 %v1540, %v1556
          %v1573 = vsub.f32 %v1541, %v1557
          %v1574 = vsub.f32 %v1542, %v1558
          %v1575 = vsub.f32 %v1543, %v1559
          %v1576 = vsub.f32 %v1544, %v1560
          %v1577 = vsub.f32 %v1545, %v1561
          %v1578 = vsub.f32 %v1546, %v1562
          %v1579 = vsub.f32 %v1547, %v1563
          %v1580 = vsub.f32 %v1548, %v1564
          %v1581 = vsub.f32 %v1549, %v1565
          %v1582 = vsub.f32 %v1550, %v1566
          %v1583 = vsub.f32 %v1551, %v1567
          %v1584 = vsub.f32 %v1271, %v1408
          %v1585 = vsub.f32 %v1272, %v1409
          %v1586 = vsub.f32 %v1273, %v1410
          %v1587 = vsub.f32 %v1274, %v1411
          %v1588 = vsub.f32 %v1275, %v1412
          %v1589 = vsub.f32 %v1276, %v1413
          %v1590 = vsub.f32 %v1277, %v1414
          %v1591 = vsub.f32 %v1278, %v1415
          %v1592 = vsub.f32 %v1279, %v1416
          %v1593 = vsub.f32 %v1280, %v1417
          %v1594 = vsub.f32 %v1281, %v1418
          %v1595 = vsub.f32 %v1282, %v1419
          %v1596 = vsub.f32 %v1283, %v1420
          %v1597 = vsub.f32 %v1284, %v1421
          %v1598 = vsub.f32 %v1285, %v1422
          %v1599 = vsub.f32 %v1286, %v1423
          %v1600 = vadd.f32 %v1568, 1e-05
          %v1601 = vadd.f32 %v1569, 1e-05
          %v1602 = vadd.f32 %v1570, 1e-05
          %v1603 = vadd.f32 %v1571, 1e-05
          %v1604 = vadd.f32 %v1572, 1e-05
          %v1605 = vadd.f32 %v1573, 1e-05
          %v1606 = vadd.f32 %v1574, 1e-05
          %v1607 = vadd.f32 %v1575, 1e-05
          %v1608 = vadd.f32 %v1576, 1e-05
          %v1609 = vadd.f32 %v1577, 1e-05
          %v1610 = vadd.f32 %v1578, 1e-05
          %v1611 = vadd.f32 %v1579, 1e-05
          %v1612 = vadd.f32 %v1580, 1e-05
          %v1613 = vadd.f32 %v1581, 1e-05
          %v1614 = vadd.f32 %v1582, 1e-05
          %v1615 = vadd.f32 %v1583, 1e-05
          %v1616 = vrsqrt.pop %v1600
          %v1617 = vrsqrt.pop %v1601
          %v1618 = vrsqrt.pop %v1602
          %v1619 = vrsqrt.pop %v1603
          %v1620 = vrsqrt.pop %v1604
          %v1621 = vrsqrt.pop %v1605
          %v1622 = vrsqrt.pop %v1606
          %v1623 = vrsqrt.pop %v1607
          %v1624 = vrsqrt.pop %v1608
          %v1625 = vrsqrt.pop %v1609
          %v1626 = vrsqrt.pop %v1610
          %v1627 = vrsqrt.pop %v1611
          %v1628 = vrsqrt.pop %v1612
          %v1629 = vrsqrt.pop %v1613
          %v1630 = vrsqrt.pop %v1614
          %v1631 = vrsqrt.pop %v1615
          %v1632 = vmul.f32 %v1584, %v1616
          %v1633 = vmul.f32 %v1585, %v1617
          %v1634 = vmul.f32 %v1586, %v1618
          %v1635 = vmul.f32 %v1587, %v1619
          %v1636 = vmul.f32 %v1588, %v1620
          %v1637 = vmul.f32 %v1589, %v1621
          %v1638 = vmul.f32 %v1590, %v1622
          %v1639 = vmul.f32 %v1591, %v1623
          %v1640 = vmul.f32 %v1592, %v1624
          %v1641 = vmul.f32 %v1593, %v1625
          %v1642 = vmul.f32 %v1594, %v1626
          %v1643 = vmul.f32 %v1595, %v1627
          %v1644 = vmul.f32 %v1596, %v1628
          %v1645 = vmul.f32 %v1597, %v1629
          %v1646 = vmul.f32 %v1598, %v1630
          %v1647 = vmul.f32 %v1599, %v1631
          %v1650 = vlaneseq
          %v1651 = vshrl.u32 %v1650, 7
          %v1652 = vsub.s32 0, %v1651
          %v1653 = vrot.slane %v1287, %v1652
          %v1654 = vlaneseq
          %v1655 = vshrl.u32 %v1654, 7
          %v1656 = vsub.s32 1, %v1655
          %v1657 = vrot.slane %v1287, %v1656
          %v1658 = vlaneseq
          %v1659 = vshrl.u32 %v1658, 7
          %v1660 = vsub.s32 2, %v1659
          %v1661 = vrot.slane %v1287, %v1660
          %v1662 = vlaneseq
          %v1663 = vshrl.u32 %v1662, 7
          %v1664 = vsub.s32 3, %v1663
          %v1665 = vrot.slane %v1287, %v1664
          %v1666 = vlaneseq
          %v1667 = vshrl.u32 %v1666, 7
          %v1668 = vsub.s32 4, %v1667
          %v1669 = vrot.slane %v1287, %v1668
          %v1670 = vlaneseq
          %v1671 = vshrl.u32 %v1670, 7
          %v1672 = vsub.s32 5, %v1671
          %v1673 = vrot.slane %v1287, %v1672
          %v1674 = vlaneseq
          %v1675 = vshrl.u32 %v1674, 7
          %v1676 = vsub.s32 6, %v1675
          %v1677 = vrot.slane %v1287, %v1676
          %v1678 = vlaneseq
          %v1679 = vshrl.u32 %v1678, 7
          %v1680 = vsub.s32 7, %v1679
          %v1681 = vrot.slane %v1287, %v1680
          %v1682 = vlaneseq
          %v1683 = vshrl.u32 %v1682, 7
          %v1684 = vsub.s32 0, %v1683
          %v1685 = vrot.slane %v1288, %v1684
          %v1686 = vlaneseq
          %v1687 = vshrl.u32 %v1686, 7
          %v1688 = vsub.s32 1, %v1687
          %v1689 = vrot.slane %v1288, %v1688
          %v1690 = vlaneseq
          %v1691 = vshrl.u32 %v1690, 7
          %v1692 = vsub.s32 2, %v1691
          %v1693 = vrot.slane %v1288, %v1692
          %v1694 = vlaneseq
          %v1695 = vshrl.u32 %v1694, 7
          %v1696 = vsub.s32 3, %v1695
          %v1697 = vrot.slane %v1288, %v1696
          %v1698 = vlaneseq
          %v1699 = vshrl.u32 %v1698, 7
          %v1700 = vsub.s32 4, %v1699
          %v1701 = vrot.slane %v1288, %v1700
          %v1702 = vlaneseq
          %v1703 = vshrl.u32 %v1702, 7
          %v1704 = vsub.s32 5, %v1703
          %v1705 = vrot.slane %v1288, %v1704
          %v1706 = vlaneseq
          %v1707 = vshrl.u32 %v1706, 7
          %v1708 = vsub.s32 6, %v1707
          %v1709 = vrot.slane %v1288, %v1708
          %v1710 = vlaneseq
          %v1711 = vshrl.u32 %v1710, 7
          %v1712 = vsub.s32 7, %v1711
          %v1713 = vrot.slane %v1288, %v1712
          %v1730 = vmul.f32 %v1632, %v1653
          %v1731 = vmul.f32 %v1633, %v1657
          %v1732 = vmul.f32 %v1634, %v1661
          %v1733 = vmul.f32 %v1635, %v1665
          %v1734 = vmul.f32 %v1636, %v1669
          %v1735 = vmul.f32 %v1637, %v1673
          %v1736 = vmul.f32 %v1638, %v1677
          %v1737 = vmul.f32 %v1639, %v1681
          %v1738 = vmul.f32 %v1640, %v1685
          %v1739 = vmul.f32 %v1641, %v1689
          %v1740 = vmul.f32 %v1642, %v1693
          %v1741 = vmul.f32 %v1643, %v1697
          %v1742 = vmul.f32 %v1644, %v1701
          %v1743 = vmul.f32 %v1645, %v1705
          %v1744 = vmul.f32 %v1646, %v1709
          %v1745 = vmul.f32 %v1647, %v1713
          %v1748 = vlaneseq
          %v1749 = vshrl.u32 %v1748, 7
          %v1750 = vsub.s32 0, %v1749
          %v1751 = vrot.slane %v1289, %v1750
          %v1752 = vlaneseq
          %v1753 = vshrl.u32 %v1752, 7
          %v1754 = vsub.s32 1, %v1753
          %v1755 = vrot.slane %v1289, %v1754
          %v1756 = vlaneseq
          %v1757 = vshrl.u32 %v1756, 7
          %v1758 = vsub.s32 2, %v1757
          %v1759 = vrot.slane %v1289, %v1758
          %v1760 = vlaneseq
          %v1761 = vshrl.u32 %v1760, 7
          %v1762 = vsub.s32 3, %v1761
          %v1763 = vrot.slane %v1289, %v1762
          %v1764 = vlaneseq
          %v1765 = vshrl.u32 %v1764, 7
          %v1766 = vsub.s32 4, %v1765
          %v1767 = vrot.slane %v1289, %v1766
          %v1768 = vlaneseq
          %v1769 = vshrl.u32 %v1768, 7
          %v1770 = vsub.s32 5, %v1769
          %v1771 = vrot.slane %v1289, %v1770
          %v1772 = vlaneseq
          %v1773 = vshrl.u32 %v1772, 7
          %v1774 = vsub.s32 6, %v1773
          %v1775 = vrot.slane %v1289, %v1774
          %v1776 = vlaneseq
          %v1777 = vshrl.u32 %v1776, 7
          %v1778 = vsub.s32 7, %v1777
          %v1779 = vrot.slane %v1289, %v1778
          %v1780 = vlaneseq
          %v1781 = vshrl.u32 %v1780, 7
          %v1782 = vsub.s32 0, %v1781
          %v1783 = vrot.slane %v1290, %v1782
          %v1784 = vlaneseq
          %v1785 = vshrl.u32 %v1784, 7
          %v1786 = vsub.s32 1, %v1785
          %v1787 = vrot.slane %v1290, %v1786
          %v1788 = vlaneseq
          %v1789 = vshrl.u32 %v1788, 7
          %v1790 = vsub.s32 2, %v1789
          %v1791 = vrot.slane %v1290, %v1790
          %v1792 = vlaneseq
          %v1793 = vshrl.u32 %v1792, 7
          %v1794 = vsub.s32 3, %v1793
          %v1795 = vrot.slane %v1290, %v1794
          %v1796 = vlaneseq
          %v1797 = vshrl.u32 %v1796, 7
          %v1798 = vsub.s32 4, %v1797
          %v1799 = vrot.slane %v1290, %v1798
          %v1800 = vlaneseq
          %v1801 = vshrl.u32 %v1800, 7
          %v1802 = vsub.s32 5, %v1801
          %v1803 = vrot.slane %v1290, %v1802
          %v1804 = vlaneseq
          %v1805 = vshrl.u32 %v1804, 7
          %v1806 = vsub.s32 6, %v1805
          %v1807 = vrot.slane %v1290, %v1806
          %v1808 = vlaneseq
          %v1809 = vshrl.u32 %v1808, 7
          %v1810 = vsub.s32 7, %v1809
          %v1811 = vrot.slane %v1290, %v1810
          %v1828 = vadd.f32 %v1730, %v1751
          %v1829 = vadd.f32 %v1731, %v1755
          %v1830 = vadd.f32 %v1732, %v1759
          %v1831 = vadd.f32 %v1733, %v1763
          %v1832 = vadd.f32 %v1734, %v1767
          %v1833 = vadd.f32 %v1735, %v1771
          %v1834 = vadd.f32 %v1736, %v1775
          %v1835 = vadd.f32 %v1737, %v1779
          %v1836 = vadd.f32 %v1738, %v1783
          %v1837 = vadd.f32 %v1739, %v1787
          %v1838 = vadd.f32 %v1740, %v1791
          %v1839 = vadd.f32 %v1741, %v1795
          %v1840 = vadd.f32 %v1742, %v1799
          %v1841 = vadd.f32 %v1743, %v1803
          %v1842 = vadd.f32 %v1744, %v1807
          %v1843 = vadd.f32 %v1745, %v1811
          %v1844 = vpack.c.bf16 %v1828, %v1828
          %v1845 = vpack.c.bf16 %v1829, %v1829
          %v1846 = vpack.c.bf16 %v1830, %v1830
          %v1847 = vpack.c.bf16 %v1831, %v1831
          %v1848 = vpack.c.bf16 %v1832, %v1832
          %v1849 = vpack.c.bf16 %v1833, %v1833
          %v1850 = vpack.c.bf16 %v1834, %v1834
          %v1851 = vpack.c.bf16 %v1835, %v1835
          %v1852 = vpack.c.bf16 %v1836, %v1836
          %v1853 = vpack.c.bf16 %v1837, %v1837
          %v1854 = vpack.c.bf16 %v1838, %v1838
          %v1855 = vpack.c.bf16 %v1839, %v1839
          %v1856 = vpack.c.bf16 %v1840, %v1840
          %v1857 = vpack.c.bf16 %v1841, %v1841
          %v1858 = vpack.c.bf16 %v1842, %v1842
          %v1859 = vpack.c.bf16 %v1843, %v1843
          %v1876 = vunpack.c.l.b16 %v1844
          %v1877 = vunpack.c.l.b16 %v1845
          %v1878 = vunpack.c.l.b16 %v1846
          %v1879 = vunpack.c.l.b16 %v1847
          %v1880 = vunpack.c.l.b16 %v1848
          %v1881 = vunpack.c.l.b16 %v1849
          %v1882 = vunpack.c.l.b16 %v1850
          %v1883 = vunpack.c.l.b16 %v1851
          %v1884 = vunpack.c.l.b16 %v1852
          %v1885 = vunpack.c.l.b16 %v1853
          %v1886 = vunpack.c.l.b16 %v1854
          %v1887 = vunpack.c.l.b16 %v1855
          %v1888 = vunpack.c.l.b16 %v1856
          %v1889 = vunpack.c.l.b16 %v1857
          %v1890 = vunpack.c.l.b16 %v1858
          %v1891 = vunpack.c.l.b16 %v1859
          %v1892 = vpack.c.b16 %v1877, %v1876
          %v1893 = vpack.c.b16 %v1879, %v1878
          %v1894 = vpack.c.b16 %v1881, %v1880
          %v1895 = vpack.c.b16 %v1883, %v1882
          %v1896 = vpack.c.b16 %v1885, %v1884
          %v1897 = vpack.c.b16 %v1887, %v1886
          %v1898 = vpack.c.b16 %v1889, %v1888
          %v1899 = vpack.c.b16 %v1891, %v1890
          %1908 = vst [vmem:[#allocation2] sm:$0xff] %v1892
          %1909 = vst [vmem:[#allocation2 + $0x8] sm:$0xff] %v1893
          %1910 = vst [vmem:[#allocation2 + $0x10] sm:$0xff] %v1894
          %1911 = vst [vmem:[#allocation2 + $0x18] sm:$0xff] %v1895
          %1912 = vst [vmem:[#allocation2 + $0x20] sm:$0xff] %v1896
          %1913 = vst [vmem:[#allocation2 + $0x28] sm:$0xff] %v1897
          %1914 = vst [vmem:[#allocation2 + $0x30] sm:$0xff] %v1898
          %1915 = vst [vmem:[#allocation2 + $0x38] sm:$0xff] %v1899
          %1916 = vst [vmem:[#allocation3] sm:$0xff] 0.0
          %1917 = vst [vmem:[#allocation3 + $0x8] sm:$0xff] 0.0
          %1918 = vst [vmem:[#allocation3 + $0x10] sm:$0xff] 0.0
          %1919 = vst [vmem:[#allocation3 + $0x18] sm:$0xff] 0.0
          %1920 = vst [vmem:[#allocation3 + $0x20] sm:$0xff] 0.0
          %1921 = vst [vmem:[#allocation3 + $0x28] sm:$0xff] 0.0
          %1922 = vst [vmem:[#allocation3 + $0x30] sm:$0xff] 0.0
          %1923 = vst [vmem:[#allocation3 + $0x38] sm:$0xff] 0.0
        $region156: #{tpu_custom_call.1} parent=87 // pred_fallthru
          _
        %s1924 = smul.u32 %s40, 512
        %v1925 = vld [vmem:[#allocation3] sm:$0xff]
        %v1926 = vld [vmem:[#allocation3 + $0x8] sm:$0xff]
        %v1927 = vld [vmem:[#allocation3 + $0x10] sm:$0xff]
        %v1928 = vld [vmem:[#allocation3 + $0x18] sm:$0xff]
        %v1929 = vld [vmem:[#allocation3 + $0x20] sm:$0xff]
        %v1930 = vld [vmem:[#allocation3 + $0x28] sm:$0xff]
        %v1931 = vld [vmem:[#allocation3 + $0x30] sm:$0xff]
        %v1932 = vld [vmem:[#allocation3 + $0x38] sm:$0xff]
        %s1933 = sshra.s32 %s1924, 7
        %s1934 = sand.u32 %s1924, 127
        %s1935 = smul.addr %s1933, 4
        %s1936 = scalar_lea.vmem [#allocation2], %s1935
        %v1937 = vld [vmem:[%s1936] sm:$0xff]
        %v1938 = vld [vmem:[%s1936 + $0x8] sm:$0xff]
        %v1939 = vld [vmem:[%s664] sm:$0xff]
        %v1940 = vld [vmem:[%s664 + $0x8] sm:$0xff]
        %v1941 = vld [vmem:[%s664 + $0x10] sm:$0xff]
        %v1942 = vld [vmem:[%s664 + $0x18] sm:$0xff]
        %v1943 = vld [vmem:[%s664 + $0x20] sm:$0xff]
        %v1944 = vld [vmem:[%s664 + $0x28] sm:$0xff]
        %v1945 = vld [vmem:[%s664 + $0x30] sm:$0xff]
        %v1946 = vld [vmem:[%s664 + $0x38] sm:$0xff]
        %v1947 = vld [vmem:[%s664 + $0x40] sm:$0xff]
        %v1948 = vld [vmem:[%s664 + $0x48] sm:$0xff]
        %v1949 = vld [vmem:[%s664 + $0x50] sm:$0xff]
        %v1950 = vld [vmem:[%s664 + $0x58] sm:$0xff]
        %v1951 = vld [vmem:[%s664 + $0x60] sm:$0xff]
        %v1952 = vld [vmem:[%s664 + $0x68] sm:$0xff]
        %v1953 = vld [vmem:[%s664 + $0x70] sm:$0xff]
        %v1954 = vld [vmem:[%s664 + $0x78] sm:$0xff]
        %v1955 = vld [vmem:[%s664 + $0x80] sm:$0xff]
        %v1956 = vld [vmem:[%s664 + $0x88] sm:$0xff]
        %v1957 = vld [vmem:[%s664 + $0x90] sm:$0xff]
        %v1958 = vld [vmem:[%s664 + $0x98] sm:$0xff]
        %v1959 = vld [vmem:[%s664 + $0xa0] sm:$0xff]
        %v1960 = vld [vmem:[%s664 + $0xa8] sm:$0xff]
        %v1961 = vld [vmem:[%s664 + $0xb0] sm:$0xff]
        %v1962 = vld [vmem:[%s664 + $0xb8] sm:$0xff]
        %v1963 = vld [vmem:[%s664 + $0xc0] sm:$0xff]
        %v1964 = vld [vmem:[%s664 + $0xc8] sm:$0xff]
        %v1965 = vld [vmem:[%s664 + $0xd0] sm:$0xff]
        %v1966 = vld [vmem:[%s664 + $0xd8] sm:$0xff]
        %v1967 = vld [vmem:[%s664 + $0xe0] sm:$0xff]
        %v1968 = vld [vmem:[%s664 + $0xe8] sm:$0xff]
        %v1969 = vld [vmem:[%s664 + $0xf0] sm:$0xff]
        %v1970 = vld [vmem:[%s664 + $0xf8] sm:$0xff]
        %v1971 = vld [vmem:[%s664 + $0x100] sm:$0xff]
        %v1972 = vld [vmem:[%s664 + $0x108] sm:$0xff]
        %v1973 = vld [vmem:[%s664 + $0x110] sm:$0xff]
        %v1974 = vld [vmem:[%s664 + $0x118] sm:$0xff]
        %v1975 = vld [vmem:[%s664 + $0x120] sm:$0xff]
        %v1976 = vld [vmem:[%s664 + $0x128] sm:$0xff]
        %v1977 = vld [vmem:[%s664 + $0x130] sm:$0xff]
        %v1978 = vld [vmem:[%s664 + $0x138] sm:$0xff]
        %v1979 = vld [vmem:[%s664 + $0x140] sm:$0xff]
        %v1980 = vld [vmem:[%s664 + $0x148] sm:$0xff]
        %v1981 = vld [vmem:[%s664 + $0x150] sm:$0xff]
        %v1982 = vld [vmem:[%s664 + $0x158] sm:$0xff]
        %v1983 = vld [vmem:[%s664 + $0x160] sm:$0xff]
        %v1984 = vld [vmem:[%s664 + $0x168] sm:$0xff]
        %v1985 = vld [vmem:[%s664 + $0x170] sm:$0xff]
        %v1986 = vld [vmem:[%s664 + $0x178] sm:$0xff]
        %v1987 = vld [vmem:[%s664 + $0x180] sm:$0xff]
        %v1988 = vld [vmem:[%s664 + $0x188] sm:$0xff]
        %v1989 = vld [vmem:[%s664 + $0x190] sm:$0xff]
        %v1990 = vld [vmem:[%s664 + $0x198] sm:$0xff]
        %v1991 = vld [vmem:[%s664 + $0x1a0] sm:$0xff]
        %v1992 = vld [vmem:[%s664 + $0x1a8] sm:$0xff]
        %v1993 = vld [vmem:[%s664 + $0x1b0] sm:$0xff]
        %v1994 = vld [vmem:[%s664 + $0x1b8] sm:$0xff]
        %v1995 = vld [vmem:[%s664 + $0x1c0] sm:$0xff]
        %v1996 = vld [vmem:[%s664 + $0x1c8] sm:$0xff]
        %v1997 = vld [vmem:[%s664 + $0x1d0] sm:$0xff]
        %v1998 = vld [vmem:[%s664 + $0x1d8] sm:$0xff]
        %v1999 = vld [vmem:[%s664 + $0x1e0] sm:$0xff]
        %v2000 = vld [vmem:[%s664 + $0x1e8] sm:$0xff]
        %v2001 = vld [vmem:[%s664 + $0x1f0] sm:$0xff]
        %v2002 = vld [vmem:[%s664 + $0x1f8] sm:$0xff]
        %v2003 = vld [vmem:[%s664 + $0x200] sm:$0xff]
        %v2004 = vld [vmem:[%s664 + $0x208] sm:$0xff]
        %v2005 = vld [vmem:[%s664 + $0x210] sm:$0xff]
        %v2006 = vld [vmem:[%s664 + $0x218] sm:$0xff]
        %v2007 = vld [vmem:[%s664 + $0x220] sm:$0xff]
        %v2008 = vld [vmem:[%s664 + $0x228] sm:$0xff]
        %v2009 = vld [vmem:[%s664 + $0x230] sm:$0xff]
        %v2010 = vld [vmem:[%s664 + $0x238] sm:$0xff]
        %v2011 = vld [vmem:[%s664 + $0x240] sm:$0xff]
        %v2012 = vld [vmem:[%s664 + $0x248] sm:$0xff]
        %v2013 = vld [vmem:[%s664 + $0x250] sm:$0xff]
        %v2014 = vld [vmem:[%s664 + $0x258] sm:$0xff]
        %v2015 = vld [vmem:[%s664 + $0x260] sm:$0xff]
        %v2016 = vld [vmem:[%s664 + $0x268] sm:$0xff]
        %v2017 = vld [vmem:[%s664 + $0x270] sm:$0xff]
        %v2018 = vld [vmem:[%s664 + $0x278] sm:$0xff]
        %v2019 = vld [vmem:[%s664 + $0x280] sm:$0xff]
        %v2020 = vld [vmem:[%s664 + $0x288] sm:$0xff]
        %v2021 = vld [vmem:[%s664 + $0x290] sm:$0xff]
        %v2022 = vld [vmem:[%s664 + $0x298] sm:$0xff]
        %v2023 = vld [vmem:[%s664 + $0x2a0] sm:$0xff]
        %v2024 = vld [vmem:[%s664 + $0x2a8] sm:$0xff]
        %v2025 = vld [vmem:[%s664 + $0x2b0] sm:$0xff]
        %v2026 = vld [vmem:[%s664 + $0x2b8] sm:$0xff]
        %v2027 = vld [vmem:[%s664 + $0x2c0] sm:$0xff]
        %v2028 = vld [vmem:[%s664 + $0x2c8] sm:$0xff]
        %v2029 = vld [vmem:[%s664 + $0x2d0] sm:$0xff]
        %v2030 = vld [vmem:[%s664 + $0x2d8] sm:$0xff]
        %v2031 = vld [vmem:[%s664 + $0x2e0] sm:$0xff]
        %v2032 = vld [vmem:[%s664 + $0x2e8] sm:$0xff]
        %v2033 = vld [vmem:[%s664 + $0x2f0] sm:$0xff]
        %v2034 = vld [vmem:[%s664 + $0x2f8] sm:$0xff]
        %v2035 = vld [vmem:[%s664 + $0x300] sm:$0xff]
        %v2036 = vld [vmem:[%s664 + $0x308] sm:$0xff]
        %v2037 = vld [vmem:[%s664 + $0x310] sm:$0xff]
        %v2038 = vld [vmem:[%s664 + $0x318] sm:$0xff]
        %v2039 = vld [vmem:[%s664 + $0x320] sm:$0xff]
        %v2040 = vld [vmem:[%s664 + $0x328] sm:$0xff]
        %v2041 = vld [vmem:[%s664 + $0x330] sm:$0xff]
        %v2042 = vld [vmem:[%s664 + $0x338] sm:$0xff]
        %v2043 = vld [vmem:[%s664 + $0x340] sm:$0xff]
        %v2044 = vld [vmem:[%s664 + $0x348] sm:$0xff]
        %v2045 = vld [vmem:[%s664 + $0x350] sm:$0xff]
        %v2046 = vld [vmem:[%s664 + $0x358] sm:$0xff]
        %v2047 = vld [vmem:[%s664 + $0x360] sm:$0xff]
        %v2048 = vld [vmem:[%s664 + $0x368] sm:$0xff]
        %v2049 = vld [vmem:[%s664 + $0x370] sm:$0xff]
        %v2050 = vld [vmem:[%s664 + $0x378] sm:$0xff]
        %v2051 = vld [vmem:[%s664 + $0x380] sm:$0xff]
        %v2052 = vld [vmem:[%s664 + $0x388] sm:$0xff]
        %v2053 = vld [vmem:[%s664 + $0x390] sm:$0xff]
        %v2054 = vld [vmem:[%s664 + $0x398] sm:$0xff]
        %v2055 = vld [vmem:[%s664 + $0x3a0] sm:$0xff]
        %v2056 = vld [vmem:[%s664 + $0x3a8] sm:$0xff]
        %v2057 = vld [vmem:[%s664 + $0x3b0] sm:$0xff]
        %v2058 = vld [vmem:[%s664 + $0x3b8] sm:$0xff]
        %v2059 = vld [vmem:[%s664 + $0x3c0] sm:$0xff]
        %v2060 = vld [vmem:[%s664 + $0x3c8] sm:$0xff]
        %v2061 = vld [vmem:[%s664 + $0x3d0] sm:$0xff]
        %v2062 = vld [vmem:[%s664 + $0x3d8] sm:$0xff]
        %v2063 = vld [vmem:[%s664 + $0x3e0] sm:$0xff]
        %v2064 = vld [vmem:[%s664 + $0x3e8] sm:$0xff]
        %v2065 = vld [vmem:[%s664 + $0x3f0] sm:$0xff]
        %v2066 = vld [vmem:[%s664 + $0x3f8] sm:$0xff]
        %v2067 = vld [vmem:[%s664 + $0x400] sm:$0xff]
        %v2068 = vld [vmem:[%s664 + $0x408] sm:$0xff]
        %v2069 = vld [vmem:[%s664 + $0x410] sm:$0xff]
        %v2070 = vld [vmem:[%s664 + $0x418] sm:$0xff]
        %v2071 = vld [vmem:[%s664 + $0x420] sm:$0xff]
        %v2072 = vld [vmem:[%s664 + $0x428] sm:$0xff]
        %v2073 = vld [vmem:[%s664 + $0x430] sm:$0xff]
        %v2074 = vld [vmem:[%s664 + $0x438] sm:$0xff]
        %v2075 = vld [vmem:[%s664 + $0x440] sm:$0xff]
        %v2076 = vld [vmem:[%s664 + $0x448] sm:$0xff]
        %v2077 = vld [vmem:[%s664 + $0x450] sm:$0xff]
        %v2078 = vld [vmem:[%s664 + $0x458] sm:$0xff]
        %v2079 = vld [vmem:[%s664 + $0x460] sm:$0xff]
        %v2080 = vld [vmem:[%s664 + $0x468] sm:$0xff]
        %v2081 = vld [vmem:[%s664 + $0x470] sm:$0xff]
        %v2082 = vld [vmem:[%s664 + $0x478] sm:$0xff]
        %v2083 = vld [vmem:[%s664 + $0x480] sm:$0xff]
        %v2084 = vld [vmem:[%s664 + $0x488] sm:$0xff]
        %v2085 = vld [vmem:[%s664 + $0x490] sm:$0xff]
        %v2086 = vld [vmem:[%s664 + $0x498] sm:$0xff]
        %v2087 = vld [vmem:[%s664 + $0x4a0] sm:$0xff]
        %v2088 = vld [vmem:[%s664 + $0x4a8] sm:$0xff]
        %v2089 = vld [vmem:[%s664 + $0x4b0] sm:$0xff]
        %v2090 = vld [vmem:[%s664 + $0x4b8] sm:$0xff]
        %v2091 = vld [vmem:[%s664 + $0x4c0] sm:$0xff]
        %v2092 = vld [vmem:[%s664 + $0x4c8] sm:$0xff]
        %v2093 = vld [vmem:[%s664 + $0x4d0] sm:$0xff]
        %v2094 = vld [vmem:[%s664 + $0x4d8] sm:$0xff]
        %v2095 = vld [vmem:[%s664 + $0x4e0] sm:$0xff]
        %v2096 = vld [vmem:[%s664 + $0x4e8] sm:$0xff]
        %v2097 = vld [vmem:[%s664 + $0x4f0] sm:$0xff]
        %v2098 = vld [vmem:[%s664 + $0x4f8] sm:$0xff]
        %v2099 = vld [vmem:[%s664 + $0x500] sm:$0xff]
        %v2100 = vld [vmem:[%s664 + $0x508] sm:$0xff]
        %v2101 = vld [vmem:[%s664 + $0x510] sm:$0xff]
        %v2102 = vld [vmem:[%s664 + $0x518] sm:$0xff]
        %v2103 = vld [vmem:[%s664 + $0x520] sm:$0xff]
        %v2104 = vld [vmem:[%s664 + $0x528] sm:$0xff]
        %v2105 = vld [vmem:[%s664 + $0x530] sm:$0xff]
        %v2106 = vld [vmem:[%s664 + $0x538] sm:$0xff]
        %v2107 = vld [vmem:[%s664 + $0x540] sm:$0xff]
        %v2108 = vld [vmem:[%s664 + $0x548] sm:$0xff]
        %v2109 = vld [vmem:[%s664 + $0x550] sm:$0xff]
        %v2110 = vld [vmem:[%s664 + $0x558] sm:$0xff]
        %v2111 = vld [vmem:[%s664 + $0x560] sm:$0xff]
        %v2112 = vld [vmem:[%s664 + $0x568] sm:$0xff]
        %v2113 = vld [vmem:[%s664 + $0x570] sm:$0xff]
        %v2114 = vld [vmem:[%s664 + $0x578] sm:$0xff]
        %v2115 = vld [vmem:[%s664 + $0x580] sm:$0xff]
        %v2116 = vld [vmem:[%s664 + $0x588] sm:$0xff]
        %v2117 = vld [vmem:[%s664 + $0x590] sm:$0xff]
        %v2118 = vld [vmem:[%s664 + $0x598] sm:$0xff]
        %v2119 = vld [vmem:[%s664 + $0x5a0] sm:$0xff]
        %v2120 = vld [vmem:[%s664 + $0x5a8] sm:$0xff]
        %v2121 = vld [vmem:[%s664 + $0x5b0] sm:$0xff]
        %v2122 = vld [vmem:[%s664 + $0x5b8] sm:$0xff]
        %v2123 = vld [vmem:[%s664 + $0x5c0] sm:$0xff]
        %v2124 = vld [vmem:[%s664 + $0x5c8] sm:$0xff]
        %v2125 = vld [vmem:[%s664 + $0x5d0] sm:$0xff]
        %v2126 = vld [vmem:[%s664 + $0x5d8] sm:$0xff]
        %v2127 = vld [vmem:[%s664 + $0x5e0] sm:$0xff]
        %v2128 = vld [vmem:[%s664 + $0x5e8] sm:$0xff]
        %v2129 = vld [vmem:[%s664 + $0x5f0] sm:$0xff]
        %v2130 = vld [vmem:[%s664 + $0x5f8] sm:$0xff]
        %v2131 = vld [vmem:[%s664 + $0x600] sm:$0xff]
        %v2132 = vld [vmem:[%s664 + $0x608] sm:$0xff]
        %v2133 = vld [vmem:[%s664 + $0x610] sm:$0xff]
        %v2134 = vld [vmem:[%s664 + $0x618] sm:$0xff]
        %v2135 = vld [vmem:[%s664 + $0x620] sm:$0xff]
        %v2136 = vld [vmem:[%s664 + $0x628] sm:$0xff]
        %v2137 = vld [vmem:[%s664 + $0x630] sm:$0xff]
        %v2138 = vld [vmem:[%s664 + $0x638] sm:$0xff]
        %v2139 = vld [vmem:[%s664 + $0x640] sm:$0xff]
        %v2140 = vld [vmem:[%s664 + $0x648] sm:$0xff]
        %v2141 = vld [vmem:[%s664 + $0x650] sm:$0xff]
        %v2142 = vld [vmem:[%s664 + $0x658] sm:$0xff]
        %v2143 = vld [vmem:[%s664 + $0x660] sm:$0xff]
        %v2144 = vld [vmem:[%s664 + $0x668] sm:$0xff]
        %v2145 = vld [vmem:[%s664 + $0x670] sm:$0xff]
        %v2146 = vld [vmem:[%s664 + $0x678] sm:$0xff]
        %v2147 = vld [vmem:[%s664 + $0x680] sm:$0xff]
        %v2148 = vld [vmem:[%s664 + $0x688] sm:$0xff]
        %v2149 = vld [vmem:[%s664 + $0x690] sm:$0xff]
        %v2150 = vld [vmem:[%s664 + $0x698] sm:$0xff]
        %v2151 = vld [vmem:[%s664 + $0x6a0] sm:$0xff]
        %v2152 = vld [vmem:[%s664 + $0x6a8] sm:$0xff]
        %v2153 = vld [vmem:[%s664 + $0x6b0] sm:$0xff]
        %v2154 = vld [vmem:[%s664 + $0x6b8] sm:$0xff]
        %v2155 = vld [vmem:[%s664 + $0x6c0] sm:$0xff]
        %v2156 = vld [vmem:[%s664 + $0x6c8] sm:$0xff]
        %v2157 = vld [vmem:[%s664 + $0x6d0] sm:$0xff]
        %v2158 = vld [vmem:[%s664 + $0x6d8] sm:$0xff]
        %v2159 = vld [vmem:[%s664 + $0x6e0] sm:$0xff]
        %v2160 = vld [vmem:[%s664 + $0x6e8] sm:$0xff]
        %v2161 = vld [vmem:[%s664 + $0x6f0] sm:$0xff]
        %v2162 = vld [vmem:[%s664 + $0x6f8] sm:$0xff]
        %v2163 = vld [vmem:[%s664 + $0x700] sm:$0xff]
        %v2164 = vld [vmem:[%s664 + $0x708] sm:$0xff]
        %v2165 = vld [vmem:[%s664 + $0x710] sm:$0xff]
        %v2166 = vld [vmem:[%s664 + $0x718] sm:$0xff]
        %v2167 = vld [vmem:[%s664 + $0x720] sm:$0xff]
        %v2168 = vld [vmem:[%s664 + $0x728] sm:$0xff]
        %v2169 = vld [vmem:[%s664 + $0x730] sm:$0xff]
        %v2170 = vld [vmem:[%s664 + $0x738] sm:$0xff]
        %v2171 = vld [vmem:[%s664 + $0x740] sm:$0xff]
        %v2172 = vld [vmem:[%s664 + $0x748] sm:$0xff]
        %v2173 = vld [vmem:[%s664 + $0x750] sm:$0xff]
        %v2174 = vld [vmem:[%s664 + $0x758] sm:$0xff]
        %v2175 = vld [vmem:[%s664 + $0x760] sm:$0xff]
        %v2176 = vld [vmem:[%s664 + $0x768] sm:$0xff]
        %v2177 = vld [vmem:[%s664 + $0x770] sm:$0xff]
        %v2178 = vld [vmem:[%s664 + $0x778] sm:$0xff]
        %v2179 = vld [vmem:[%s664 + $0x780] sm:$0xff]
        %v2180 = vld [vmem:[%s664 + $0x788] sm:$0xff]
        %v2181 = vld [vmem:[%s664 + $0x790] sm:$0xff]
        %v2182 = vld [vmem:[%s664 + $0x798] sm:$0xff]
        %v2183 = vld [vmem:[%s664 + $0x7a0] sm:$0xff]
        %v2184 = vld [vmem:[%s664 + $0x7a8] sm:$0xff]
        %v2185 = vld [vmem:[%s664 + $0x7b0] sm:$0xff]
        %v2186 = vld [vmem:[%s664 + $0x7b8] sm:$0xff]
        %v2187 = vld [vmem:[%s664 + $0x7c0] sm:$0xff]
        %v2188 = vld [vmem:[%s664 + $0x7c8] sm:$0xff]
        %v2189 = vld [vmem:[%s664 + $0x7d0] sm:$0xff]
        %v2190 = vld [vmem:[%s664 + $0x7d8] sm:$0xff]
        %v2191 = vld [vmem:[%s664 + $0x7e0] sm:$0xff]
        %v2192 = vld [vmem:[%s664 + $0x7e8] sm:$0xff]
        %v2193 = vld [vmem:[%s664 + $0x7f0] sm:$0xff]
        %v2194 = vld [vmem:[%s664 + $0x7f8] sm:$0xff]
        %v2197 = vunpack.c.l.b16 %v1937
        %v2198 = vunpack.c.h.b16 %v1937
        %v2199 = vunpack.c.l.b16 %v1938
        %v2200 = vunpack.c.h.b16 %v1938
        %v2201 = vpack.c.b16 %v2197, %v2197
        %v2202 = vpack.c.b16 %v2198, %v2198
        %v2203 = vpack.c.b16 %v2199, %v2199
        %v2204 = vpack.c.b16 %v2200, %v2200
        %v2465 = vunpack.c.l.b16 %v1939
        %v2466 = vunpack.c.h.b16 %v1939
        %v2467 = vunpack.c.l.b16 %v1940
        %v2468 = vunpack.c.h.b16 %v1940
        %v2469 = vunpack.c.l.b16 %v1941
        %v2470 = vunpack.c.h.b16 %v1941
        %v2471 = vunpack.c.l.b16 %v1942
        %v2472 = vunpack.c.h.b16 %v1942
        %v2473 = vunpack.c.l.b16 %v1943
        %v2474 = vunpack.c.h.b16 %v1943
        %v2475 = vunpack.c.l.b16 %v1944
        %v2476 = vunpack.c.h.b16 %v1944
        %v2477 = vunpack.c.l.b16 %v1945
        %v2478 = vunpack.c.h.b16 %v1945
        %v2479 = vunpack.c.l.b16 %v1946
        %v2480 = vunpack.c.h.b16 %v1946
        %v2481 = vunpack.c.l.b16 %v1947
        %v2482 = vunpack.c.h.b16 %v1947
        %v2483 = vunpack.c.l.b16 %v1948
        %v2484 = vunpack.c.h.b16 %v1948
        %v2485 = vunpack.c.l.b16 %v1949
        %v2486 = vunpack.c.h.b16 %v1949
        %v2487 = vunpack.c.l.b16 %v1950
        %v2488 = vunpack.c.h.b16 %v1950
        %v2489 = vunpack.c.l.b16 %v1951
        %v2490 = vunpack.c.h.b16 %v1951
        %v2491 = vunpack.c.l.b16 %v1952
        %v2492 = vunpack.c.h.b16 %v1952
        %v2493 = vunpack.c.l.b16 %v1953
        %v2494 = vunpack.c.h.b16 %v1953
        %v2495 = vunpack.c.l.b16 %v1954
        %v2496 = vunpack.c.h.b16 %v1954
        %v2497 = vunpack.c.l.b16 %v1955
        %v2498 = vunpack.c.h.b16 %v1955
        %v2499 = vunpack.c.l.b16 %v1956
        %v2500 = vunpack.c.h.b16 %v1956
        %v2501 = vunpack.c.l.b16 %v1957
        %v2502 = vunpack.c.h.b16 %v1957
        %v2503 = vunpack.c.l.b16 %v1958
        %v2504 = vunpack.c.h.b16 %v1958
        %v2505 = vunpack.c.l.b16 %v1959
        %v2506 = vunpack.c.h.b16 %v1959
        %v2507 = vunpack.c.l.b16 %v1960
        %v2508 = vunpack.c.h.b16 %v1960
        %v2509 = vunpack.c.l.b16 %v1961
        %v2510 = vunpack.c.h.b16 %v1961
        %v2511 = vunpack.c.l.b16 %v1962
        %v2512 = vunpack.c.h.b16 %v1962
        %v2513 = vunpack.c.l.b16 %v1963
        %v2514 = vunpack.c.h.b16 %v1963
        %v2515 = vunpack.c.l.b16 %v1964
        %v2516 = vunpack.c.h.b16 %v1964
        %v2517 = vunpack.c.l.b16 %v1965
        %v2518 = vunpack.c.h.b16 %v1965
        %v2519 = vunpack.c.l.b16 %v1966
        %v2520 = vunpack.c.h.b16 %v1966
        %v2521 = vunpack.c.l.b16 %v1967
        %v2522 = vunpack.c.h.b16 %v1967
        %v2523 = vunpack.c.l.b16 %v1968
        %v2524 = vunpack.c.h.b16 %v1968
        %v2525 = vunpack.c.l.b16 %v1969
        %v2526 = vunpack.c.h.b16 %v1969
        %v2527 = vunpack.c.l.b16 %v1970
        %v2528 = vunpack.c.h.b16 %v1970
        %v2529 = vunpack.c.l.b16 %v1971
        %v2530 = vunpack.c.h.b16 %v1971
        %v2531 = vunpack.c.l.b16 %v1972
        %v2532 = vunpack.c.h.b16 %v1972
        %v2533 = vunpack.c.l.b16 %v1973
        %v2534 = vunpack.c.h.b16 %v1973
        %v2535 = vunpack.c.l.b16 %v1974
        %v2536 = vunpack.c.h.b16 %v1974
        %v2537 = vunpack.c.l.b16 %v1975
        %v2538 = vunpack.c.h.b16 %v1975
        %v2539 = vunpack.c.l.b16 %v1976
        %v2540 = vunpack.c.h.b16 %v1976
        %v2541 = vunpack.c.l.b16 %v1977
        %v2542 = vunpack.c.h.b16 %v1977
        %v2543 = vunpack.c.l.b16 %v1978
        %v2544 = vunpack.c.h.b16 %v1978
        %v2545 = vunpack.c.l.b16 %v1979
        %v2546 = vunpack.c.h.b16 %v1979
        %v2547 = vunpack.c.l.b16 %v1980
        %v2548 = vunpack.c.h.b16 %v1980
        %v2549 = vunpack.c.l.b16 %v1981
        %v2550 = vunpack.c.h.b16 %v1981
        %v2551 = vunpack.c.l.b16 %v1982
        %v2552 = vunpack.c.h.b16 %v1982
        %v2553 = vunpack.c.l.b16 %v1983
        %v2554 = vunpack.c.h.b16 %v1983
        %v2555 = vunpack.c.l.b16 %v1984
        %v2556 = vunpack.c.h.b16 %v1984
        %v2557 = vunpack.c.l.b16 %v1985
        %v2558 = vunpack.c.h.b16 %v1985
        %v2559 = vunpack.c.l.b16 %v1986
        %v2560 = vunpack.c.h.b16 %v1986
        %v2561 = vunpack.c.l.b16 %v1987
        %v2562 = vunpack.c.h.b16 %v1987
        %v2563 = vunpack.c.l.b16 %v1988
        %v2564 = vunpack.c.h.b16 %v1988
        %v2565 = vunpack.c.l.b16 %v1989
        %v2566 = vunpack.c.h.b16 %v1989
        %v2567 = vunpack.c.l.b16 %v1990
        %v2568 = vunpack.c.h.b16 %v1990
        %v2569 = vunpack.c.l.b16 %v1991
        %v2570 = vunpack.c.h.b16 %v1991
        %v2571 = vunpack.c.l.b16 %v1992
        %v2572 = vunpack.c.h.b16 %v1992
        %v2573 = vunpack.c.l.b16 %v1993
        %v2574 = vunpack.c.h.b16 %v1993
        %v2575 = vunpack.c.l.b16 %v1994
        %v2576 = vunpack.c.h.b16 %v1994
        %v2577 = vunpack.c.l.b16 %v1995
        %v2578 = vunpack.c.h.b16 %v1995
        %v2579 = vunpack.c.l.b16 %v1996
        %v2580 = vunpack.c.h.b16 %v1996
        %v2581 = vunpack.c.l.b16 %v1997
        %v2582 = vunpack.c.h.b16 %v1997
        %v2583 = vunpack.c.l.b16 %v1998
        %v2584 = vunpack.c.h.b16 %v1998
        %v2585 = vunpack.c.l.b16 %v1999
        %v2586 = vunpack.c.h.b16 %v1999
        %v2587 = vunpack.c.l.b16 %v2000
        %v2588 = vunpack.c.h.b16 %v2000
        %v2589 = vunpack.c.l.b16 %v2001
        %v2590 = vunpack.c.h.b16 %v2001
        %v2591 = vunpack.c.l.b16 %v2002
        %v2592 = vunpack.c.h.b16 %v2002
        %v2593 = vunpack.c.l.b16 %v2003
        %v2594 = vunpack.c.h.b16 %v2003
        %v2595 = vunpack.c.l.b16 %v2004
        %v2596 = vunpack.c.h.b16 %v2004
        %v2597 = vunpack.c.l.b16 %v2005
        %v2598 = vunpack.c.h.b16 %v2005
        %v2599 = vunpack.c.l.b16 %v2006
        %v2600 = vunpack.c.h.b16 %v2006
        %v2601 = vunpack.c.l.b16 %v2007
        %v2602 = vunpack.c.h.b16 %v2007
        %v2603 = vunpack.c.l.b16 %v2008
        %v2604 = vunpack.c.h.b16 %v2008
        %v2605 = vunpack.c.l.b16 %v2009
        %v2606 = vunpack.c.h.b16 %v2009
        %v2607 = vunpack.c.l.b16 %v2010
        %v2608 = vunpack.c.h.b16 %v2010
        %v2609 = vunpack.c.l.b16 %v2011
        %v2610 = vunpack.c.h.b16 %v2011
        %v2611 = vunpack.c.l.b16 %v2012
        %v2612 = vunpack.c.h.b16 %v2012
        %v2613 = vunpack.c.l.b16 %v2013
        %v2614 = vunpack.c.h.b16 %v2013
        %v2615 = vunpack.c.l.b16 %v2014
        %v2616 = vunpack.c.h.b16 %v2014
        %v2617 = vunpack.c.l.b16 %v2015
        %v2618 = vunpack.c.h.b16 %v2015
        %v2619 = vunpack.c.l.b16 %v2016
        %v2620 = vunpack.c.h.b16 %v2016
        %v2621 = vunpack.c.l.b16 %v2017
        %v2622 = vunpack.c.h.b16 %v2017
        %v2623 = vunpack.c.l.b16 %v2018
        %v2624 = vunpack.c.h.b16 %v2018
        %v2625 = vunpack.c.l.b16 %v2019
        %v2626 = vunpack.c.h.b16 %v2019
        %v2627 = vunpack.c.l.b16 %v2020
        %v2628 = vunpack.c.h.b16 %v2020
        %v2629 = vunpack.c.l.b16 %v2021
        %v2630 = vunpack.c.h.b16 %v2021
        %v2631 = vunpack.c.l.b16 %v2022
        %v2632 = vunpack.c.h.b16 %v2022
        %v2633 = vunpack.c.l.b16 %v2023
        %v2634 = vunpack.c.h.b16 %v2023
        %v2635 = vunpack.c.l.b16 %v2024
        %v2636 = vunpack.c.h.b16 %v2024
        %v2637 = vunpack.c.l.b16 %v2025
        %v2638 = vunpack.c.h.b16 %v2025
        %v2639 = vunpack.c.l.b16 %v2026
        %v2640 = vunpack.c.h.b16 %v2026
        %v2641 = vunpack.c.l.b16 %v2027
        %v2642 = vunpack.c.h.b16 %v2027
        %v2643 = vunpack.c.l.b16 %v2028
        %v2644 = vunpack.c.h.b16 %v2028
        %v2645 = vunpack.c.l.b16 %v2029
        %v2646 = vunpack.c.h.b16 %v2029
        %v2647 = vunpack.c.l.b16 %v2030
        %v2648 = vunpack.c.h.b16 %v2030
        %v2649 = vunpack.c.l.b16 %v2031
        %v2650 = vunpack.c.h.b16 %v2031
        %v2651 = vunpack.c.l.b16 %v2032
        %v2652 = vunpack.c.h.b16 %v2032
        %v2653 = vunpack.c.l.b16 %v2033
        %v2654 = vunpack.c.h.b16 %v2033
        %v2655 = vunpack.c.l.b16 %v2034
        %v2656 = vunpack.c.h.b16 %v2034
        %v2657 = vunpack.c.l.b16 %v2035
        %v2658 = vunpack.c.h.b16 %v2035
        %v2659 = vunpack.c.l.b16 %v2036
        %v2660 = vunpack.c.h.b16 %v2036
        %v2661 = vunpack.c.l.b16 %v2037
        %v2662 = vunpack.c.h.b16 %v2037
        %v2663 = vunpack.c.l.b16 %v2038
        %v2664 = vunpack.c.h.b16 %v2038
        %v2665 = vunpack.c.l.b16 %v2039
        %v2666 = vunpack.c.h.b16 %v2039
        %v2667 = vunpack.c.l.b16 %v2040
        %v2668 = vunpack.c.h.b16 %v2040
        %v2669 = vunpack.c.l.b16 %v2041
        %v2670 = vunpack.c.h.b16 %v2041
        %v2671 = vunpack.c.l.b16 %v2042
        %v2672 = vunpack.c.h.b16 %v2042
        %v2673 = vunpack.c.l.b16 %v2043
        %v2674 = vunpack.c.h.b16 %v2043
        %v2675 = vunpack.c.l.b16 %v2044
        %v2676 = vunpack.c.h.b16 %v2044
        %v2677 = vunpack.c.l.b16 %v2045
        %v2678 = vunpack.c.h.b16 %v2045
        %v2679 = vunpack.c.l.b16 %v2046
        %v2680 = vunpack.c.h.b16 %v2046
        %v2681 = vunpack.c.l.b16 %v2047
        %v2682 = vunpack.c.h.b16 %v2047
        %v2683 = vunpack.c.l.b16 %v2048
        %v2684 = vunpack.c.h.b16 %v2048
        %v2685 = vunpack.c.l.b16 %v2049
        %v2686 = vunpack.c.h.b16 %v2049
        %v2687 = vunpack.c.l.b16 %v2050
        %v2688 = vunpack.c.h.b16 %v2050
        %v2689 = vunpack.c.l.b16 %v2051
        %v2690 = vunpack.c.h.b16 %v2051
        %v2691 = vunpack.c.l.b16 %v2052
        %v2692 = vunpack.c.h.b16 %v2052
        %v2693 = vunpack.c.l.b16 %v2053
        %v2694 = vunpack.c.h.b16 %v2053
        %v2695 = vunpack.c.l.b16 %v2054
        %v2696 = vunpack.c.h.b16 %v2054
        %v2697 = vunpack.c.l.b16 %v2055
        %v2698 = vunpack.c.h.b16 %v2055
        %v2699 = vunpack.c.l.b16 %v2056
        %v2700 = vunpack.c.h.b16 %v2056
        %v2701 = vunpack.c.l.b16 %v2057
        %v2702 = vunpack.c.h.b16 %v2057
        %v2703 = vunpack.c.l.b16 %v2058
        %v2704 = vunpack.c.h.b16 %v2058
        %v2705 = vunpack.c.l.b16 %v2059
        %v2706 = vunpack.c.h.b16 %v2059
        %v2707 = vunpack.c.l.b16 %v2060
        %v2708 = vunpack.c.h.b16 %v2060
        %v2709 = vunpack.c.l.b16 %v2061
        %v2710 = vunpack.c.h.b16 %v2061
        %v2711 = vunpack.c.l.b16 %v2062
        %v2712 = vunpack.c.h.b16 %v2062
        %v2713 = vunpack.c.l.b16 %v2063
        %v2714 = vunpack.c.h.b16 %v2063
        %v2715 = vunpack.c.l.b16 %v2064
        %v2716 = vunpack.c.h.b16 %v2064
        %v2717 = vunpack.c.l.b16 %v2065
        %v2718 = vunpack.c.h.b16 %v2065
        %v2719 = vunpack.c.l.b16 %v2066
        %v2720 = vunpack.c.h.b16 %v2066
        %v2721 = vunpack.c.l.b16 %v2067
        %v2722 = vunpack.c.h.b16 %v2067
        %v2723 = vunpack.c.l.b16 %v2068
        %v2724 = vunpack.c.h.b16 %v2068
        %v2725 = vunpack.c.l.b16 %v2069
        %v2726 = vunpack.c.h.b16 %v2069
        %v2727 = vunpack.c.l.b16 %v2070
        %v2728 = vunpack.c.h.b16 %v2070
        %v2729 = vunpack.c.l.b16 %v2071
        %v2730 = vunpack.c.h.b16 %v2071
        %v2731 = vunpack.c.l.b16 %v2072
        %v2732 = vunpack.c.h.b16 %v2072
        %v2733 = vunpack.c.l.b16 %v2073
        %v2734 = vunpack.c.h.b16 %v2073
        %v2735 = vunpack.c.l.b16 %v2074
        %v2736 = vunpack.c.h.b16 %v2074
        %v2737 = vunpack.c.l.b16 %v2075
        %v2738 = vunpack.c.h.b16 %v2075
        %v2739 = vunpack.c.l.b16 %v2076
        %v2740 = vunpack.c.h.b16 %v2076
        %v2741 = vunpack.c.l.b16 %v2077
        %v2742 = vunpack.c.h.b16 %v2077
        %v2743 = vunpack.c.l.b16 %v2078
        %v2744 = vunpack.c.h.b16 %v2078
        %v2745 = vunpack.c.l.b16 %v2079
        %v2746 = vunpack.c.h.b16 %v2079
        %v2747 = vunpack.c.l.b16 %v2080
        %v2748 = vunpack.c.h.b16 %v2080
        %v2749 = vunpack.c.l.b16 %v2081
        %v2750 = vunpack.c.h.b16 %v2081
        %v2751 = vunpack.c.l.b16 %v2082
        %v2752 = vunpack.c.h.b16 %v2082
        %v2753 = vunpack.c.l.b16 %v2083
        %v2754 = vunpack.c.h.b16 %v2083
        %v2755 = vunpack.c.l.b16 %v2084
        %v2756 = vunpack.c.h.b16 %v2084
        %v2757 = vunpack.c.l.b16 %v2085
        %v2758 = vunpack.c.h.b16 %v2085
        %v2759 = vunpack.c.l.b16 %v2086
        %v2760 = vunpack.c.h.b16 %v2086
        %v2761 = vunpack.c.l.b16 %v2087
        %v2762 = vunpack.c.h.b16 %v2087
        %v2763 = vunpack.c.l.b16 %v2088
        %v2764 = vunpack.c.h.b16 %v2088
        %v2765 = vunpack.c.l.b16 %v2089
        %v2766 = vunpack.c.h.b16 %v2089
        %v2767 = vunpack.c.l.b16 %v2090
        %v2768 = vunpack.c.h.b16 %v2090
        %v2769 = vunpack.c.l.b16 %v2091
        %v2770 = vunpack.c.h.b16 %v2091
        %v2771 = vunpack.c.l.b16 %v2092
        %v2772 = vunpack.c.h.b16 %v2092
        %v2773 = vunpack.c.l.b16 %v2093
        %v2774 = vunpack.c.h.b16 %v2093
        %v2775 = vunpack.c.l.b16 %v2094
        %v2776 = vunpack.c.h.b16 %v2094
        %v2777 = vunpack.c.l.b16 %v2095
        %v2778 = vunpack.c.h.b16 %v2095
        %v2779 = vunpack.c.l.b16 %v2096
        %v2780 = vunpack.c.h.b16 %v2096
        %v2781 = vunpack.c.l.b16 %v2097
        %v2782 = vunpack.c.h.b16 %v2097
        %v2783 = vunpack.c.l.b16 %v2098
        %v2784 = vunpack.c.h.b16 %v2098
        %v2785 = vunpack.c.l.b16 %v2099
        %v2786 = vunpack.c.h.b16 %v2099
        %v2787 = vunpack.c.l.b16 %v2100
        %v2788 = vunpack.c.h.b16 %v2100
        %v2789 = vunpack.c.l.b16 %v2101
        %v2790 = vunpack.c.h.b16 %v2101
        %v2791 = vunpack.c.l.b16 %v2102
        %v2792 = vunpack.c.h.b16 %v2102
        %v2793 = vunpack.c.l.b16 %v2103
        %v2794 = vunpack.c.h.b16 %v2103
        %v2795 = vunpack.c.l.b16 %v2104
        %v2796 = vunpack.c.h.b16 %v2104
        %v2797 = vunpack.c.l.b16 %v2105
        %v2798 = vunpack.c.h.b16 %v2105
        %v2799 = vunpack.c.l.b16 %v2106
        %v2800 = vunpack.c.h.b16 %v2106
        %v2801 = vunpack.c.l.b16 %v2107
        %v2802 = vunpack.c.h.b16 %v2107
        %v2803 = vunpack.c.l.b16 %v2108
        %v2804 = vunpack.c.h.b16 %v2108
        %v2805 = vunpack.c.l.b16 %v2109
        %v2806 = vunpack.c.h.b16 %v2109
        %v2807 = vunpack.c.l.b16 %v2110
        %v2808 = vunpack.c.h.b16 %v2110
        %v2809 = vunpack.c.l.b16 %v2111
        %v2810 = vunpack.c.h.b16 %v2111
        %v2811 = vunpack.c.l.b16 %v2112
        %v2812 = vunpack.c.h.b16 %v2112
        %v2813 = vunpack.c.l.b16 %v2113
        %v2814 = vunpack.c.h.b16 %v2113
        %v2815 = vunpack.c.l.b16 %v2114
        %v2816 = vunpack.c.h.b16 %v2114
        %v2817 = vunpack.c.l.b16 %v2115
        %v2818 = vunpack.c.h.b16 %v2115
        %v2819 = vunpack.c.l.b16 %v2116
        %v2820 = vunpack.c.h.b16 %v2116
        %v2821 = vunpack.c.l.b16 %v2117
        %v2822 = vunpack.c.h.b16 %v2117
        %v2823 = vunpack.c.l.b16 %v2118
        %v2824 = vunpack.c.h.b16 %v2118
        %v2825 = vunpack.c.l.b16 %v2119
        %v2826 = vunpack.c.h.b16 %v2119
        %v2827 = vunpack.c.l.b16 %v2120
        %v2828 = vunpack.c.h.b16 %v2120
        %v2829 = vunpack.c.l.b16 %v2121
        %v2830 = vunpack.c.h.b16 %v2121
        %v2831 = vunpack.c.l.b16 %v2122
        %v2832 = vunpack.c.h.b16 %v2122
        %v2833 = vunpack.c.l.b16 %v2123
        %v2834 = vunpack.c.h.b16 %v2123
        %v2835 = vunpack.c.l.b16 %v2124
        %v2836 = vunpack.c.h.b16 %v2124
        %v2837 = vunpack.c.l.b16 %v2125
        %v2838 = vunpack.c.h.b16 %v2125
        %v2839 = vunpack.c.l.b16 %v2126
        %v2840 = vunpack.c.h.b16 %v2126
        %v2841 = vunpack.c.l.b16 %v2127
        %v2842 = vunpack.c.h.b16 %v2127
        %v2843 = vunpack.c.l.b16 %v2128
        %v2844 = vunpack.c.h.b16 %v2128
        %v2845 = vunpack.c.l.b16 %v2129
        %v2846 = vunpack.c.h.b16 %v2129
        %v2847 = vunpack.c.l.b16 %v2130
        %v2848 = vunpack.c.h.b16 %v2130
        %v2849 = vunpack.c.l.b16 %v2131
        %v2850 = vunpack.c.h.b16 %v2131
        %v2851 = vunpack.c.l.b16 %v2132
        %v2852 = vunpack.c.h.b16 %v2132
        %v2853 = vunpack.c.l.b16 %v2133
        %v2854 = vunpack.c.h.b16 %v2133
        %v2855 = vunpack.c.l.b16 %v2134
        %v2856 = vunpack.c.h.b16 %v2134
        %v2857 = vunpack.c.l.b16 %v2135
        %v2858 = vunpack.c.h.b16 %v2135
        %v2859 = vunpack.c.l.b16 %v2136
        %v2860 = vunpack.c.h.b16 %v2136
        %v2861 = vunpack.c.l.b16 %v2137
        %v2862 = vunpack.c.h.b16 %v2137
        %v2863 = vunpack.c.l.b16 %v2138
        %v2864 = vunpack.c.h.b16 %v2138
        %v2865 = vunpack.c.l.b16 %v2139
        %v2866 = vunpack.c.h.b16 %v2139
        %v2867 = vunpack.c.l.b16 %v2140
        %v2868 = vunpack.c.h.b16 %v2140
        %v2869 = vunpack.c.l.b16 %v2141
        %v2870 = vunpack.c.h.b16 %v2141
        %v2871 = vunpack.c.l.b16 %v2142
        %v2872 = vunpack.c.h.b16 %v2142
        %v2873 = vunpack.c.l.b16 %v2143
        %v2874 = vunpack.c.h.b16 %v2143
        %v2875 = vunpack.c.l.b16 %v2144
        %v2876 = vunpack.c.h.b16 %v2144
        %v2877 = vunpack.c.l.b16 %v2145
        %v2878 = vunpack.c.h.b16 %v2145
        %v2879 = vunpack.c.l.b16 %v2146
        %v2880 = vunpack.c.h.b16 %v2146
        %v2881 = vunpack.c.l.b16 %v2147
        %v2882 = vunpack.c.h.b16 %v2147
        %v2883 = vunpack.c.l.b16 %v2148
        %v2884 = vunpack.c.h.b16 %v2148
        %v2885 = vunpack.c.l.b16 %v2149
        %v2886 = vunpack.c.h.b16 %v2149
        %v2887 = vunpack.c.l.b16 %v2150
        %v2888 = vunpack.c.h.b16 %v2150
        %v2889 = vunpack.c.l.b16 %v2151
        %v2890 = vunpack.c.h.b16 %v2151
        %v2891 = vunpack.c.l.b16 %v2152
        %v2892 = vunpack.c.h.b16 %v2152
        %v2893 = vunpack.c.l.b16 %v2153
        %v2894 = vunpack.c.h.b16 %v2153
        %v2895 = vunpack.c.l.b16 %v2154
        %v2896 = vunpack.c.h.b16 %v2154
        %v2897 = vunpack.c.l.b16 %v2155
        %v2898 = vunpack.c.h.b16 %v2155
        %v2899 = vunpack.c.l.b16 %v2156
        %v2900 = vunpack.c.h.b16 %v2156
        %v2901 = vunpack.c.l.b16 %v2157
        %v2902 = vunpack.c.h.b16 %v2157
        %v2903 = vunpack.c.l.b16 %v2158
        %v2904 = vunpack.c.h.b16 %v2158
        %v2905 = vunpack.c.l.b16 %v2159
        %v2906 = vunpack.c.h.b16 %v2159
        %v2907 = vunpack.c.l.b16 %v2160
        %v2908 = vunpack.c.h.b16 %v2160
        %v2909 = vunpack.c.l.b16 %v2161
        %v2910 = vunpack.c.h.b16 %v2161
        %v2911 = vunpack.c.l.b16 %v2162
        %v2912 = vunpack.c.h.b16 %v2162
        %v2913 = vunpack.c.l.b16 %v2163
        %v2914 = vunpack.c.h.b16 %v2163
        %v2915 = vunpack.c.l.b16 %v2164
        %v2916 = vunpack.c.h.b16 %v2164
        %v2917 = vunpack.c.l.b16 %v2165
        %v2918 = vunpack.c.h.b16 %v2165
        %v2919 = vunpack.c.l.b16 %v2166
        %v2920 = vunpack.c.h.b16 %v2166
        %v2921 = vunpack.c.l.b16 %v2167
        %v2922 = vunpack.c.h.b16 %v2167
        %v2923 = vunpack.c.l.b16 %v2168
        %v2924 = vunpack.c.h.b16 %v2168
        %v2925 = vunpack.c.l.b16 %v2169
        %v2926 = vunpack.c.h.b16 %v2169
        %v2927 = vunpack.c.l.b16 %v2170
        %v2928 = vunpack.c.h.b16 %v2170
        %v2929 = vunpack.c.l.b16 %v2171
        %v2930 = vunpack.c.h.b16 %v2171
        %v2931 = vunpack.c.l.b16 %v2172
        %v2932 = vunpack.c.h.b16 %v2172
        %v2933 = vunpack.c.l.b16 %v2173
        %v2934 = vunpack.c.h.b16 %v2173
        %v2935 = vunpack.c.l.b16 %v2174
        %v2936 = vunpack.c.h.b16 %v2174
        %v2937 = vunpack.c.l.b16 %v2175
        %v2938 = vunpack.c.h.b16 %v2175
        %v2939 = vunpack.c.l.b16 %v2176
        %v2940 = vunpack.c.h.b16 %v2176
        %v2941 = vunpack.c.l.b16 %v2177
        %v2942 = vunpack.c.h.b16 %v2177
        %v2943 = vunpack.c.l.b16 %v2178
        %v2944 = vunpack.c.h.b16 %v2178
        %v2945 = vunpack.c.l.b16 %v2179
        %v2946 = vunpack.c.h.b16 %v2179
        %v2947 = vunpack.c.l.b16 %v2180
        %v2948 = vunpack.c.h.b16 %v2180
        %v2949 = vunpack.c.l.b16 %v2181
        %v2950 = vunpack.c.h.b16 %v2181
        %v2951 = vunpack.c.l.b16 %v2182
        %v2952 = vunpack.c.h.b16 %v2182
        %v2953 = vunpack.c.l.b16 %v2183
        %v2954 = vunpack.c.h.b16 %v2183
        %v2955 = vunpack.c.l.b16 %v2184
        %v2956 = vunpack.c.h.b16 %v2184
        %v2957 = vunpack.c.l.b16 %v2185
        %v2958 = vunpack.c.h.b16 %v2185
        %v2959 = vunpack.c.l.b16 %v2186
        %v2960 = vunpack.c.h.b16 %v2186
        %v2961 = vunpack.c.l.b16 %v2187
        %v2962 = vunpack.c.h.b16 %v2187
        %v2963 = vunpack.c.l.b16 %v2188
        %v2964 = vunpack.c.h.b16 %v2188
        %v2965 = vunpack.c.l.b16 %v2189
        %v2966 = vunpack.c.h.b16 %v2189
        %v2967 = vunpack.c.l.b16 %v2190
        %v2968 = vunpack.c.h.b16 %v2190
        %v2969 = vunpack.c.l.b16 %v2191
        %v2970 = vunpack.c.h.b16 %v2191
        %v2971 = vunpack.c.l.b16 %v2192
        %v2972 = vunpack.c.h.b16 %v2192
        %v2973 = vunpack.c.l.b16 %v2193
        %v2974 = vunpack.c.h.b16 %v2193
        %v2975 = vunpack.c.l.b16 %v2194
        %v2976 = vunpack.c.h.b16 %v2194
        %v2977 = vpack.c.b16 %v2473, %v2465
        %v2978 = vpack.c.b16 %v2474, %v2466
        %v2979 = vpack.c.b16 %v2475, %v2467
        %v2980 = vpack.c.b16 %v2476, %v2468
        %v2981 = vpack.c.b16 %v2477, %v2469
        %v2982 = vpack.c.b16 %v2478, %v2470
        %v2983 = vpack.c.b16 %v2479, %v2471
        %v2984 = vpack.c.b16 %v2480, %v2472
        %v2985 = vpack.c.b16 %v2489, %v2481
        %v2986 = vpack.c.b16 %v2490, %v2482
        %v2987 = vpack.c.b16 %v2491, %v2483
        %v2988 = vpack.c.b16 %v2492, %v2484
        %v2989 = vpack.c.b16 %v2493, %v2485
        %v2990 = vpack.c.b16 %v2494, %v2486
        %v2991 = vpack.c.b16 %v2495, %v2487
        %v2992 = vpack.c.b16 %v2496, %v2488
        %v2993 = vpack.c.b16 %v2505, %v2497
        %v2994 = vpack.c.b16 %v2506, %v2498
        %v2995 = vpack.c.b16 %v2507, %v2499
        %v2996 = vpack.c.b16 %v2508, %v2500
        %v2997 = vpack.c.b16 %v2509, %v2501
        %v2998 = vpack.c.b16 %v2510, %v2502
        %v2999 = vpack.c.b16 %v2511, %v2503
        %v3000 = vpack.c.b16 %v2512, %v2504
        %v3001 = vpack.c.b16 %v2521, %v2513
        %v3002 = vpack.c.b16 %v2522, %v2514
        %v3003 = vpack.c.b16 %v2523, %v2515
        %v3004 = vpack.c.b16 %v2524, %v2516
        %v3005 = vpack.c.b16 %v2525, %v2517
        %v3006 = vpack.c.b16 %v2526, %v2518
        %v3007 = vpack.c.b16 %v2527, %v2519
        %v3008 = vpack.c.b16 %v2528, %v2520
        %v3009 = vpack.c.b16 %v2537, %v2529
        %v3010 = vpack.c.b16 %v2538, %v2530
        %v3011 = vpack.c.b16 %v2539, %v2531
        %v3012 = vpack.c.b16 %v2540, %v2532
        %v3013 = vpack.c.b16 %v2541, %v2533
        %v3014 = vpack.c.b16 %v2542, %v2534
        %v3015 = vpack.c.b16 %v2543, %v2535
        %v3016 = vpack.c.b16 %v2544, %v2536
        %v3017 = vpack.c.b16 %v2553, %v2545
        %v3018 = vpack.c.b16 %v2554, %v2546
        %v3019 = vpack.c.b16 %v2555, %v2547
        %v3020 = vpack.c.b16 %v2556, %v2548
        %v3021 = vpack.c.b16 %v2557, %v2549
        %v3022 = vpack.c.b16 %v2558, %v2550
        %v3023 = vpack.c.b16 %v2559, %v2551
        %v3024 = vpack.c.b16 %v2560, %v2552
        %v3025 = vpack.c.b16 %v2569, %v2561
        %v3026 = vpack.c.b16 %v2570, %v2562
        %v3027 = vpack.c.b16 %v2571, %v2563
        %v3028 = vpack.c.b16 %v2572, %v2564
        %v3029 = vpack.c.b16 %v2573, %v2565
        %v3030 = vpack.c.b16 %v2574, %v2566
        %v3031 = vpack.c.b16 %v2575, %v2567
        %v3032 = vpack.c.b16 %v2576, %v2568
        %v3033 = vpack.c.b16 %v2585, %v2577
        %v3034 = vpack.c.b16 %v2586, %v2578
        %v3035 = vpack.c.b16 %v2587, %v2579
        %v3036 = vpack.c.b16 %v2588, %v2580
        %v3037 = vpack.c.b16 %v2589, %v2581
        %v3038 = vpack.c.b16 %v2590, %v2582
        %v3039 = vpack.c.b16 %v2591, %v2583
        %v3040 = vpack.c.b16 %v2592, %v2584
        %v3041 = vpack.c.b16 %v2601, %v2593
        %v3042 = vpack.c.b16 %v2602, %v2594
        %v3043 = vpack.c.b16 %v2603, %v2595
        %v3044 = vpack.c.b16 %v2604, %v2596
        %v3045 = vpack.c.b16 %v2605, %v2597
        %v3046 = vpack.c.b16 %v2606, %v2598
        %v3047 = vpack.c.b16 %v2607, %v2599
        %v3048 = vpack.c.b16 %v2608, %v2600
        %v3049 = vpack.c.b16 %v2617, %v2609
        %v3050 = vpack.c.b16 %v2618, %v2610
        %v3051 = vpack.c.b16 %v2619, %v2611
        %v3052 = vpack.c.b16 %v2620, %v2612
        %v3053 = vpack.c.b16 %v2621, %v2613
        %v3054 = vpack.c.b16 %v2622, %v2614
        %v3055 = vpack.c.b16 %v2623, %v2615
        %v3056 = vpack.c.b16 %v2624, %v2616
        %v3057 = vpack.c.b16 %v2633, %v2625
        %v3058 = vpack.c.b16 %v2634, %v2626
        %v3059 = vpack.c.b16 %v2635, %v2627
        %v3060 = vpack.c.b16 %v2636, %v2628
        %v3061 = vpack.c.b16 %v2637, %v2629
        %v3062 = vpack.c.b16 %v2638, %v2630
        %v3063 = vpack.c.b16 %v2639, %v2631
        %v3064 = vpack.c.b16 %v2640, %v2632
        %v3065 = vpack.c.b16 %v2649, %v2641
        %v3066 = vpack.c.b16 %v2650, %v2642
        %v3067 = vpack.c.b16 %v2651, %v2643
        %v3068 = vpack.c.b16 %v2652, %v2644
        %v3069 = vpack.c.b16 %v2653, %v2645
        %v3070 = vpack.c.b16 %v2654, %v2646
        %v3071 = vpack.c.b16 %v2655, %v2647
        %v3072 = vpack.c.b16 %v2656, %v2648
        %v3073 = vpack.c.b16 %v2665, %v2657
        %v3074 = vpack.c.b16 %v2666, %v2658
        %v3075 = vpack.c.b16 %v2667, %v2659
        %v3076 = vpack.c.b16 %v2668, %v2660
        %v3077 = vpack.c.b16 %v2669, %v2661
        %v3078 = vpack.c.b16 %v2670, %v2662
        %v3079 = vpack.c.b16 %v2671, %v2663
        %v3080 = vpack.c.b16 %v2672, %v2664
        %v3081 = vpack.c.b16 %v2681, %v2673
        %v3082 = vpack.c.b16 %v2682, %v2674
        %v3083 = vpack.c.b16 %v2683, %v2675
        %v3084 = vpack.c.b16 %v2684, %v2676
        %v3085 = vpack.c.b16 %v2685, %v2677
        %v3086 = vpack.c.b16 %v2686, %v2678
        %v3087 = vpack.c.b16 %v2687, %v2679
        %v3088 = vpack.c.b16 %v2688, %v2680
        %v3089 = vpack.c.b16 %v2697, %v2689
        %v3090 = vpack.c.b16 %v2698, %v2690
        %v3091 = vpack.c.b16 %v2699, %v2691
        %v3092 = vpack.c.b16 %v2700, %v2692
        %v3093 = vpack.c.b16 %v2701, %v2693
        %v3094 = vpack.c.b16 %v2702, %v2694
        %v3095 = vpack.c.b16 %v2703, %v2695
        %v3096 = vpack.c.b16 %v2704, %v2696
        %v3097 = vpack.c.b16 %v2713, %v2705
        %v3098 = vpack.c.b16 %v2714, %v2706
        %v3099 = vpack.c.b16 %v2715, %v2707
        %v3100 = vpack.c.b16 %v2716, %v2708
        %v3101 = vpack.c.b16 %v2717, %v2709
        %v3102 = vpack.c.b16 %v2718, %v2710
        %v3103 = vpack.c.b16 %v2719, %v2711
        %v3104 = vpack.c.b16 %v2720, %v2712
        %v3105 = vpack.c.b16 %v2729, %v2721
        %v3106 = vpack.c.b16 %v2730, %v2722
        %v3107 = vpack.c.b16 %v2731, %v2723
        %v3108 = vpack.c.b16 %v2732, %v2724
        %v3109 = vpack.c.b16 %v2733, %v2725
        %v3110 = vpack.c.b16 %v2734, %v2726
        %v3111 = vpack.c.b16 %v2735, %v2727
        %v3112 = vpack.c.b16 %v2736, %v2728
        %v3113 = vpack.c.b16 %v2745, %v2737
        %v3114 = vpack.c.b16 %v2746, %v2738
        %v3115 = vpack.c.b16 %v2747, %v2739
        %v3116 = vpack.c.b16 %v2748, %v2740
        %v3117 = vpack.c.b16 %v2749, %v2741
        %v3118 = vpack.c.b16 %v2750, %v2742
        %v3119 = vpack.c.b16 %v2751, %v2743
        %v3120 = vpack.c.b16 %v2752, %v2744
        %v3121 = vpack.c.b16 %v2761, %v2753
        %v3122 = vpack.c.b16 %v2762, %v2754
        %v3123 = vpack.c.b16 %v2763, %v2755
        %v3124 = vpack.c.b16 %v2764, %v2756
        %v3125 = vpack.c.b16 %v2765, %v2757
        %v3126 = vpack.c.b16 %v2766, %v2758
        %v3127 = vpack.c.b16 %v2767, %v2759
        %v3128 = vpack.c.b16 %v2768, %v2760
        %v3129 = vpack.c.b16 %v2777, %v2769
        %v3130 = vpack.c.b16 %v2778, %v2770
        %v3131 = vpack.c.b16 %v2779, %v2771
        %v3132 = vpack.c.b16 %v2780, %v2772
        %v3133 = vpack.c.b16 %v2781, %v2773
        %v3134 = vpack.c.b16 %v2782, %v2774
        %v3135 = vpack.c.b16 %v2783, %v2775
        %v3136 = vpack.c.b16 %v2784, %v2776
        %v3137 = vpack.c.b16 %v2793, %v2785
        %v3138 = vpack.c.b16 %v2794, %v2786
        %v3139 = vpack.c.b16 %v2795, %v2787
        %v3140 = vpack.c.b16 %v2796, %v2788
        %v3141 = vpack.c.b16 %v2797, %v2789
        %v3142 = vpack.c.b16 %v2798, %v2790
        %v3143 = vpack.c.b16 %v2799, %v2791
        %v3144 = vpack.c.b16 %v2800, %v2792
        %v3145 = vpack.c.b16 %v2809, %v2801
        %v3146 = vpack.c.b16 %v2810, %v2802
        %v3147 = vpack.c.b16 %v2811, %v2803
        %v3148 = vpack.c.b16 %v2812, %v2804
        %v3149 = vpack.c.b16 %v2813, %v2805
        %v3150 = vpack.c.b16 %v2814, %v2806
        %v3151 = vpack.c.b16 %v2815, %v2807
        %v3152 = vpack.c.b16 %v2816, %v2808
        %v3153 = vpack.c.b16 %v2825, %v2817
        %v3154 = vpack.c.b16 %v2826, %v2818
        %v3155 = vpack.c.b16 %v2827, %v2819
        %v3156 = vpack.c.b16 %v2828, %v2820
        %v3157 = vpack.c.b16 %v2829, %v2821
        %v3158 = vpack.c.b16 %v2830, %v2822
        %v3159 = vpack.c.b16 %v2831, %v2823
        %v3160 = vpack.c.b16 %v2832, %v2824
        %v3161 = vpack.c.b16 %v2841, %v2833
        %v3162 = vpack.c.b16 %v2842, %v2834
        %v3163 = vpack.c.b16 %v2843, %v2835
        %v3164 = vpack.c.b16 %v2844, %v2836
        %v3165 = vpack.c.b16 %v2845, %v2837
        %v3166 = vpack.c.b16 %v2846, %v2838
        %v3167 = vpack.c.b16 %v2847, %v2839
        %v3168 = vpack.c.b16 %v2848, %v2840
        %v3169 = vpack.c.b16 %v2857, %v2849
        %v3170 = vpack.c.b16 %v2858, %v2850
        %v3171 = vpack.c.b16 %v2859, %v2851
        %v3172 = vpack.c.b16 %v2860, %v2852
        %v3173 = vpack.c.b16 %v2861, %v2853
        %v3174 = vpack.c.b16 %v2862, %v2854
        %v3175 = vpack.c.b16 %v2863, %v2855
        %v3176 = vpack.c.b16 %v2864, %v2856
        %v3177 = vpack.c.b16 %v2873, %v2865
        %v3178 = vpack.c.b16 %v2874, %v2866
        %v3179 = vpack.c.b16 %v2875, %v2867
        %v3180 = vpack.c.b16 %v2876, %v2868
        %v3181 = vpack.c.b16 %v2877, %v2869
        %v3182 = vpack.c.b16 %v2878, %v2870
        %v3183 = vpack.c.b16 %v2879, %v2871
        %v3184 = vpack.c.b16 %v2880, %v2872
        %v3185 = vpack.c.b16 %v2889, %v2881
        %v3186 = vpack.c.b16 %v2890, %v2882
        %v3187 = vpack.c.b16 %v2891, %v2883
        %v3188 = vpack.c.b16 %v2892, %v2884
        %v3189 = vpack.c.b16 %v2893, %v2885
        %v3190 = vpack.c.b16 %v2894, %v2886
        %v3191 = vpack.c.b16 %v2895, %v2887
        %v3192 = vpack.c.b16 %v2896, %v2888
        %v3193 = vpack.c.b16 %v2905, %v2897
        %v3194 = vpack.c.b16 %v2906, %v2898
        %v3195 = vpack.c.b16 %v2907, %v2899
        %v3196 = vpack.c.b16 %v2908, %v2900
        %v3197 = vpack.c.b16 %v2909, %v2901
        %v3198 = vpack.c.b16 %v2910, %v2902
        %v3199 = vpack.c.b16 %v2911, %v2903
        %v3200 = vpack.c.b16 %v2912, %v2904
        %v3201 = vpack.c.b16 %v2921, %v2913
        %v3202 = vpack.c.b16 %v2922, %v2914
        %v3203 = vpack.c.b16 %v2923, %v2915
        %v3204 = vpack.c.b16 %v2924, %v2916
        %v3205 = vpack.c.b16 %v2925, %v2917
        %v3206 = vpack.c.b16 %v2926, %v2918
        %v3207 = vpack.c.b16 %v2927, %v2919
        %v3208 = vpack.c.b16 %v2928, %v2920
        %v3209 = vpack.c.b16 %v2937, %v2929
        %v3210 = vpack.c.b16 %v2938, %v2930
        %v3211 = vpack.c.b16 %v2939, %v2931
        %v3212 = vpack.c.b16 %v2940, %v2932
        %v3213 = vpack.c.b16 %v2941, %v2933
        %v3214 = vpack.c.b16 %v2942, %v2934
        %v3215 = vpack.c.b16 %v2943, %v2935
        %v3216 = vpack.c.b16 %v2944, %v2936
        %v3217 = vpack.c.b16 %v2953, %v2945
        %v3218 = vpack.c.b16 %v2954, %v2946
        %v3219 = vpack.c.b16 %v2955, %v2947
        %v3220 = vpack.c.b16 %v2956, %v2948
        %v3221 = vpack.c.b16 %v2957, %v2949
        %v3222 = vpack.c.b16 %v2958, %v2950
        %v3223 = vpack.c.b16 %v2959, %v2951
        %v3224 = vpack.c.b16 %v2960, %v2952
        %v3225 = vpack.c.b16 %v2969, %v2961
        %v3226 = vpack.c.b16 %v2970, %v2962
        %v3227 = vpack.c.b16 %v2971, %v2963
        %v3228 = vpack.c.b16 %v2972, %v2964
        %v3229 = vpack.c.b16 %v2973, %v2965
        %v3230 = vpack.c.b16 %v2974, %v2966
        %v3231 = vpack.c.b16 %v2975, %v2967
        %v3232 = vpack.c.b16 %v2976, %v2968
        %3489 = vmatprep.subr.bf16.mxu0 %v2978
        %3490 = vmatpush1.bf16.msra.mxu0 %v2977
        %3491 = vmatprep.subr.bf16.mxu0 %v2986
        %3492 = vmatpush1.bf16.msra.mxu0 %v2985
        %3493 = vmatprep.subr.bf16.mxu0 %v2994
        %3494 = vmatpush1.bf16.msra.mxu0 %v2993
        %3495 = vmatprep.subr.bf16.mxu0 %v3002
        %3496 = vmatpush1.bf16.msra.mxu0 %v3001
        %3497 = vmatprep.subr.bf16.mxu0 %v3010
        %3498 = vmatpush1.bf16.msra.mxu0 %v3009
        %3499 = vmatprep.subr.bf16.mxu0 %v3018
        %3500 = vmatpush1.bf16.msra.mxu0 %v3017
        %3501 = vmatprep.subr.bf16.mxu0 %v3026
        %3502 = vmatpush1.bf16.msra.mxu0 %v3025
        %3503 = vmatprep.subr.bf16.mxu0 %v3034
        %3504 = vmatpush1.bf16.msra.mxu0 %v3033
        %3505 = vmatprep.subr.bf16.mxu0 %v3042
        %3506 = vmatpush1.bf16.msra.mxu0 %v3041
        %3507 = vmatprep.subr.bf16.mxu0 %v3050
        %3508 = vmatpush1.bf16.msra.mxu0 %v3049
        %3509 = vmatprep.subr.bf16.mxu0 %v3058
        %3510 = vmatpush1.bf16.msra.mxu0 %v3057
        %3511 = vmatprep.subr.bf16.mxu0 %v3066
        %3512 = vmatpush1.bf16.msra.mxu0 %v3065
        %3513 = vmatprep.subr.bf16.mxu0 %v3074
        %3514 = vmatpush1.bf16.msra.mxu0 %v3073
        %3515 = vmatprep.subr.bf16.mxu0 %v3082
        %3516 = vmatpush1.bf16.msra.mxu0 %v3081
        %3517 = vmatprep.subr.bf16.mxu0 %v3090
        %3518 = vmatpush1.bf16.msra.mxu0 %v3089
        %3519 = vmatprep.subr.bf16.mxu0 %v3098
        %3520 = vmatpush1.bf16.msra.mxu0 %v3097
        %3521 = vmatprep.mubr.bf16.mxu0 %v2202
        %3522 = vmatmul.mubr.bf16.gmra.mrb[0].mxu0 %v2201
        %v3523 = vpop.f32.mrb[0].mxu0
        %v3524 = vadd.f32 0.0, %v3523
        %v3525 = vpop.f32.mrb[0].mxu0
        %v3526 = vadd.f32 0.0, %v3525
        %v3527 = vpop.f32.mrb[0].mxu0
        %v3528 = vpop.f32.mrb[0].mxu0
        %3529 = vdwg.mxu0
        %3530 = vmatprep.subr.bf16.mxu0 %v3106
        %3531 = vmatpush1.bf16.msra.mxu0 %v3105
        %3532 = vmatprep.subr.bf16.mxu0 %v3114
        %3533 = vmatpush1.bf16.msra.mxu0 %v3113
        %3534 = vmatprep.subr.bf16.mxu0 %v3122
        %3535 = vmatpush1.bf16.msra.mxu0 %v3121
        %3536 = vmatprep.subr.bf16.mxu0 %v3130
        %3537 = vmatpush1.bf16.msra.mxu0 %v3129
        %3538 = vmatprep.subr.bf16.mxu0 %v3138
        %3539 = vmatpush1.bf16.msra.mxu0 %v3137
        %3540 = vmatprep.subr.bf16.mxu0 %v3146
        %3541 = vmatpush1.bf16.msra.mxu0 %v3145
        %3542 = vmatprep.subr.bf16.mxu0 %v3154
        %3543 = vmatpush1.bf16.msra.mxu0 %v3153
        %3544 = vmatprep.subr.bf16.mxu0 %v3162
        %3545 = vmatpush1.bf16.msra.mxu0 %v3161
        %3546 = vmatprep.subr.bf16.mxu0 %v3170
        %3547 = vmatpush1.bf16.msra.mxu0 %v3169
        %3548 = vmatprep.subr.bf16.mxu0 %v3178
        %3549 = vmatpush1.bf16.msra.mxu0 %v3177
        %3550 = vmatprep.subr.bf16.mxu0 %v3186
        %3551 = vmatpush1.bf16.msra.mxu0 %v3185
        %3552 = vmatprep.subr.bf16.mxu0 %v3194
        %3553 = vmatpush1.bf16.msra.mxu0 %v3193
        %3554 = vmatprep.subr.bf16.mxu0 %v3202
        %3555 = vmatpush1.bf16.msra.mxu0 %v3201
        %3556 = vmatprep.subr.bf16.mxu0 %v3210
        %3557 = vmatpush1.bf16.msra.mxu0 %v3209
        %3558 = vmatprep.subr.bf16.mxu0 %v3218
        %3559 = vmatpush1.bf16.msra.mxu0 %v3217
        %3560 = vmatprep.subr.bf16.mxu0 %v3226
        %3561 = vmatpush1.bf16.msra.mxu0 %v3225
        %3562 = vmatprep.mubr.bf16.mxu0 %v2204
        %3563 = vmatmul.mubr.bf16.gmra.mrb[0].mxu0 %v2203
        %v3564 = vpop.f32.mrb[0].mxu0
        %v3565 = vadd.f32 %v3524, %v3564
        %v3566 = vpop.f32.mrb[0].mxu0
        %v3567 = vadd.f32 %v3526, %v3566
        %v3568 = vpop.f32.mrb[0].mxu0
        %v3569 = vpop.f32.mrb[0].mxu0
        %3570 = vdwg.mxu0
        %3571 = vmatprep.subr.bf16.mxu0 %v2980
        %3572 = vmatpush1.bf16.msra.mxu0 %v2979
        %3573 = vmatprep.subr.bf16.mxu0 %v2988
        %3574 = vmatpush1.bf16.msra.mxu0 %v2987
        %3575 = vmatprep.subr.bf16.mxu0 %v2996
        %3576 = vmatpush1.bf16.msra.mxu0 %v2995
        %3577 = vmatprep.subr.bf16.mxu0 %v3004
        %3578 = vmatpush1.bf16.msra.mxu0 %v3003
        %3579 = vmatprep.subr.bf16.mxu0 %v3012
        %3580 = vmatpush1.bf16.msra.mxu0 %v3011
        %3581 = vmatprep.subr.bf16.mxu0 %v3020
        %3582 = vmatpush1.bf16.msra.mxu0 %v3019
        %3583 = vmatprep.subr.bf16.mxu0 %v3028
        %3584 = vmatpush1.bf16.msra.mxu0 %v3027
        %3585 = vmatprep.subr.bf16.mxu0 %v3036
        %3586 = vmatpush1.bf16.msra.mxu0 %v3035
        %3587 = vmatprep.subr.bf16.mxu0 %v3044
        %3588 = vmatpush1.bf16.msra.mxu0 %v3043
        %3589 = vmatprep.subr.bf16.mxu0 %v3052
        %3590 = vmatpush1.bf16.msra.mxu0 %v3051
        %3591 = vmatprep.subr.bf16.mxu0 %v3060
        %3592 = vmatpush1.bf16.msra.mxu0 %v3059
        %3593 = vmatprep.subr.bf16.mxu0 %v3068
        %3594 = vmatpush1.bf16.msra.mxu0 %v3067
        %3595 = vmatprep.subr.bf16.mxu0 %v3076
        %3596 = vmatpush1.bf16.msra.mxu0 %v3075
        %3597 = vmatprep.subr.bf16.mxu0 %v3084
        %3598 = vmatpush1.bf16.msra.mxu0 %v3083
        %3599 = vmatprep.subr.bf16.mxu0 %v3092
        %3600 = vmatpush1.bf16.msra.mxu0 %v3091
        %3601 = vmatprep.subr.bf16.mxu0 %v3100
        %3602 = vmatpush1.bf16.msra.mxu0 %v3099
        %3603 = vmatprep.mubr.bf16.mxu0 %v2202
        %3604 = vmatmul.mubr.bf16.gmra.mrb[0].mxu0 %v2201
        %v3605 = vpop.f32.mrb[0].mxu0
        %v3606 = vadd.f32 0.0, %v3605
        %v3607 = vpop.f32.mrb[0].mxu0
        %v3608 = vadd.f32 0.0, %v3607
        %v3609 = vpop.f32.mrb[0].mxu0
        %v3610 = vpop.f32.mrb[0].mxu0
        %3611 = vdwg.mxu0
        %3612 = vmatprep.subr.bf16.mxu0 %v3108
        %3613 = vmatpush1.bf16.msra.mxu0 %v3107
        %3614 = vmatprep.subr.bf16.mxu0 %v3116
        %3615 = vmatpush1.bf16.msra.mxu0 %v3115
        %3616 = vmatprep.subr.bf16.mxu0 %v3124
        %3617 = vmatpush1.bf16.msra.mxu0 %v3123
        %3618 = vmatprep.subr.bf16.mxu0 %v3132
        %3619 = vmatpush1.bf16.msra.mxu0 %v3131
        %3620 = vmatprep.subr.bf16.mxu0 %v3140
        %3621 = vmatpush1.bf16.msra.mxu0 %v3139
        %3622 = vmatprep.subr.bf16.mxu0 %v3148
        %3623 = vmatpush1.bf16.msra.mxu0 %v3147
        %3624 = vmatprep.subr.bf16.mxu0 %v3156
        %3625 = vmatpush1.bf16.msra.mxu0 %v3155
        %3626 = vmatprep.subr.bf16.mxu0 %v3164
        %3627 = vmatpush1.bf16.msra.mxu0 %v3163
        %3628 = vmatprep.subr.bf16.mxu0 %v3172
        %3629 = vmatpush1.bf16.msra.mxu0 %v3171
        %3630 = vmatprep.subr.bf16.mxu0 %v3180
        %3631 = vmatpush1.bf16.msra.mxu0 %v3179
        %3632 = vmatprep.subr.bf16.mxu0 %v3188
        %3633 = vmatpush1.bf16.msra.mxu0 %v3187
        %3634 = vmatprep.subr.bf16.mxu0 %v3196
        %3635 = vmatpush1.bf16.msra.mxu0 %v3195
        %3636 = vmatprep.subr.bf16.mxu0 %v3204
        %3637 = vmatpush1.bf16.msra.mxu0 %v3203
        %3638 = vmatprep.subr.bf16.mxu0 %v3212
        %3639 = vmatpush1.bf16.msra.mxu0 %v3211
        %3640 = vmatprep.subr.bf16.mxu0 %v3220
        %3641 = vmatpush1.bf16.msra.mxu0 %v3219
        %3642 = vmatprep.subr.bf16.mxu0 %v3228
        %3643 = vmatpush1.bf16.msra.mxu0 %v3227
        %3644 = vmatprep.mubr.bf16.mxu0 %v2204
        %3645 = vmatmul.mubr.bf16.gmra.mrb[0].mxu0 %v2203
        %v3646 = vpop.f32.mrb[0].mxu0
        %v3647 = vadd.f32 %v3606, %v3646
        %v3648 = vpop.f32.mrb[0].mxu0
        %v3649 = vadd.f32 %v3608, %v3648
        %v3650 = vpop.f32.mrb[0].mxu0
        %v3651 = vpop.f32.mrb[0].mxu0
        %3652 = vdwg.mxu0
        %3653 = vmatprep.subr.bf16.mxu0 %v2982
        %3654 = vmatpush1.bf16.msra.mxu0 %v2981
        %3655 = vmatprep.subr.bf16.mxu0 %v2990
        %3656 = vmatpush1.bf16.msra.mxu0 %v2989
        %3657 = vmatprep.subr.bf16.mxu0 %v2998
        %3658 = vmatpush1.bf16.msra.mxu0 %v2997
        %3659 = vmatprep.subr.bf16.mxu0 %v3006
        %3660 = vmatpush1.bf16.msra.mxu0 %v3005
        %3661 = vmatprep.subr.bf16.mxu0 %v3014
        %3662 = vmatpush1.bf16.msra.mxu0 %v3013
        %3663 = vmatprep.subr.bf16.mxu0 %v3022
        %3664 = vmatpush1.bf16.msra.mxu0 %v3021
        %3665 = vmatprep.subr.bf16.mxu0 %v3030
        %3666 = vmatpush1.bf16.msra.mxu0 %v3029
        %3667 = vmatprep.subr.bf16.mxu0 %v3038
        %3668 = vmatpush1.bf16.msra.mxu0 %v3037
        %3669 = vmatprep.subr.bf16.mxu0 %v3046
        %3670 = vmatpush1.bf16.msra.mxu0 %v3045
        %3671 = vmatprep.subr.bf16.mxu0 %v3054
        %3672 = vmatpush1.bf16.msra.mxu0 %v3053
        %3673 = vmatprep.subr.bf16.mxu0 %v3062
        %3674 = vmatpush1.bf16.msra.mxu0 %v3061
        %3675 = vmatprep.subr.bf16.mxu0 %v3070
        %3676 = vmatpush1.bf16.msra.mxu0 %v3069
        %3677 = vmatprep.subr.bf16.mxu0 %v3078
        %3678 = vmatpush1.bf16.msra.mxu0 %v3077
        %3679 = vmatprep.subr.bf16.mxu0 %v3086
        %3680 = vmatpush1.bf16.msra.mxu0 %v3085
        %3681 = vmatprep.subr.bf16.mxu0 %v3094
        %3682 = vmatpush1.bf16.msra.mxu0 %v3093
        %3683 = vmatprep.subr.bf16.mxu0 %v3102
        %3684 = vmatpush1.bf16.msra.mxu0 %v3101
        %3685 = vmatprep.mubr.bf16.mxu0 %v2202
        %3686 = vmatmul.mubr.bf16.gmra.mrb[0].mxu0 %v2201
        %v3687 = vpop.f32.mrb[0].mxu0
        %v3688 = vadd.f32 0.0, %v3687
        %v3689 = vpop.f32.mrb[0].mxu0
        %v3690 = vadd.f32 0.0, %v3689
        %v3691 = vpop.f32.mrb[0].mxu0
        %v3692 = vpop.f32.mrb[0].mxu0
        %3693 = vdwg.mxu0
        %3694 = vmatprep.subr.bf16.mxu0 %v3110
        %3695 = vmatpush1.bf16.msra.mxu0 %v3109
        %3696 = vmatprep.subr.bf16.mxu0 %v3118
        %3697 = vmatpush1.bf16.msra.mxu0 %v3117
        %3698 = vmatprep.subr.bf16.mxu0 %v3126
        %3699 = vmatpush1.bf16.msra.mxu0 %v3125
        %3700 = vmatprep.subr.bf16.mxu0 %v3134
        %3701 = vmatpush1.bf16.msra.mxu0 %v3133
        %3702 = vmatprep.subr.bf16.mxu0 %v3142
        %3703 = vmatpush1.bf16.msra.mxu0 %v3141
        %3704 = vmatprep.subr.bf16.mxu0 %v3150
        %3705 = vmatpush1.bf16.msra.mxu0 %v3149
        %3706 = vmatprep.subr.bf16.mxu0 %v3158
        %3707 = vmatpush1.bf16.msra.mxu0 %v3157
        %3708 = vmatprep.subr.bf16.mxu0 %v3166
        %3709 = vmatpush1.bf16.msra.mxu0 %v3165
        %3710 = vmatprep.subr.bf16.mxu0 %v3174
        %3711 = vmatpush1.bf16.msra.mxu0 %v3173
        %3712 = vmatprep.subr.bf16.mxu0 %v3182
        %3713 = vmatpush1.bf16.msra.mxu0 %v3181
        %3714 = vmatprep.subr.bf16.mxu0 %v3190
        %3715 = vmatpush1.bf16.msra.mxu0 %v3189
        %3716 = vmatprep.subr.bf16.mxu0 %v3198
        %3717 = vmatpush1.bf16.msra.mxu0 %v3197
        %3718 = vmatprep.subr.bf16.mxu0 %v3206
        %3719 = vmatpush1.bf16.msra.mxu0 %v3205
        %3720 = vmatprep.subr.bf16.mxu0 %v3214
        %3721 = vmatpush1.bf16.msra.mxu0 %v3213
        %3722 = vmatprep.subr.bf16.mxu0 %v3222
        %3723 = vmatpush1.bf16.msra.mxu0 %v3221
        %3724 = vmatprep.subr.bf16.mxu0 %v3230
        %3725 = vmatpush1.bf16.msra.mxu0 %v3229
        %3726 = vmatprep.mubr.bf16.mxu0 %v2204
        %3727 = vmatmul.mubr.bf16.gmra.mrb[0].mxu0 %v2203
        %v3728 = vpop.f32.mrb[0].mxu0
        %v3729 = vadd.f32 %v3688, %v3728
        %v3730 = vpop.f32.mrb[0].mxu0
        %v3731 = vadd.f32 %v3690, %v3730
        %v3732 = vpop.f32.mrb[0].mxu0
        %v3733 = vpop.f32.mrb[0].mxu0
        %3734 = vdwg.mxu0
        %3735 = vmatprep.subr.bf16.mxu0 %v2984
        %3736 = vmatpush1.bf16.msra.mxu0 %v2983
        %3737 = vmatprep.subr.bf16.mxu0 %v2992
        %3738 = vmatpush1.bf16.msra.mxu0 %v2991
        %3739 = vmatprep.subr.bf16.mxu0 %v3000
        %3740 = vmatpush1.bf16.msra.mxu0 %v2999
        %3741 = vmatprep.subr.bf16.mxu0 %v3008
        %3742 = vmatpush1.bf16.msra.mxu0 %v3007
        %3743 = vmatprep.subr.bf16.mxu0 %v3016
        %3744 = vmatpush1.bf16.msra.mxu0 %v3015
        %3745 = vmatprep.subr.bf16.mxu0 %v3024
        %3746 = vmatpush1.bf16.msra.mxu0 %v3023
        %3747 = vmatprep.subr.bf16.mxu0 %v3032
        %3748 = vmatpush1.bf16.msra.mxu0 %v3031
        %3749 = vmatprep.subr.bf16.mxu0 %v3040
        %3750 = vmatpush1.bf16.msra.mxu0 %v3039
        %3751 = vmatprep.subr.bf16.mxu0 %v3048
        %3752 = vmatpush1.bf16.msra.mxu0 %v3047
        %3753 = vmatprep.subr.bf16.mxu0 %v3056
        %3754 = vmatpush1.bf16.msra.mxu0 %v3055
        %3755 = vmatprep.subr.bf16.mxu0 %v3064
        %3756 = vmatpush1.bf16.msra.mxu0 %v3063
        %3757 = vmatprep.subr.bf16.mxu0 %v3072
        %3758 = vmatpush1.bf16.msra.mxu0 %v3071
        %3759 = vmatprep.subr.bf16.mxu0 %v3080
        %3760 = vmatpush1.bf16.msra.mxu0 %v3079
        %3761 = vmatprep.subr.bf16.mxu0 %v3088
        %3762 = vmatpush1.bf16.msra.mxu0 %v3087
        %3763 = vmatprep.subr.bf16.mxu0 %v3096
        %3764 = vmatpush1.bf16.msra.mxu0 %v3095
        %3765 = vmatprep.subr.bf16.mxu0 %v3104
        %3766 = vmatpush1.bf16.msra.mxu0 %v3103
        %3767 = vmatprep.mubr.bf16.mxu0 %v2202
        %3768 = vmatmul.mubr.bf16.gmra.mrb[0].mxu0 %v2201
        %v3769 = vpop.f32.mrb[0].mxu0
        %v3770 = vadd.f32 0.0, %v3769
        %v3771 = vpop.f32.mrb[0].mxu0
        %v3772 = vadd.f32 0.0, %v3771
        %v3773 = vpop.f32.mrb[0].mxu0
        %v3774 = vpop.f32.mrb[0].mxu0
        %3775 = vdwg.mxu0
        %3776 = vmatprep.subr.bf16.mxu0 %v3112
        %3777 = vmatpush1.bf16.msra.mxu0 %v3111
        %3778 = vmatprep.subr.bf16.mxu0 %v3120
        %3779 = vmatpush1.bf16.msra.mxu0 %v3119
        %3780 = vmatprep.subr.bf16.mxu0 %v3128
        %3781 = vmatpush1.bf16.msra.mxu0 %v3127
        %3782 = vmatprep.subr.bf16.mxu0 %v3136
        %3783 = vmatpush1.bf16.msra.mxu0 %v3135
        %3784 = vmatprep.subr.bf16.mxu0 %v3144
        %3785 = vmatpush1.bf16.msra.mxu0 %v3143
        %3786 = vmatprep.subr.bf16.mxu0 %v3152
        %3787 = vmatpush1.bf16.msra.mxu0 %v3151
        %3788 = vmatprep.subr.bf16.mxu0 %v3160
        %3789 = vmatpush1.bf16.msra.mxu0 %v3159
        %3790 = vmatprep.subr.bf16.mxu0 %v3168
        %3791 = vmatpush1.bf16.msra.mxu0 %v3167
        %3792 = vmatprep.subr.bf16.mxu0 %v3176
        %3793 = vmatpush1.bf16.msra.mxu0 %v3175
        %3794 = vmatprep.subr.bf16.mxu0 %v3184
        %3795 = vmatpush1.bf16.msra.mxu0 %v3183
        %3796 = vmatprep.subr.bf16.mxu0 %v3192
        %3797 = vmatpush1.bf16.msra.mxu0 %v3191
        %3798 = vmatprep.subr.bf16.mxu0 %v3200
        %3799 = vmatpush1.bf16.msra.mxu0 %v3199
        %3800 = vmatprep.subr.bf16.mxu0 %v3208
        %3801 = vmatpush1.bf16.msra.mxu0 %v3207
        %3802 = vmatprep.subr.bf16.mxu0 %v3216
        %3803 = vmatpush1.bf16.msra.mxu0 %v3215
        %3804 = vmatprep.subr.bf16.mxu0 %v3224
        %3805 = vmatpush1.bf16.msra.mxu0 %v3223
        %3806 = vmatprep.subr.bf16.mxu0 %v3232
        %3807 = vmatpush1.bf16.msra.mxu0 %v3231
        %3808 = vmatprep.mubr.bf16.mxu0 %v2204
        %3809 = vmatmul.mubr.bf16.gmra.mrb[0].mxu0 %v2203
        %v3810 = vpop.f32.mrb[0].mxu0
        %v3811 = vadd.f32 %v3770, %v3810
        %v3812 = vpop.f32.mrb[0].mxu0
        %v3813 = vadd.f32 %v3772, %v3812
        %v3814 = vpop.f32.mrb[0].mxu0
        %v3815 = vpop.f32.mrb[0].mxu0
        %3816 = vdwg.mxu0
        %v3817 = vadd.f32 %v1925, %v3565
        %v3818 = vadd.f32 %v1926, %v3567
        %v3819 = vadd.f32 %v1927, %v3647
        %v3820 = vadd.f32 %v1928, %v3649
        %v3821 = vadd.f32 %v1929, %v3729
        %v3822 = vadd.f32 %v1930, %v3731
        %v3823 = vadd.f32 %v1931, %v3811
        %v3824 = vadd.f32 %v1932, %v3813
        %3825 = vst [vmem:[#allocation3] sm:$0xff] %v3817
        %3826 = vst [vmem:[#allocation3 + $0x8] sm:$0xff] %v3818
        %3827 = vst [vmem:[#allocation3 + $0x10] sm:$0xff] %v3819
        %3828 = vst [vmem:[#allocation3 + $0x18] sm:$0xff] %v3820
        %3829 = vst [vmem:[#allocation3 + $0x20] sm:$0xff] %v3821
        %3830 = vst [vmem:[#allocation3 + $0x28] sm:$0xff] %v3822
        %3831 = vst [vmem:[#allocation3 + $0x30] sm:$0xff] %v3823
        %3832 = vst [vmem:[#allocation3 + $0x38] sm:$0xff] %v3824
        %p3833 = scmp.eq.s32.totalorder %s40, 3
        // Predicated region
        $region157: #{tpu_custom_call.1} parent=87 // pred_check
          %p3834 = pneg %p3833
        $region158: #{tpu_custom_call.1} parent=87 // pred_check_branch
          %3836 = sbr.rel (%p3834) target = $region160
        $region159: #{tpu_custom_call.1} parent=87 // pred_region
          %v3837 = vld [vmem:[#allocation3] sm:$0xff]
          %v3838 = vld [vmem:[#allocation3 + $0x8] sm:$0xff]
          %v3839 = vld [vmem:[#allocation3 + $0x10] sm:$0xff]
          %v3840 = vld [vmem:[#allocation3 + $0x18] sm:$0xff]
          %v3841 = vld [vmem:[#allocation3 + $0x20] sm:$0xff]
          %v3842 = vld [vmem:[#allocation3 + $0x28] sm:$0xff]
          %v3843 = vld [vmem:[#allocation3 + $0x30] sm:$0xff]
          %v3844 = vld [vmem:[#allocation3 + $0x38] sm:$0xff]
          %v3845 = vld [vmem:[#allocation15] sm:$0xff]
          %v3846 = vld [vmem:[#allocation16] sm:$0xff]
          %3848 = vset.pattern.permute.xlu0 0
          %3849 = vperm.xlu0 %3848, %v752
          %v3850 = vpop.permute.xlu0 %3849
          %v3852 = vmul.f32 %v3837, %v3850
          %v3853 = vmul.f32 %v3838, %v3850
          %v3854 = vmul.f32 %v3839, %v3850
          %v3855 = vmul.f32 %v3840, %v3850
          %v3856 = vmul.f32 %v3841, %v3850
          %v3857 = vmul.f32 %v3842, %v3850
          %v3858 = vmul.f32 %v3843, %v3850
          %v3859 = vmul.f32 %v3844, %v3850
          %v3860 = vrot.slane %v3852, 4
          %v3861 = vadd.f32 %v3852, %v3860
          %v3862 = vrot.slane %v3861, 2
          %v3863 = vadd.f32 %v3861, %v3862
          %v3864 = vrot.slane %v3863, 1
          %v3865 = vadd.f32 %v3863, %v3864
          %v3866 = vrot.slane %v3853, 4
          %v3867 = vadd.f32 %v3853, %v3866
          %v3868 = vrot.slane %v3867, 2
          %v3869 = vadd.f32 %v3867, %v3868
          %v3870 = vrot.slane %v3869, 1
          %v3871 = vadd.f32 %v3869, %v3870
          %v3872 = vrot.slane %v3854, 4
          %v3873 = vadd.f32 %v3854, %v3872
          %v3874 = vrot.slane %v3873, 2
          %v3875 = vadd.f32 %v3873, %v3874
          %v3876 = vrot.slane %v3875, 1
          %v3877 = vadd.f32 %v3875, %v3876
          %v3878 = vrot.slane %v3855, 4
          %v3879 = vadd.f32 %v3855, %v3878
          %v3880 = vrot.slane %v3879, 2
          %v3881 = vadd.f32 %v3879, %v3880
          %v3882 = vrot.slane %v3881, 1
          %v3883 = vadd.f32 %v3881, %v3882
          %v3884 = vrot.slane %v3856, 4
          %v3885 = vadd.f32 %v3856, %v3884
          %v3886 = vrot.slane %v3885, 2
          %v3887 = vadd.f32 %v3885, %v3886
          %v3888 = vrot.slane %v3887, 1
          %v3889 = vadd.f32 %v3887, %v3888
          %v3890 = vrot.slane %v3857, 4
          %v3891 = vadd.f32 %v3857, %v3890
          %v3892 = vrot.slane %v3891, 2
          %v3893 = vadd.f32 %v3891, %v3892
          %v3894 = vrot.slane %v3893, 1
          %v3895 = vadd.f32 %v3893, %v3894
          %v3896 = vrot.slane %v3858, 4
          %v3897 = vadd.f32 %v3858, %v3896
          %v3898 = vrot.slane %v3897, 2
          %v3899 = vadd.f32 %v3897, %v3898
          %v3900 = vrot.slane %v3899, 1
          %v3901 = vadd.f32 %v3899, %v3900
          %v3902 = vrot.slane %v3859, 4
          %v3903 = vadd.f32 %v3859, %v3902
          %v3904 = vrot.slane %v3903, 2
          %v3905 = vadd.f32 %v3903, %v3904
          %v3906 = vrot.slane %v3905, 1
          %v3907 = vadd.f32 %v3905, %v3906
          %v3908 = vmul.f32 %v3865, 0.125
          %v3909 = vmul.f32 %v3871, 0.125
          %v3910 = vmul.f32 %v3877, 0.125
          %v3911 = vmul.f32 %v3883, 0.125
          %v3912 = vmul.f32 %v3889, 0.125
          %v3913 = vmul.f32 %v3895, 0.125
          %v3914 = vmul.f32 %v3901, 0.125
          %v3915 = vmul.f32 %v3907, 0.125
          %v3916 = vmul.f32 %v3852, %v3837
          %v3917 = vmul.f32 %v3853, %v3838
          %v3918 = vmul.f32 %v3854, %v3839
          %v3919 = vmul.f32 %v3855, %v3840
          %v3920 = vmul.f32 %v3856, %v3841
          %v3921 = vmul.f32 %v3857, %v3842
          %v3922 = vmul.f32 %v3858, %v3843
          %v3923 = vmul.f32 %v3859, %v3844
          %v3924 = vrot.slane %v3916, 4
          %v3925 = vadd.f32 %v3916, %v3924
          %v3926 = vrot.slane %v3925, 2
          %v3927 = vadd.f32 %v3925, %v3926
          %v3928 = vrot.slane %v3927, 1
          %v3929 = vadd.f32 %v3927, %v3928
          %v3930 = vrot.slane %v3917, 4
          %v3931 = vadd.f32 %v3917, %v3930
          %v3932 = vrot.slane %v3931, 2
          %v3933 = vadd.f32 %v3931, %v3932
          %v3934 = vrot.slane %v3933, 1
          %v3935 = vadd.f32 %v3933, %v3934
          %v3936 = vrot.slane %v3918, 4
          %v3937 = vadd.f32 %v3918, %v3936
          %v3938 = vrot.slane %v3937, 2
          %v3939 = vadd.f32 %v3937, %v3938
          %v3940 = vrot.slane %v3939, 1
          %v3941 = vadd.f32 %v3939, %v3940
          %v3942 = vrot.slane %v3919, 4
          %v3943 = vadd.f32 %v3919, %v3942
          %v3944 = vrot.slane %v3943, 2
          %v3945 = vadd.f32 %v3943, %v3944
          %v3946 = vrot.slane %v3945, 1
          %v3947 = vadd.f32 %v3945, %v3946
          %v3948 = vrot.slane %v3920, 4
          %v3949 = vadd.f32 %v3920, %v3948
          %v3950 = vrot.slane %v3949, 2
          %v3951 = vadd.f32 %v3949, %v3950
          %v3952 = vrot.slane %v3951, 1
          %v3953 = vadd.f32 %v3951, %v3952
          %v3954 = vrot.slane %v3921, 4
          %v3955 = vadd.f32 %v3921, %v3954
          %v3956 = vrot.slane %v3955, 2
          %v3957 = vadd.f32 %v3955, %v3956
          %v3958 = vrot.slane %v3957, 1
          %v3959 = vadd.f32 %v3957, %v3958
          %v3960 = vrot.slane %v3922, 4
          %v3961 = vadd.f32 %v3922, %v3960
          %v3962 = vrot.slane %v3961, 2
          %v3963 = vadd.f32 %v3961, %v3962
          %v3964 = vrot.slane %v3963, 1
          %v3965 = vadd.f32 %v3963, %v3964
          %v3966 = vrot.slane %v3923, 4
          %v3967 = vadd.f32 %v3923, %v3966
          %v3968 = vrot.slane %v3967, 2
          %v3969 = vadd.f32 %v3967, %v3968
          %v3970 = vrot.slane %v3969, 1
          %v3971 = vadd.f32 %v3969, %v3970
          %v3972 = vmul.f32 %v3929, 0.125
          %v3973 = vmul.f32 %v3935, 0.125
          %v3974 = vmul.f32 %v3941, 0.125
          %v3975 = vmul.f32 %v3947, 0.125
          %v3976 = vmul.f32 %v3953, 0.125
          %v3977 = vmul.f32 %v3959, 0.125
          %v3978 = vmul.f32 %v3965, 0.125
          %v3979 = vmul.f32 %v3971, 0.125
          %v3980 = vmul.f32 %v3908, %v3908
          %v3981 = vmul.f32 %v3909, %v3909
          %v3982 = vmul.f32 %v3910, %v3910
          %v3983 = vmul.f32 %v3911, %v3911
          %v3984 = vmul.f32 %v3912, %v3912
          %v3985 = vmul.f32 %v3913, %v3913
          %v3986 = vmul.f32 %v3914, %v3914
          %v3987 = vmul.f32 %v3915, %v3915
          %v3988 = vsub.f32 %v3972, %v3980
          %v3989 = vsub.f32 %v3973, %v3981
          %v3990 = vsub.f32 %v3974, %v3982
          %v3991 = vsub.f32 %v3975, %v3983
          %v3992 = vsub.f32 %v3976, %v3984
          %v3993 = vsub.f32 %v3977, %v3985
          %v3994 = vsub.f32 %v3978, %v3986
          %v3995 = vsub.f32 %v3979, %v3987
          %v3996 = vsub.f32 %v3837, %v3908
          %v3997 = vsub.f32 %v3838, %v3909
          %v3998 = vsub.f32 %v3839, %v3910
          %v3999 = vsub.f32 %v3840, %v3911
          %v4000 = vsub.f32 %v3841, %v3912
          %v4001 = vsub.f32 %v3842, %v3913
          %v4002 = vsub.f32 %v3843, %v3914
          %v4003 = vsub.f32 %v3844, %v3915
          %v4004 = vadd.f32 %v3988, 1e-05
          %v4005 = vadd.f32 %v3989, 1e-05
          %v4006 = vadd.f32 %v3990, 1e-05
          %v4007 = vadd.f32 %v3991, 1e-05
          %v4008 = vadd.f32 %v3992, 1e-05
          %v4009 = vadd.f32 %v3993, 1e-05
          %v4010 = vadd.f32 %v3994, 1e-05
          %v4011 = vadd.f32 %v3995, 1e-05
          %v4012 = vrsqrt.pop %v4004
          %v4013 = vrsqrt.pop %v4005
          %v4014 = vrsqrt.pop %v4006
          %v4015 = vrsqrt.pop %v4007
          %v4016 = vrsqrt.pop %v4008
          %v4017 = vrsqrt.pop %v4009
          %v4018 = vrsqrt.pop %v4010
          %v4019 = vrsqrt.pop %v4011
          %v4020 = vmul.f32 %v3996, %v4012
          %v4021 = vmul.f32 %v3997, %v4013
          %v4022 = vmul.f32 %v3998, %v4014
          %v4023 = vmul.f32 %v3999, %v4015
          %v4024 = vmul.f32 %v4000, %v4016
          %v4025 = vmul.f32 %v4001, %v4017
          %v4026 = vmul.f32 %v4002, %v4018
          %v4027 = vmul.f32 %v4003, %v4019
          %v4029 = vlaneseq
          %v4030 = vshrl.u32 %v4029, 7
          %v4031 = vsub.s32 0, %v4030
          %v4032 = vrot.slane %v3845, %v4031
          %v4033 = vlaneseq
          %v4034 = vshrl.u32 %v4033, 7
          %v4035 = vsub.s32 1, %v4034
          %v4036 = vrot.slane %v3845, %v4035
          %v4037 = vlaneseq
          %v4038 = vshrl.u32 %v4037, 7
          %v4039 = vsub.s32 2, %v4038
          %v4040 = vrot.slane %v3845, %v4039
          %v4041 = vlaneseq
          %v4042 = vshrl.u32 %v4041, 7
          %v4043 = vsub.s32 3, %v4042
          %v4044 = vrot.slane %v3845, %v4043
          %v4045 = vlaneseq
          %v4046 = vshrl.u32 %v4045, 7
          %v4047 = vsub.s32 4, %v4046
          %v4048 = vrot.slane %v3845, %v4047
          %v4049 = vlaneseq
          %v4050 = vshrl.u32 %v4049, 7
          %v4051 = vsub.s32 5, %v4050
          %v4052 = vrot.slane %v3845, %v4051
          %v4053 = vlaneseq
          %v4054 = vshrl.u32 %v4053, 7
          %v4055 = vsub.s32 6, %v4054
          %v4056 = vrot.slane %v3845, %v4055
          %v4057 = vlaneseq
          %v4058 = vshrl.u32 %v4057, 7
          %v4059 = vsub.s32 7, %v4058
          %v4060 = vrot.slane %v3845, %v4059
          %v4069 = vmul.f32 %v4020, %v4032
          %v4070 = vmul.f32 %v4021, %v4036
          %v4071 = vmul.f32 %v4022, %v4040
          %v4072 = vmul.f32 %v4023, %v4044
          %v4073 = vmul.f32 %v4024, %v4048
          %v4074 = vmul.f32 %v4025, %v4052
          %v4075 = vmul.f32 %v4026, %v4056
          %v4076 = vmul.f32 %v4027, %v4060
          %v4078 = vlaneseq
          %v4079 = vshrl.u32 %v4078, 7
          %v4080 = vsub.s32 0, %v4079
          %v4081 = vrot.slane %v3846, %v4080
          %v4082 = vlaneseq
          %v4083 = vshrl.u32 %v4082, 7
          %v4084 = vsub.s32 1, %v4083
          %v4085 = vrot.slane %v3846, %v4084
          %v4086 = vlaneseq
          %v4087 = vshrl.u32 %v4086, 7
          %v4088 = vsub.s32 2, %v4087
          %v4089 = vrot.slane %v3846, %v4088
          %v4090 = vlaneseq
          %v4091 = vshrl.u32 %v4090, 7
          %v4092 = vsub.s32 3, %v4091
          %v4093 = vrot.slane %v3846, %v4092
          %v4094 = vlaneseq
          %v4095 = vshrl.u32 %v4094, 7
          %v4096 = vsub.s32 4, %v4095
          %v4097 = vrot.slane %v3846, %v4096
          %v4098 = vlaneseq
          %v4099 = vshrl.u32 %v4098, 7
          %v4100 = vsub.s32 5, %v4099
          %v4101 = vrot.slane %v3846, %v4100
          %v4102 = vlaneseq
          %v4103 = vshrl.u32 %v4102, 7
          %v4104 = vsub.s32 6, %v4103
          %v4105 = vrot.slane %v3846, %v4104
          %v4106 = vlaneseq
          %v4107 = vshrl.u32 %v4106, 7
          %v4108 = vsub.s32 7, %v4107
          %v4109 = vrot.slane %v3846, %v4108
          %v4118 = vadd.f32 %v4069, %v4081
          %v4119 = vadd.f32 %v4070, %v4085
          %v4120 = vadd.f32 %v4071, %v4089
          %v4121 = vadd.f32 %v4072, %v4093
          %v4122 = vadd.f32 %v4073, %v4097
          %v4123 = vadd.f32 %v4074, %v4101
          %v4124 = vadd.f32 %v4075, %v4105
          %v4125 = vadd.f32 %v4076, %v4109
          %v4126 = vmax.f32 %v4118, 0.0
          %v4127 = vmax.f32 %v4119, 0.0
          %v4128 = vmax.f32 %v4120, 0.0
          %v4129 = vmax.f32 %v4121, 0.0
          %v4130 = vmax.f32 %v4122, 0.0
          %v4131 = vmax.f32 %v4123, 0.0
          %v4132 = vmax.f32 %v4124, 0.0
          %v4133 = vmax.f32 %v4125, 0.0
          %v4134 = vpack.c.bf16 %v4126, %v4126
          %v4135 = vpack.c.bf16 %v4127, %v4127
          %v4136 = vpack.c.bf16 %v4128, %v4128
          %v4137 = vpack.c.bf16 %v4129, %v4129
          %v4138 = vpack.c.bf16 %v4130, %v4130
          %v4139 = vpack.c.bf16 %v4131, %v4131
          %v4140 = vpack.c.bf16 %v4132, %v4132
          %v4141 = vpack.c.bf16 %v4133, %v4133
          %v4142 = vld [vmem:[#allocation18] sm:$0xff]
          %v4143 = vld [vmem:[#allocation18 + $0x8] sm:$0xff]
          %v4144 = vld [vmem:[#allocation18 + $0x10] sm:$0xff]
          %v4145 = vld [vmem:[#allocation18 + $0x18] sm:$0xff]
          %v4146 = vld [vmem:[#allocation18 + $0x20] sm:$0xff]
          %v4147 = vld [vmem:[#allocation18 + $0x28] sm:$0xff]
          %v4148 = vld [vmem:[#allocation18 + $0x30] sm:$0xff]
          %v4149 = vld [vmem:[#allocation18 + $0x38] sm:$0xff]
          %v4150 = vld [vmem:[#allocation18 + $0x40] sm:$0xff]
          %v4151 = vld [vmem:[#allocation18 + $0x48] sm:$0xff]
          %v4152 = vld [vmem:[#allocation18 + $0x50] sm:$0xff]
          %v4153 = vld [vmem:[#allocation18 + $0x58] sm:$0xff]
          %v4154 = vld [vmem:[#allocation18 + $0x60] sm:$0xff]
          %v4155 = vld [vmem:[#allocation18 + $0x68] sm:$0xff]
          %v4156 = vld [vmem:[#allocation18 + $0x70] sm:$0xff]
          %v4157 = vld [vmem:[#allocation18 + $0x78] sm:$0xff]
          %v4158 = vld [vmem:[#allocation18 + $0x80] sm:$0xff]
          %v4159 = vld [vmem:[#allocation18 + $0x88] sm:$0xff]
          %v4160 = vld [vmem:[#allocation18 + $0x90] sm:$0xff]
          %v4161 = vld [vmem:[#allocation18 + $0x98] sm:$0xff]
          %v4162 = vld [vmem:[#allocation18 + $0xa0] sm:$0xff]
          %v4163 = vld [vmem:[#allocation18 + $0xa8] sm:$0xff]
          %v4164 = vld [vmem:[#allocation18 + $0xb0] sm:$0xff]
          %v4165 = vld [vmem:[#allocation18 + $0xb8] sm:$0xff]
          %v4166 = vld [vmem:[#allocation18 + $0xc0] sm:$0xff]
          %v4167 = vld [vmem:[#allocation18 + $0xc8] sm:$0xff]
          %v4168 = vld [vmem:[#allocation18 + $0xd0] sm:$0xff]
          %v4169 = vld [vmem:[#allocation18 + $0xd8] sm:$0xff]
          %v4170 = vld [vmem:[#allocation18 + $0xe0] sm:$0xff]
          %v4171 = vld [vmem:[#allocation18 + $0xe8] sm:$0xff]
          %v4172 = vld [vmem:[#allocation18 + $0xf0] sm:$0xff]
          %v4173 = vld [vmem:[#allocation18 + $0xf8] sm:$0xff]
          %v4174 = vld [vmem:[#allocation18 + $0x100] sm:$0xff]
          %v4175 = vld [vmem:[#allocation18 + $0x108] sm:$0xff]
          %v4176 = vld [vmem:[#allocation18 + $0x110] sm:$0xff]
          %v4177 = vld [vmem:[#allocation18 + $0x118] sm:$0xff]
          %v4178 = vld [vmem:[#allocation18 + $0x120] sm:$0xff]
          %v4179 = vld [vmem:[#allocation18 + $0x128] sm:$0xff]
          %v4180 = vld [vmem:[#allocation18 + $0x130] sm:$0xff]
          %v4181 = vld [vmem:[#allocation18 + $0x138] sm:$0xff]
          %v4182 = vld [vmem:[#allocation18 + $0x140] sm:$0xff]
          %v4183 = vld [vmem:[#allocation18 + $0x148] sm:$0xff]
          %v4184 = vld [vmem:[#allocation18 + $0x150] sm:$0xff]
          %v4185 = vld [vmem:[#allocation18 + $0x158] sm:$0xff]
          %v4186 = vld [vmem:[#allocation18 + $0x160] sm:$0xff]
          %v4187 = vld [vmem:[#allocation18 + $0x168] sm:$0xff]
          %v4188 = vld [vmem:[#allocation18 + $0x170] sm:$0xff]
          %v4189 = vld [vmem:[#allocation18 + $0x178] sm:$0xff]
          %v4190 = vld [vmem:[#allocation18 + $0x180] sm:$0xff]
          %v4191 = vld [vmem:[#allocation18 + $0x188] sm:$0xff]
          %v4192 = vld [vmem:[#allocation18 + $0x190] sm:$0xff]
          %v4193 = vld [vmem:[#allocation18 + $0x198] sm:$0xff]
          %v4194 = vld [vmem:[#allocation18 + $0x1a0] sm:$0xff]
          %v4195 = vld [vmem:[#allocation18 + $0x1a8] sm:$0xff]
          %v4196 = vld [vmem:[#allocation18 + $0x1b0] sm:$0xff]
          %v4197 = vld [vmem:[#allocation18 + $0x1b8] sm:$0xff]
          %v4198 = vld [vmem:[#allocation18 + $0x1c0] sm:$0xff]
          %v4199 = vld [vmem:[#allocation18 + $0x1c8] sm:$0xff]
          %v4200 = vld [vmem:[#allocation18 + $0x1d0] sm:$0xff]
          %v4201 = vld [vmem:[#allocation18 + $0x1d8] sm:$0xff]
          %v4202 = vld [vmem:[#allocation18 + $0x1e0] sm:$0xff]
          %v4203 = vld [vmem:[#allocation18 + $0x1e8] sm:$0xff]
          %v4204 = vld [vmem:[#allocation18 + $0x1f0] sm:$0xff]
          %v4205 = vld [vmem:[#allocation18 + $0x1f8] sm:$0xff]
          %v4206 = vld [vmem:[#allocation18 + $0x200] sm:$0xff]
          %v4207 = vld [vmem:[#allocation18 + $0x208] sm:$0xff]
          %v4208 = vld [vmem:[#allocation18 + $0x210] sm:$0xff]
          %v4209 = vld [vmem:[#allocation18 + $0x218] sm:$0xff]
          %v4210 = vld [vmem:[#allocation18 + $0x220] sm:$0xff]
          %v4211 = vld [vmem:[#allocation18 + $0x228] sm:$0xff]
          %v4212 = vld [vmem:[#allocation18 + $0x230] sm:$0xff]
          %v4213 = vld [vmem:[#allocation18 + $0x238] sm:$0xff]
          %v4214 = vld [vmem:[#allocation18 + $0x240] sm:$0xff]
          %v4215 = vld [vmem:[#allocation18 + $0x248] sm:$0xff]
          %v4216 = vld [vmem:[#allocation18 + $0x250] sm:$0xff]
          %v4217 = vld [vmem:[#allocation18 + $0x258] sm:$0xff]
          %v4218 = vld [vmem:[#allocation18 + $0x260] sm:$0xff]
          %v4219 = vld [vmem:[#allocation18 + $0x268] sm:$0xff]
          %v4220 = vld [vmem:[#allocation18 + $0x270] sm:$0xff]
          %v4221 = vld [vmem:[#allocation18 + $0x278] sm:$0xff]
          %v4222 = vld [vmem:[#allocation18 + $0x280] sm:$0xff]
          %v4223 = vld [vmem:[#allocation18 + $0x288] sm:$0xff]
          %v4224 = vld [vmem:[#allocation18 + $0x290] sm:$0xff]
          %v4225 = vld [vmem:[#allocation18 + $0x298] sm:$0xff]
          %v4226 = vld [vmem:[#allocation18 + $0x2a0] sm:$0xff]
          %v4227 = vld [vmem:[#allocation18 + $0x2a8] sm:$0xff]
          %v4228 = vld [vmem:[#allocation18 + $0x2b0] sm:$0xff]
          %v4229 = vld [vmem:[#allocation18 + $0x2b8] sm:$0xff]
          %v4230 = vld [vmem:[#allocation18 + $0x2c0] sm:$0xff]
          %v4231 = vld [vmem:[#allocation18 + $0x2c8] sm:$0xff]
          %v4232 = vld [vmem:[#allocation18 + $0x2d0] sm:$0xff]
          %v4233 = vld [vmem:[#allocation18 + $0x2d8] sm:$0xff]
          %v4234 = vld [vmem:[#allocation18 + $0x2e0] sm:$0xff]
          %v4235 = vld [vmem:[#allocation18 + $0x2e8] sm:$0xff]
          %v4236 = vld [vmem:[#allocation18 + $0x2f0] sm:$0xff]
          %v4237 = vld [vmem:[#allocation18 + $0x2f8] sm:$0xff]
          %v4238 = vld [vmem:[#allocation18 + $0x300] sm:$0xff]
          %v4239 = vld [vmem:[#allocation18 + $0x308] sm:$0xff]
          %v4240 = vld [vmem:[#allocation18 + $0x310] sm:$0xff]
          %v4241 = vld [vmem:[#allocation18 + $0x318] sm:$0xff]
          %v4242 = vld [vmem:[#allocation18 + $0x320] sm:$0xff]
          %v4243 = vld [vmem:[#allocation18 + $0x328] sm:$0xff]
          %v4244 = vld [vmem:[#allocation18 + $0x330] sm:$0xff]
          %v4245 = vld [vmem:[#allocation18 + $0x338] sm:$0xff]
          %v4246 = vld [vmem:[#allocation18 + $0x340] sm:$0xff]
          %v4247 = vld [vmem:[#allocation18 + $0x348] sm:$0xff]
          %v4248 = vld [vmem:[#allocation18 + $0x350] sm:$0xff]
          %v4249 = vld [vmem:[#allocation18 + $0x358] sm:$0xff]
          %v4250 = vld [vmem:[#allocation18 + $0x360] sm:$0xff]
          %v4251 = vld [vmem:[#allocation18 + $0x368] sm:$0xff]
          %v4252 = vld [vmem:[#allocation18 + $0x370] sm:$0xff]
          %v4253 = vld [vmem:[#allocation18 + $0x378] sm:$0xff]
          %v4254 = vld [vmem:[#allocation18 + $0x380] sm:$0xff]
          %v4255 = vld [vmem:[#allocation18 + $0x388] sm:$0xff]
          %v4256 = vld [vmem:[#allocation18 + $0x390] sm:$0xff]
          %v4257 = vld [vmem:[#allocation18 + $0x398] sm:$0xff]
          %v4258 = vld [vmem:[#allocation18 + $0x3a0] sm:$0xff]
          %v4259 = vld [vmem:[#allocation18 + $0x3a8] sm:$0xff]
          %v4260 = vld [vmem:[#allocation18 + $0x3b0] sm:$0xff]
          %v4261 = vld [vmem:[#allocation18 + $0x3b8] sm:$0xff]
          %v4262 = vld [vmem:[#allocation18 + $0x3c0] sm:$0xff]
          %v4263 = vld [vmem:[#allocation18 + $0x3c8] sm:$0xff]
          %v4264 = vld [vmem:[#allocation18 + $0x3d0] sm:$0xff]
          %v4265 = vld [vmem:[#allocation18 + $0x3d8] sm:$0xff]
          %v4266 = vld [vmem:[#allocation18 + $0x3e0] sm:$0xff]
          %v4267 = vld [vmem:[#allocation18 + $0x3e8] sm:$0xff]
          %v4268 = vld [vmem:[#allocation18 + $0x3f0] sm:$0xff]
          %v4269 = vld [vmem:[#allocation18 + $0x3f8] sm:$0xff]
          %v4270 = vld [vmem:[#allocation18 + $0x400] sm:$0xff]
          %v4271 = vld [vmem:[#allocation18 + $0x408] sm:$0xff]
          %v4272 = vld [vmem:[#allocation18 + $0x410] sm:$0xff]
          %v4273 = vld [vmem:[#allocation18 + $0x418] sm:$0xff]
          %v4274 = vld [vmem:[#allocation18 + $0x420] sm:$0xff]
          %v4275 = vld [vmem:[#allocation18 + $0x428] sm:$0xff]
          %v4276 = vld [vmem:[#allocation18 + $0x430] sm:$0xff]
          %v4277 = vld [vmem:[#allocation18 + $0x438] sm:$0xff]
          %v4278 = vld [vmem:[#allocation18 + $0x440] sm:$0xff]
          %v4279 = vld [vmem:[#allocation18 + $0x448] sm:$0xff]
          %v4280 = vld [vmem:[#allocation18 + $0x450] sm:$0xff]
          %v4281 = vld [vmem:[#allocation18 + $0x458] sm:$0xff]
          %v4282 = vld [vmem:[#allocation18 + $0x460] sm:$0xff]
          %v4283 = vld [vmem:[#allocation18 + $0x468] sm:$0xff]
          %v4284 = vld [vmem:[#allocation18 + $0x470] sm:$0xff]
          %v4285 = vld [vmem:[#allocation18 + $0x478] sm:$0xff]
          %v4286 = vld [vmem:[#allocation18 + $0x480] sm:$0xff]
          %v4287 = vld [vmem:[#allocation18 + $0x488] sm:$0xff]
          %v4288 = vld [vmem:[#allocation18 + $0x490] sm:$0xff]
          %v4289 = vld [vmem:[#allocation18 + $0x498] sm:$0xff]
          %v4290 = vld [vmem:[#allocation18 + $0x4a0] sm:$0xff]
          %v4291 = vld [vmem:[#allocation18 + $0x4a8] sm:$0xff]
          %v4292 = vld [vmem:[#allocation18 + $0x4b0] sm:$0xff]
          %v4293 = vld [vmem:[#allocation18 + $0x4b8] sm:$0xff]
          %v4294 = vld [vmem:[#allocation18 + $0x4c0] sm:$0xff]
          %v4295 = vld [vmem:[#allocation18 + $0x4c8] sm:$0xff]
          %v4296 = vld [vmem:[#allocation18 + $0x4d0] sm:$0xff]
          %v4297 = vld [vmem:[#allocation18 + $0x4d8] sm:$0xff]
          %v4298 = vld [vmem:[#allocation18 + $0x4e0] sm:$0xff]
          %v4299 = vld [vmem:[#allocation18 + $0x4e8] sm:$0xff]
          %v4300 = vld [vmem:[#allocation18 + $0x4f0] sm:$0xff]
          %v4301 = vld [vmem:[#allocation18 + $0x4f8] sm:$0xff]
          %v4302 = vld [vmem:[#allocation18 + $0x500] sm:$0xff]
          %v4303 = vld [vmem:[#allocation18 + $0x508] sm:$0xff]
          %v4304 = vld [vmem:[#allocation18 + $0x510] sm:$0xff]
          %v4305 = vld [vmem:[#allocation18 + $0x518] sm:$0xff]
          %v4306 = vld [vmem:[#allocation18 + $0x520] sm:$0xff]
          %v4307 = vld [vmem:[#allocation18 + $0x528] sm:$0xff]
          %v4308 = vld [vmem:[#allocation18 + $0x530] sm:$0xff]
          %v4309 = vld [vmem:[#allocation18 + $0x538] sm:$0xff]
          %v4310 = vld [vmem:[#allocation18 + $0x540] sm:$0xff]
          %v4311 = vld [vmem:[#allocation18 + $0x548] sm:$0xff]
          %v4312 = vld [vmem:[#allocation18 + $0x550] sm:$0xff]
          %v4313 = vld [vmem:[#allocation18 + $0x558] sm:$0xff]
          %v4314 = vld [vmem:[#allocation18 + $0x560] sm:$0xff]
          %v4315 = vld [vmem:[#allocation18 + $0x568] sm:$0xff]
          %v4316 = vld [vmem:[#allocation18 + $0x570] sm:$0xff]
          %v4317 = vld [vmem:[#allocation18 + $0x578] sm:$0xff]
          %v4318 = vld [vmem:[#allocation18 + $0x580] sm:$0xff]
          %v4319 = vld [vmem:[#allocation18 + $0x588] sm:$0xff]
          %v4320 = vld [vmem:[#allocation18 + $0x590] sm:$0xff]
          %v4321 = vld [vmem:[#allocation18 + $0x598] sm:$0xff]
          %v4322 = vld [vmem:[#allocation18 + $0x5a0] sm:$0xff]
          %v4323 = vld [vmem:[#allocation18 + $0x5a8] sm:$0xff]
          %v4324 = vld [vmem:[#allocation18 + $0x5b0] sm:$0xff]
          %v4325 = vld [vmem:[#allocation18 + $0x5b8] sm:$0xff]
          %v4326 = vld [vmem:[#allocation18 + $0x5c0] sm:$0xff]
          %v4327 = vld [vmem:[#allocation18 + $0x5c8] sm:$0xff]
          %v4328 = vld [vmem:[#allocation18 + $0x5d0] sm:$0xff]
          %v4329 = vld [vmem:[#allocation18 + $0x5d8] sm:$0xff]
          %v4330 = vld [vmem:[#allocation18 + $0x5e0] sm:$0xff]
          %v4331 = vld [vmem:[#allocation18 + $0x5e8] sm:$0xff]
          %v4332 = vld [vmem:[#allocation18 + $0x5f0] sm:$0xff]
          %v4333 = vld [vmem:[#allocation18 + $0x5f8] sm:$0xff]
          %v4334 = vld [vmem:[#allocation18 + $0x600] sm:$0xff]
          %v4335 = vld [vmem:[#allocation18 + $0x608] sm:$0xff]
          %v4336 = vld [vmem:[#allocation18 + $0x610] sm:$0xff]
          %v4337 = vld [vmem:[#allocation18 + $0x618] sm:$0xff]
          %v4338 = vld [vmem:[#allocation18 + $0x620] sm:$0xff]
          %v4339 = vld [vmem:[#allocation18 + $0x628] sm:$0xff]
          %v4340 = vld [vmem:[#allocation18 + $0x630] sm:$0xff]
          %v4341 = vld [vmem:[#allocation18 + $0x638] sm:$0xff]
          %v4342 = vld [vmem:[#allocation18 + $0x640] sm:$0xff]
          %v4343 = vld [vmem:[#allocation18 + $0x648] sm:$0xff]
          %v4344 = vld [vmem:[#allocation18 + $0x650] sm:$0xff]
          %v4345 = vld [vmem:[#allocation18 + $0x658] sm:$0xff]
          %v4346 = vld [vmem:[#allocation18 + $0x660] sm:$0xff]
          %v4347 = vld [vmem:[#allocation18 + $0x668] sm:$0xff]
          %v4348 = vld [vmem:[#allocation18 + $0x670] sm:$0xff]
          %v4349 = vld [vmem:[#allocation18 + $0x678] sm:$0xff]
          %v4350 = vld [vmem:[#allocation18 + $0x680] sm:$0xff]
          %v4351 = vld [vmem:[#allocation18 + $0x688] sm:$0xff]
          %v4352 = vld [vmem:[#allocation18 + $0x690] sm:$0xff]
          %v4353 = vld [vmem:[#allocation18 + $0x698] sm:$0xff]
          %v4354 = vld [vmem:[#allocation18 + $0x6a0] sm:$0xff]
          %v4355 = vld [vmem:[#allocation18 + $0x6a8] sm:$0xff]
          %v4356 = vld [vmem:[#allocation18 + $0x6b0] sm:$0xff]
          %v4357 = vld [vmem:[#allocation18 + $0x6b8] sm:$0xff]
          %v4358 = vld [vmem:[#allocation18 + $0x6c0] sm:$0xff]
          %v4359 = vld [vmem:[#allocation18 + $0x6c8] sm:$0xff]
          %v4360 = vld [vmem:[#allocation18 + $0x6d0] sm:$0xff]
          %v4361 = vld [vmem:[#allocation18 + $0x6d8] sm:$0xff]
          %v4362 = vld [vmem:[#allocation18 + $0x6e0] sm:$0xff]
          %v4363 = vld [vmem:[#allocation18 + $0x6e8] sm:$0xff]
          %v4364 = vld [vmem:[#allocation18 + $0x6f0] sm:$0xff]
          %v4365 = vld [vmem:[#allocation18 + $0x6f8] sm:$0xff]
          %v4366 = vld [vmem:[#allocation18 + $0x700] sm:$0xff]
          %v4367 = vld [vmem:[#allocation18 + $0x708] sm:$0xff]
          %v4368 = vld [vmem:[#allocation18 + $0x710] sm:$0xff]
          %v4369 = vld [vmem:[#allocation18 + $0x718] sm:$0xff]
          %v4370 = vld [vmem:[#allocation18 + $0x720] sm:$0xff]
          %v4371 = vld [vmem:[#allocation18 + $0x728] sm:$0xff]
          %v4372 = vld [vmem:[#allocation18 + $0x730] sm:$0xff]
          %v4373 = vld [vmem:[#allocation18 + $0x738] sm:$0xff]
          %v4374 = vld [vmem:[#allocation18 + $0x740] sm:$0xff]
          %v4375 = vld [vmem:[#allocation18 + $0x748] sm:$0xff]
          %v4376 = vld [vmem:[#allocation18 + $0x750] sm:$0xff]
          %v4377 = vld [vmem:[#allocation18 + $0x758] sm:$0xff]
          %v4378 = vld [vmem:[#allocation18 + $0x760] sm:$0xff]
          %v4379 = vld [vmem:[#allocation18 + $0x768] sm:$0xff]
          %v4380 = vld [vmem:[#allocation18 + $0x770] sm:$0xff]
          %v4381 = vld [vmem:[#allocation18 + $0x778] sm:$0xff]
          %v4382 = vld [vmem:[#allocation18 + $0x780] sm:$0xff]
          %v4383 = vld [vmem:[#allocation18 + $0x788] sm:$0xff]
          %v4384 = vld [vmem:[#allocation18 + $0x790] sm:$0xff]
          %v4385 = vld [vmem:[#allocation18 + $0x798] sm:$0xff]
          %v4386 = vld [vmem:[#allocation18 + $0x7a0] sm:$0xff]
          %v4387 = vld [vmem:[#allocation18 + $0x7a8] sm:$0xff]
          %v4388 = vld [vmem:[#allocation18 + $0x7b0] sm:$0xff]
          %v4389 = vld [vmem:[#allocation18 + $0x7b8] sm:$0xff]
          %v4390 = vld [vmem:[#allocation18 + $0x7c0] sm:$0xff]
          %v4391 = vld [vmem:[#allocation18 + $0x7c8] sm:$0xff]
          %v4392 = vld [vmem:[#allocation18 + $0x7d0] sm:$0xff]
          %v4393 = vld [vmem:[#allocation18 + $0x7d8] sm:$0xff]
          %v4394 = vld [vmem:[#allocation18 + $0x7e0] sm:$0xff]
          %v4395 = vld [vmem:[#allocation18 + $0x7e8] sm:$0xff]
          %v4396 = vld [vmem:[#allocation18 + $0x7f0] sm:$0xff]
          %v4397 = vld [vmem:[#allocation18 + $0x7f8] sm:$0xff]
          %v4654 = vunpack.c.l.b16 %v4142
          %v4655 = vunpack.c.h.b16 %v4142
          %v4656 = vunpack.c.l.b16 %v4143
          %v4657 = vunpack.c.h.b16 %v4143
          %v4658 = vunpack.c.l.b16 %v4144
          %v4659 = vunpack.c.h.b16 %v4144
          %v4660 = vunpack.c.l.b16 %v4145
          %v4661 = vunpack.c.h.b16 %v4145
          %v4662 = vunpack.c.l.b16 %v4146
          %v4663 = vunpack.c.h.b16 %v4146
          %v4664 = vunpack.c.l.b16 %v4147
          %v4665 = vunpack.c.h.b16 %v4147
          %v4666 = vunpack.c.l.b16 %v4148
          %v4667 = vunpack.c.h.b16 %v4148
          %v4668 = vunpack.c.l.b16 %v4149
          %v4669 = vunpack.c.h.b16 %v4149
          %v4670 = vunpack.c.l.b16 %v4150
          %v4671 = vunpack.c.h.b16 %v4150
          %v4672 = vunpack.c.l.b16 %v4151
          %v4673 = vunpack.c.h.b16 %v4151
          %v4674 = vunpack.c.l.b16 %v4152
          %v4675 = vunpack.c.h.b16 %v4152
          %v4676 = vunpack.c.l.b16 %v4153
          %v4677 = vunpack.c.h.b16 %v4153
          %v4678 = vunpack.c.l.b16 %v4154
          %v4679 = vunpack.c.h.b16 %v4154
          %v4680 = vunpack.c.l.b16 %v4155
          %v4681 = vunpack.c.h.b16 %v4155
          %v4682 = vunpack.c.l.b16 %v4156
          %v4683 = vunpack.c.h.b16 %v4156
          %v4684 = vunpack.c.l.b16 %v4157
          %v4685 = vunpack.c.h.b16 %v4157
          %v4686 = vunpack.c.l.b16 %v4158
          %v4687 = vunpack.c.h.b16 %v4158
          %v4688 = vunpack.c.l.b16 %v4159
          %v4689 = vunpack.c.h.b16 %v4159
          %v4690 = vunpack.c.l.b16 %v4160
          %v4691 = vunpack.c.h.b16 %v4160
          %v4692 = vunpack.c.l.b16 %v4161
          %v4693 = vunpack.c.h.b16 %v4161
          %v4694 = vunpack.c.l.b16 %v4162
          %v4695 = vunpack.c.h.b16 %v4162
          %v4696 = vunpack.c.l.b16 %v4163
          %v4697 = vunpack.c.h.b16 %v4163
          %v4698 = vunpack.c.l.b16 %v4164
          %v4699 = vunpack.c.h.b16 %v4164
          %v4700 = vunpack.c.l.b16 %v4165
          %v4701 = vunpack.c.h.b16 %v4165
          %v4702 = vunpack.c.l.b16 %v4166
          %v4703 = vunpack.c.h.b16 %v4166
          %v4704 = vunpack.c.l.b16 %v4167
          %v4705 = vunpack.c.h.b16 %v4167
          %v4706 = vunpack.c.l.b16 %v4168
          %v4707 = vunpack.c.h.b16 %v4168
          %v4708 = vunpack.c.l.b16 %v4169
          %v4709 = vunpack.c.h.b16 %v4169
          %v4710 = vunpack.c.l.b16 %v4170
          %v4711 = vunpack.c.h.b16 %v4170
          %v4712 = vunpack.c.l.b16 %v4171
          %v4713 = vunpack.c.h.b16 %v4171
          %v4714 = vunpack.c.l.b16 %v4172
          %v4715 = vunpack.c.h.b16 %v4172
          %v4716 = vunpack.c.l.b16 %v4173
          %v4717 = vunpack.c.h.b16 %v4173
          %v4718 = vunpack.c.l.b16 %v4174
          %v4719 = vunpack.c.h.b16 %v4174
          %v4720 = vunpack.c.l.b16 %v4175
          %v4721 = vunpack.c.h.b16 %v4175
          %v4722 = vunpack.c.l.b16 %v4176
          %v4723 = vunpack.c.h.b16 %v4176
          %v4724 = vunpack.c.l.b16 %v4177
          %v4725 = vunpack.c.h.b16 %v4177
          %v4726 = vunpack.c.l.b16 %v4178
          %v4727 = vunpack.c.h.b16 %v4178
          %v4728 = vunpack.c.l.b16 %v4179
          %v4729 = vunpack.c.h.b16 %v4179
          %v4730 = vunpack.c.l.b16 %v4180
          %v4731 = vunpack.c.h.b16 %v4180
          %v4732 = vunpack.c.l.b16 %v4181
          %v4733 = vunpack.c.h.b16 %v4181
          %v4734 = vunpack.c.l.b16 %v4182
          %v4735 = vunpack.c.h.b16 %v4182
          %v4736 = vunpack.c.l.b16 %v4183
          %v4737 = vunpack.c.h.b16 %v4183
          %v4738 = vunpack.c.l.b16 %v4184
          %v4739 = vunpack.c.h.b16 %v4184
          %v4740 = vunpack.c.l.b16 %v4185
          %v4741 = vunpack.c.h.b16 %v4185
          %v4742 = vunpack.c.l.b16 %v4186
          %v4743 = vunpack.c.h.b16 %v4186
          %v4744 = vunpack.c.l.b16 %v4187
          %v4745 = vunpack.c.h.b16 %v4187
          %v4746 = vunpack.c.l.b16 %v4188
          %v4747 = vunpack.c.h.b16 %v4188
          %v4748 = vunpack.c.l.b16 %v4189
          %v4749 = vunpack.c.h.b16 %v4189
          %v4750 = vunpack.c.l.b16 %v4190
          %v4751 = vunpack.c.h.b16 %v4190
          %v4752 = vunpack.c.l.b16 %v4191
          %v4753 = vunpack.c.h.b16 %v4191
          %v4754 = vunpack.c.l.b16 %v4192
          %v4755 = vunpack.c.h.b16 %v4192
          %v4756 = vunpack.c.l.b16 %v4193
          %v4757 = vunpack.c.h.b16 %v4193
          %v4758 = vunpack.c.l.b16 %v4194
          %v4759 = vunpack.c.h.b16 %v4194
          %v4760 = vunpack.c.l.b16 %v4195
          %v4761 = vunpack.c.h.b16 %v4195
          %v4762 = vunpack.c.l.b16 %v4196
          %v4763 = vunpack.c.h.b16 %v4196
          %v4764 = vunpack.c.l.b16 %v4197
          %v4765 = vunpack.c.h.b16 %v4197
          %v4766 = vunpack.c.l.b16 %v4198
          %v4767 = vunpack.c.h.b16 %v4198
          %v4768 = vunpack.c.l.b16 %v4199
          %v4769 = vunpack.c.h.b16 %v4199
          %v4770 = vunpack.c.l.b16 %v4200
          %v4771 = vunpack.c.h.b16 %v4200
          %v4772 = vunpack.c.l.b16 %v4201
          %v4773 = vunpack.c.h.b16 %v4201
          %v4774 = vunpack.c.l.b16 %v4202
          %v4775 = vunpack.c.h.b16 %v4202
          %v4776 = vunpack.c.l.b16 %v4203
          %v4777 = vunpack.c.h.b16 %v4203
          %v4778 = vunpack.c.l.b16 %v4204
          %v4779 = vunpack.c.h.b16 %v4204
          %v4780 = vunpack.c.l.b16 %v4205
          %v4781 = vunpack.c.h.b16 %v4205
          %v4782 = vunpack.c.l.b16 %v4206
          %v4783 = vunpack.c.h.b16 %v4206
          %v4784 = vunpack.c.l.b16 %v4207
          %v4785 = vunpack.c.h.b16 %v4207
          %v4786 = vunpack.c.l.b16 %v4208
          %v4787 = vunpack.c.h.b16 %v4208
          %v4788 = vunpack.c.l.b16 %v4209
          %v4789 = vunpack.c.h.b16 %v4209
          %v4790 = vunpack.c.l.b16 %v4210
          %v4791 = vunpack.c.h.b16 %v4210
          %v4792 = vunpack.c.l.b16 %v4211
          %v4793 = vunpack.c.h.b16 %v4211
          %v4794 = vunpack.c.l.b16 %v4212
          %v4795 = vunpack.c.h.b16 %v4212
          %v4796 = vunpack.c.l.b16 %v4213
          %v4797 = vunpack.c.h.b16 %v4213
          %v4798 = vunpack.c.l.b16 %v4214
          %v4799 = vunpack.c.h.b16 %v4214
          %v4800 = vunpack.c.l.b16 %v4215
          %v4801 = vunpack.c.h.b16 %v4215
          %v4802 = vunpack.c.l.b16 %v4216
          %v4803 = vunpack.c.h.b16 %v4216
          %v4804 = vunpack.c.l.b16 %v4217
          %v4805 = vunpack.c.h.b16 %v4217
          %v4806 = vunpack.c.l.b16 %v4218
          %v4807 = vunpack.c.h.b16 %v4218
          %v4808 = vunpack.c.l.b16 %v4219
          %v4809 = vunpack.c.h.b16 %v4219
          %v4810 = vunpack.c.l.b16 %v4220
          %v4811 = vunpack.c.h.b16 %v4220
          %v4812 = vunpack.c.l.b16 %v4221
          %v4813 = vunpack.c.h.b16 %v4221
          %v4814 = vunpack.c.l.b16 %v4222
          %v4815 = vunpack.c.h.b16 %v4222
          %v4816 = vunpack.c.l.b16 %v4223
          %v4817 = vunpack.c.h.b16 %v4223
          %v4818 = vunpack.c.l.b16 %v4224
          %v4819 = vunpack.c.h.b16 %v4224
          %v4820 = vunpack.c.l.b16 %v4225
          %v4821 = vunpack.c.h.b16 %v4225
          %v4822 = vunpack.c.l.b16 %v4226
          %v4823 = vunpack.c.h.b16 %v4226
          %v4824 = vunpack.c.l.b16 %v4227
          %v4825 = vunpack.c.h.b16 %v4227
          %v4826 = vunpack.c.l.b16 %v4228
          %v4827 = vunpack.c.h.b16 %v4228
          %v4828 = vunpack.c.l.b16 %v4229
          %v4829 = vunpack.c.h.b16 %v4229
          %v4830 = vunpack.c.l.b16 %v4230
          %v4831 = vunpack.c.h.b16 %v4230
          %v4832 = vunpack.c.l.b16 %v4231
          %v4833 = vunpack.c.h.b16 %v4231
          %v4834 = vunpack.c.l.b16 %v4232
          %v4835 = vunpack.c.h.b16 %v4232
          %v4836 = vunpack.c.l.b16 %v4233
          %v4837 = vunpack.c.h.b16 %v4233
          %v4838 = vunpack.c.l.b16 %v4234
          %v4839 = vunpack.c.h.b16 %v4234
          %v4840 = vunpack.c.l.b16 %v4235
          %v4841 = vunpack.c.h.b16 %v4235
          %v4842 = vunpack.c.l.b16 %v4236
          %v4843 = vunpack.c.h.b16 %v4236
          %v4844 = vunpack.c.l.b16 %v4237
          %v4845 = vunpack.c.h.b16 %v4237
          %v4846 = vunpack.c.l.b16 %v4238
          %v4847 = vunpack.c.h.b16 %v4238
          %v4848 = vunpack.c.l.b16 %v4239
          %v4849 = vunpack.c.h.b16 %v4239
          %v4850 = vunpack.c.l.b16 %v4240
          %v4851 = vunpack.c.h.b16 %v4240
          %v4852 = vunpack.c.l.b16 %v4241
          %v4853 = vunpack.c.h.b16 %v4241
          %v4854 = vunpack.c.l.b16 %v4242
          %v4855 = vunpack.c.h.b16 %v4242
          %v4856 = vunpack.c.l.b16 %v4243
          %v4857 = vunpack.c.h.b16 %v4243
          %v4858 = vunpack.c.l.b16 %v4244
          %v4859 = vunpack.c.h.b16 %v4244
          %v4860 = vunpack.c.l.b16 %v4245
          %v4861 = vunpack.c.h.b16 %v4245
          %v4862 = vunpack.c.l.b16 %v4246
          %v4863 = vunpack.c.h.b16 %v4246
          %v4864 = vunpack.c.l.b16 %v4247
          %v4865 = vunpack.c.h.b16 %v4247
          %v4866 = vunpack.c.l.b16 %v4248
          %v4867 = vunpack.c.h.b16 %v4248
          %v4868 = vunpack.c.l.b16 %v4249
          %v4869 = vunpack.c.h.b16 %v4249
          %v4870 = vunpack.c.l.b16 %v4250
          %v4871 = vunpack.c.h.b16 %v4250
          %v4872 = vunpack.c.l.b16 %v4251
          %v4873 = vunpack.c.h.b16 %v4251
          %v4874 = vunpack.c.l.b16 %v4252
          %v4875 = vunpack.c.h.b16 %v4252
          %v4876 = vunpack.c.l.b16 %v4253
          %v4877 = vunpack.c.h.b16 %v4253
          %v4878 = vunpack.c.l.b16 %v4254
          %v4879 = vunpack.c.h.b16 %v4254
          %v4880 = vunpack.c.l.b16 %v4255
          %v4881 = vunpack.c.h.b16 %v4255
          %v4882 = vunpack.c.l.b16 %v4256
          %v4883 = vunpack.c.h.b16 %v4256
          %v4884 = vunpack.c.l.b16 %v4257
          %v4885 = vunpack.c.h.b16 %v4257
          %v4886 = vunpack.c.l.b16 %v4258
          %v4887 = vunpack.c.h.b16 %v4258
          %v4888 = vunpack.c.l.b16 %v4259
          %v4889 = vunpack.c.h.b16 %v4259
          %v4890 = vunpack.c.l.b16 %v4260
          %v4891 = vunpack.c.h.b16 %v4260
          %v4892 = vunpack.c.l.b16 %v4261
          %v4893 = vunpack.c.h.b16 %v4261
          %v4894 = vunpack.c.l.b16 %v4262
          %v4895 = vunpack.c.h.b16 %v4262
          %v4896 = vunpack.c.l.b16 %v4263
          %v4897 = vunpack.c.h.b16 %v4263
          %v4898 = vunpack.c.l.b16 %v4264
          %v4899 = vunpack.c.h.b16 %v4264
          %v4900 = vunpack.c.l.b16 %v4265
          %v4901 = vunpack.c.h.b16 %v4265
          %v4902 = vunpack.c.l.b16 %v4266
          %v4903 = vunpack.c.h.b16 %v4266
          %v4904 = vunpack.c.l.b16 %v4267
          %v4905 = vunpack.c.h.b16 %v4267
          %v4906 = vunpack.c.l.b16 %v4268
          %v4907 = vunpack.c.h.b16 %v4268
          %v4908 = vunpack.c.l.b16 %v4269
          %v4909 = vunpack.c.h.b16 %v4269
          %v4910 = vunpack.c.l.b16 %v4270
          %v4911 = vunpack.c.h.b16 %v4270
          %v4912 = vunpack.c.l.b16 %v4271
          %v4913 = vunpack.c.h.b16 %v4271
          %v4914 = vunpack.c.l.b16 %v4272
          %v4915 = vunpack.c.h.b16 %v4272
          %v4916 = vunpack.c.l.b16 %v4273
          %v4917 = vunpack.c.h.b16 %v4273
          %v4918 = vunpack.c.l.b16 %v4274
          %v4919 = vunpack.c.h.b16 %v4274
          %v4920 = vunpack.c.l.b16 %v4275
          %v4921 = vunpack.c.h.b16 %v4275
          %v4922 = vunpack.c.l.b16 %v4276
          %v4923 = vunpack.c.h.b16 %v4276
          %v4924 = vunpack.c.l.b16 %v4277
          %v4925 = vunpack.c.h.b16 %v4277
          %v4926 = vunpack.c.l.b16 %v4278
          %v4927 = vunpack.c.h.b16 %v4278
          %v4928 = vunpack.c.l.b16 %v4279
          %v4929 = vunpack.c.h.b16 %v4279
          %v4930 = vunpack.c.l.b16 %v4280
          %v4931 = vunpack.c.h.b16 %v4280
          %v4932 = vunpack.c.l.b16 %v4281
          %v4933 = vunpack.c.h.b16 %v4281
          %v4934 = vunpack.c.l.b16 %v4282
          %v4935 = vunpack.c.h.b16 %v4282
          %v4936 = vunpack.c.l.b16 %v4283
          %v4937 = vunpack.c.h.b16 %v4283
          %v4938 = vunpack.c.l.b16 %v4284
          %v4939 = vunpack.c.h.b16 %v4284
          %v4940 = vunpack.c.l.b16 %v4285
          %v4941 = vunpack.c.h.b16 %v4285
          %v4942 = vunpack.c.l.b16 %v4286
          %v4943 = vunpack.c.h.b16 %v4286
          %v4944 = vunpack.c.l.b16 %v4287
          %v4945 = vunpack.c.h.b16 %v4287
          %v4946 = vunpack.c.l.b16 %v4288
          %v4947 = vunpack.c.h.b16 %v4288
          %v4948 = vunpack.c.l.b16 %v4289
          %v4949 = vunpack.c.h.b16 %v4289
          %v4950 = vunpack.c.l.b16 %v4290
          %v4951 = vunpack.c.h.b16 %v4290
          %v4952 = vunpack.c.l.b16 %v4291
          %v4953 = vunpack.c.h.b16 %v4291
          %v4954 = vunpack.c.l.b16 %v4292
          %v4955 = vunpack.c.h.b16 %v4292
          %v4956 = vunpack.c.l.b16 %v4293
          %v4957 = vunpack.c.h.b16 %v4293
          %v4958 = vunpack.c.l.b16 %v4294
          %v4959 = vunpack.c.h.b16 %v4294
          %v4960 = vunpack.c.l.b16 %v4295
          %v4961 = vunpack.c.h.b16 %v4295
          %v4962 = vunpack.c.l.b16 %v4296
          %v4963 = vunpack.c.h.b16 %v4296
          %v4964 = vunpack.c.l.b16 %v4297
          %v4965 = vunpack.c.h.b16 %v4297
          %v4966 = vunpack.c.l.b16 %v4298
          %v4967 = vunpack.c.h.b16 %v4298
          %v4968 = vunpack.c.l.b16 %v4299
          %v4969 = vunpack.c.h.b16 %v4299
          %v4970 = vunpack.c.l.b16 %v4300
          %v4971 = vunpack.c.h.b16 %v4300
          %v4972 = vunpack.c.l.b16 %v4301
          %v4973 = vunpack.c.h.b16 %v4301
          %v4974 = vunpack.c.l.b16 %v4302
          %v4975 = vunpack.c.h.b16 %v4302
          %v4976 = vunpack.c.l.b16 %v4303
          %v4977 = vunpack.c.h.b16 %v4303
          %v4978 = vunpack.c.l.b16 %v4304
          %v4979 = vunpack.c.h.b16 %v4304
          %v4980 = vunpack.c.l.b16 %v4305
          %v4981 = vunpack.c.h.b16 %v4305
          %v4982 = vunpack.c.l.b16 %v4306
          %v4983 = vunpack.c.h.b16 %v4306
          %v4984 = vunpack.c.l.b16 %v4307
          %v4985 = vunpack.c.h.b16 %v4307
          %v4986 = vunpack.c.l.b16 %v4308
          %v4987 = vunpack.c.h.b16 %v4308
          %v4988 = vunpack.c.l.b16 %v4309
          %v4989 = vunpack.c.h.b16 %v4309
          %v4990 = vunpack.c.l.b16 %v4310
          %v4991 = vunpack.c.h.b16 %v4310
          %v4992 = vunpack.c.l.b16 %v4311
          %v4993 = vunpack.c.h.b16 %v4311
          %v4994 = vunpack.c.l.b16 %v4312
          %v4995 = vunpack.c.h.b16 %v4312
          %v4996 = vunpack.c.l.b16 %v4313
          %v4997 = vunpack.c.h.b16 %v4313
          %v4998 = vunpack.c.l.b16 %v4314
          %v4999 = vunpack.c.h.b16 %v4314
          %v5000 = vunpack.c.l.b16 %v4315
          %v5001 = vunpack.c.h.b16 %v4315
          %v5002 = vunpack.c.l.b16 %v4316
          %v5003 = vunpack.c.h.b16 %v4316
          %v5004 = vunpack.c.l.b16 %v4317
          %v5005 = vunpack.c.h.b16 %v4317
          %v5006 = vunpack.c.l.b16 %v4318
          %v5007 = vunpack.c.h.b16 %v4318
          %v5008 = vunpack.c.l.b16 %v4319
          %v5009 = vunpack.c.h.b16 %v4319
          %v5010 = vunpack.c.l.b16 %v4320
          %v5011 = vunpack.c.h.b16 %v4320
          %v5012 = vunpack.c.l.b16 %v4321
          %v5013 = vunpack.c.h.b16 %v4321
          %v5014 = vunpack.c.l.b16 %v4322
          %v5015 = vunpack.c.h.b16 %v4322
          %v5016 = vunpack.c.l.b16 %v4323
          %v5017 = vunpack.c.h.b16 %v4323
          %v5018 = vunpack.c.l.b16 %v4324
          %v5019 = vunpack.c.h.b16 %v4324
          %v5020 = vunpack.c.l.b16 %v4325
          %v5021 = vunpack.c.h.b16 %v4325
          %v5022 = vunpack.c.l.b16 %v4326
          %v5023 = vunpack.c.h.b16 %v4326
          %v5024 = vunpack.c.l.b16 %v4327
          %v5025 = vunpack.c.h.b16 %v4327
          %v5026 = vunpack.c.l.b16 %v4328
          %v5027 = vunpack.c.h.b16 %v4328
          %v5028 = vunpack.c.l.b16 %v4329
          %v5029 = vunpack.c.h.b16 %v4329
          %v5030 = vunpack.c.l.b16 %v4330
          %v5031 = vunpack.c.h.b16 %v4330
          %v5032 = vunpack.c.l.b16 %v4331
          %v5033 = vunpack.c.h.b16 %v4331
          %v5034 = vunpack.c.l.b16 %v4332
          %v5035 = vunpack.c.h.b16 %v4332
          %v5036 = vunpack.c.l.b16 %v4333
          %v5037 = vunpack.c.h.b16 %v4333
          %v5038 = vunpack.c.l.b16 %v4334
          %v5039 = vunpack.c.h.b16 %v4334
          %v5040 = vunpack.c.l.b16 %v4335
          %v5041 = vunpack.c.h.b16 %v4335
          %v5042 = vunpack.c.l.b16 %v4336
          %v5043 = vunpack.c.h.b16 %v4336
          %v5044 = vunpack.c.l.b16 %v4337
          %v5045 = vunpack.c.h.b16 %v4337
          %v5046 = vunpack.c.l.b16 %v4338
          %v5047 = vunpack.c.h.b16 %v4338
          %v5048 = vunpack.c.l.b16 %v4339
          %v5049 = vunpack.c.h.b16 %v4339
          %v5050 = vunpack.c.l.b16 %v4340
          %v5051 = vunpack.c.h.b16 %v4340
          %v5052 = vunpack.c.l.b16 %v4341
          %v5053 = vunpack.c.h.b16 %v4341
          %v5054 = vunpack.c.l.b16 %v4342
          %v5055 = vunpack.c.h.b16 %v4342
          %v5056 = vunpack.c.l.b16 %v4343
          %v5057 = vunpack.c.h.b16 %v4343
          %v5058 = vunpack.c.l.b16 %v4344
          %v5059 = vunpack.c.h.b16 %v4344
          %v5060 = vunpack.c.l.b16 %v4345
          %v5061 = vunpack.c.h.b16 %v4345
          %v5062 = vunpack.c.l.b16 %v4346
          %v5063 = vunpack.c.h.b16 %v4346
          %v5064 = vunpack.c.l.b16 %v4347
          %v5065 = vunpack.c.h.b16 %v4347
          %v5066 = vunpack.c.l.b16 %v4348
          %v5067 = vunpack.c.h.b16 %v4348
          %v5068 = vunpack.c.l.b16 %v4349
          %v5069 = vunpack.c.h.b16 %v4349
          %v5070 = vunpack.c.l.b16 %v4350
          %v5071 = vunpack.c.h.b16 %v4350
          %v5072 = vunpack.c.l.b16 %v4351
          %v5073 = vunpack.c.h.b16 %v4351
          %v5074 = vunpack.c.l.b16 %v4352
          %v5075 = vunpack.c.h.b16 %v4352
          %v5076 = vunpack.c.l.b16 %v4353
          %v5077 = vunpack.c.h.b16 %v4353
          %v5078 = vunpack.c.l.b16 %v4354
          %v5079 = vunpack.c.h.b16 %v4354
          %v5080 = vunpack.c.l.b16 %v4355
          %v5081 = vunpack.c.h.b16 %v4355
          %v5082 = vunpack.c.l.b16 %v4356
          %v5083 = vunpack.c.h.b16 %v4356
          %v5084 = vunpack.c.l.b16 %v4357
          %v5085 = vunpack.c.h.b16 %v4357
          %v5086 = vunpack.c.l.b16 %v4358
          %v5087 = vunpack.c.h.b16 %v4358
          %v5088 = vunpack.c.l.b16 %v4359
          %v5089 = vunpack.c.h.b16 %v4359
          %v5090 = vunpack.c.l.b16 %v4360
          %v5091 = vunpack.c.h.b16 %v4360
          %v5092 = vunpack.c.l.b16 %v4361
          %v5093 = vunpack.c.h.b16 %v4361
          %v5094 = vunpack.c.l.b16 %v4362
          %v5095 = vunpack.c.h.b16 %v4362
          %v5096 = vunpack.c.l.b16 %v4363
          %v5097 = vunpack.c.h.b16 %v4363
          %v5098 = vunpack.c.l.b16 %v4364
          %v5099 = vunpack.c.h.b16 %v4364
          %v5100 = vunpack.c.l.b16 %v4365
          %v5101 = vunpack.c.h.b16 %v4365
          %v5102 = vunpack.c.l.b16 %v4366
          %v5103 = vunpack.c.h.b16 %v4366
          %v5104 = vunpack.c.l.b16 %v4367
          %v5105 = vunpack.c.h.b16 %v4367
          %v5106 = vunpack.c.l.b16 %v4368
          %v5107 = vunpack.c.h.b16 %v4368
          %v5108 = vunpack.c.l.b16 %v4369
          %v5109 = vunpack.c.h.b16 %v4369
          %v5110 = vunpack.c.l.b16 %v4370
          %v5111 = vunpack.c.h.b16 %v4370
          %v5112 = vunpack.c.l.b16 %v4371
          %v5113 = vunpack.c.h.b16 %v4371
          %v5114 = vunpack.c.l.b16 %v4372
          %v5115 = vunpack.c.h.b16 %v4372
          %v5116 = vunpack.c.l.b16 %v4373
          %v5117 = vunpack.c.h.b16 %v4373
          %v5118 = vunpack.c.l.b16 %v4374
          %v5119 = vunpack.c.h.b16 %v4374
          %v5120 = vunpack.c.l.b16 %v4375
          %v5121 = vunpack.c.h.b16 %v4375
          %v5122 = vunpack.c.l.b16 %v4376
          %v5123 = vunpack.c.h.b16 %v4376
          %v5124 = vunpack.c.l.b16 %v4377
          %v5125 = vunpack.c.h.b16 %v4377
          %v5126 = vunpack.c.l.b16 %v4378
          %v5127 = vunpack.c.h.b16 %v4378
          %v5128 = vunpack.c.l.b16 %v4379
          %v5129 = vunpack.c.h.b16 %v4379
          %v5130 = vunpack.c.l.b16 %v4380
          %v5131 = vunpack.c.h.b16 %v4380
          %v5132 = vunpack.c.l.b16 %v4381
          %v5133 = vunpack.c.h.b16 %v4381
          %v5134 = vunpack.c.l.b16 %v4382
          %v5135 = vunpack.c.h.b16 %v4382
          %v5136 = vunpack.c.l.b16 %v4383
          %v5137 = vunpack.c.h.b16 %v4383
          %v5138 = vunpack.c.l.b16 %v4384
          %v5139 = vunpack.c.h.b16 %v4384
          %v5140 = vunpack.c.l.b16 %v4385
          %v5141 = vunpack.c.h.b16 %v4385
          %v5142 = vunpack.c.l.b16 %v4386
          %v5143 = vunpack.c.h.b16 %v4386
          %v5144 = vunpack.c.l.b16 %v4387
          %v5145 = vunpack.c.h.b16 %v4387
          %v5146 = vunpack.c.l.b16 %v4388
          %v5147 = vunpack.c.h.b16 %v4388
          %v5148 = vunpack.c.l.b16 %v4389
          %v5149 = vunpack.c.h.b16 %v4389
          %v5150 = vunpack.c.l.b16 %v4390
          %v5151 = vunpack.c.h.b16 %v4390
          %v5152 = vunpack.c.l.b16 %v4391
          %v5153 = vunpack.c.h.b16 %v4391
          %v5154 = vunpack.c.l.b16 %v4392
          %v5155 = vunpack.c.h.b16 %v4392
          %v5156 = vunpack.c.l.b16 %v4393
          %v5157 = vunpack.c.h.b16 %v4393
          %v5158 = vunpack.c.l.b16 %v4394
          %v5159 = vunpack.c.h.b16 %v4394
          %v5160 = vunpack.c.l.b16 %v4395
          %v5161 = vunpack.c.h.b16 %v4395
          %v5162 = vunpack.c.l.b16 %v4396
          %v5163 = vunpack.c.h.b16 %v4396
          %v5164 = vunpack.c.l.b16 %v4397
          %v5165 = vunpack.c.h.b16 %v4397
          %v5166 = vpack.c.b16 %v4658, %v4654
          %v5167 = vpack.c.b16 %v4659, %v4655
          %v5168 = vpack.c.b16 %v4660, %v4656
          %v5169 = vpack.c.b16 %v4661, %v4657
          %v5170 = vpack.c.b16 %v4666, %v4662
          %v5171 = vpack.c.b16 %v4667, %v4663
          %v5172 = vpack.c.b16 %v4668, %v4664
          %v5173 = vpack.c.b16 %v4669, %v4665
          %v5174 = vpack.c.b16 %v4674, %v4670
          %v5175 = vpack.c.b16 %v4675, %v4671
          %v5176 = vpack.c.b16 %v4676, %v4672
          %v5177 = vpack.c.b16 %v4677, %v4673
          %v5178 = vpack.c.b16 %v4682, %v4678
          %v5179 = vpack.c.b16 %v4683, %v4679
          %v5180 = vpack.c.b16 %v4684, %v4680
          %v5181 = vpack.c.b16 %v4685, %v4681
          %v5182 = vpack.c.b16 %v4690, %v4686
          %v5183 = vpack.c.b16 %v4691, %v4687
          %v5184 = vpack.c.b16 %v4692, %v4688
          %v5185 = vpack.c.b16 %v4693, %v4689
          %v5186 = vpack.c.b16 %v4698, %v4694
          %v5187 = vpack.c.b16 %v4699, %v4695
          %v5188 = vpack.c.b16 %v4700, %v4696
          %v5189 = vpack.c.b16 %v4701, %v4697
          %v5190 = vpack.c.b16 %v4706, %v4702
          %v5191 = vpack.c.b16 %v4707, %v4703
          %v5192 = vpack.c.b16 %v4708, %v4704
          %v5193 = vpack.c.b16 %v4709, %v4705
          %v5194 = vpack.c.b16 %v4714, %v4710
          %v5195 = vpack.c.b16 %v4715, %v4711
          %v5196 = vpack.c.b16 %v4716, %v4712
          %v5197 = vpack.c.b16 %v4717, %v4713
          %v5198 = vpack.c.b16 %v4722, %v4718
          %v5199 = vpack.c.b16 %v4723, %v4719
          %v5200 = vpack.c.b16 %v4724, %v4720
          %v5201 = vpack.c.b16 %v4725, %v4721
          %v5202 = vpack.c.b16 %v4730, %v4726
          %v5203 = vpack.c.b16 %v4731, %v4727
          %v5204 = vpack.c.b16 %v4732, %v4728
          %v5205 = vpack.c.b16 %v4733, %v4729
          %v5206 = vpack.c.b16 %v4738, %v4734
          %v5207 = vpack.c.b16 %v4739, %v4735
          %v5208 = vpack.c.b16 %v4740, %v4736
          %v5209 = vpack.c.b16 %v4741, %v4737
          %v5210 = vpack.c.b16 %v4746, %v4742
          %v5211 = vpack.c.b16 %v4747, %v4743
          %v5212 = vpack.c.b16 %v4748, %v4744
          %v5213 = vpack.c.b16 %v4749, %v4745
          %v5214 = vpack.c.b16 %v4754, %v4750
          %v5215 = vpack.c.b16 %v4755, %v4751
          %v5216 = vpack.c.b16 %v4756, %v4752
          %v5217 = vpack.c.b16 %v4757, %v4753
          %v5218 = vpack.c.b16 %v4762, %v4758
          %v5219 = vpack.c.b16 %v4763, %v4759
          %v5220 = vpack.c.b16 %v4764, %v4760
          %v5221 = vpack.c.b16 %v4765, %v4761
          %v5222 = vpack.c.b16 %v4770, %v4766
          %v5223 = vpack.c.b16 %v4771, %v4767
          %v5224 = vpack.c.b16 %v4772, %v4768
          %v5225 = vpack.c.b16 %v4773, %v4769
          %v5226 = vpack.c.b16 %v4778, %v4774
          %v5227 = vpack.c.b16 %v4779, %v4775
          %v5228 = vpack.c.b16 %v4780, %v4776
          %v5229 = vpack.c.b16 %v4781, %v4777
          %v5230 = vpack.c.b16 %v4786, %v4782
          %v5231 = vpack.c.b16 %v4787, %v4783
          %v5232 = vpack.c.b16 %v4788, %v4784
          %v5233 = vpack.c.b16 %v4789, %v4785
          %v5234 = vpack.c.b16 %v4794, %v4790
          %v5235 = vpack.c.b16 %v4795, %v4791
          %v5236 = vpack.c.b16 %v4796, %v4792
          %v5237 = vpack.c.b16 %v4797, %v4793
          %v5238 = vpack.c.b16 %v4802, %v4798
          %v5239 = vpack.c.b16 %v4803, %v4799
          %v5240 = vpack.c.b16 %v4804, %v4800
          %v5241 = vpack.c.b16 %v4805, %v4801
          %v5242 = vpack.c.b16 %v4810, %v4806
          %v5243 = vpack.c.b16 %v4811, %v4807
          %v5244 = vpack.c.b16 %v4812, %v4808
          %v5245 = vpack.c.b16 %v4813, %v4809
          %v5246 = vpack.c.b16 %v4818, %v4814
          %v5247 = vpack.c.b16 %v4819, %v4815
          %v5248 = vpack.c.b16 %v4820, %v4816
          %v5249 = vpack.c.b16 %v4821, %v4817
          %v5250 = vpack.c.b16 %v4826, %v4822
          %v5251 = vpack.c.b16 %v4827, %v4823
          %v5252 = vpack.c.b16 %v4828, %v4824
          %v5253 = vpack.c.b16 %v4829, %v4825
          %v5254 = vpack.c.b16 %v4834, %v4830
          %v5255 = vpack.c.b16 %v4835, %v4831
          %v5256 = vpack.c.b16 %v4836, %v4832
          %v5257 = vpack.c.b16 %v4837, %v4833
          %v5258 = vpack.c.b16 %v4842, %v4838
          %v5259 = vpack.c.b16 %v4843, %v4839
          %v5260 = vpack.c.b16 %v4844, %v4840
          %v5261 = vpack.c.b16 %v4845, %v4841
          %v5262 = vpack.c.b16 %v4850, %v4846
          %v5263 = vpack.c.b16 %v4851, %v4847
          %v5264 = vpack.c.b16 %v4852, %v4848
          %v5265 = vpack.c.b16 %v4853, %v4849
          %v5266 = vpack.c.b16 %v4858, %v4854
          %v5267 = vpack.c.b16 %v4859, %v4855
          %v5268 = vpack.c.b16 %v4860, %v4856
          %v5269 = vpack.c.b16 %v4861, %v4857
          %v5270 = vpack.c.b16 %v4866, %v4862
          %v5271 = vpack.c.b16 %v4867, %v4863
          %v5272 = vpack.c.b16 %v4868, %v4864
          %v5273 = vpack.c.b16 %v4869, %v4865
          %v5274 = vpack.c.b16 %v4874, %v4870
          %v5275 = vpack.c.b16 %v4875, %v4871
          %v5276 = vpack.c.b16 %v4876, %v4872
          %v5277 = vpack.c.b16 %v4877, %v4873
          %v5278 = vpack.c.b16 %v4882, %v4878
          %v5279 = vpack.c.b16 %v4883, %v4879
          %v5280 = vpack.c.b16 %v4884, %v4880
          %v5281 = vpack.c.b16 %v4885, %v4881
          %v5282 = vpack.c.b16 %v4890, %v4886
          %v5283 = vpack.c.b16 %v4891, %v4887
          %v5284 = vpack.c.b16 %v4892, %v4888
          %v5285 = vpack.c.b16 %v4893, %v4889
          %v5286 = vpack.c.b16 %v4898, %v4894
          %v5287 = vpack.c.b16 %v4899, %v4895
          %v5288 = vpack.c.b16 %v4900, %v4896
          %v5289 = vpack.c.b16 %v4901, %v4897
          %v5290 = vpack.c.b16 %v4906, %v4902
          %v5291 = vpack.c.b16 %v4907, %v4903
          %v5292 = vpack.c.b16 %v4908, %v4904
          %v5293 = vpack.c.b16 %v4909, %v4905
          %v5294 = vpack.c.b16 %v4914, %v4910
          %v5295 = vpack.c.b16 %v4915, %v4911
          %v5296 = vpack.c.b16 %v4916, %v4912
          %v5297 = vpack.c.b16 %v4917, %v4913
          %v5298 = vpack.c.b16 %v4922, %v4918
          %v5299 = vpack.c.b16 %v4923, %v4919
          %v5300 = vpack.c.b16 %v4924, %v4920
          %v5301 = vpack.c.b16 %v4925, %v4921
          %v5302 = vpack.c.b16 %v4930, %v4926
          %v5303 = vpack.c.b16 %v4931, %v4927
          %v5304 = vpack.c.b16 %v4932, %v4928
          %v5305 = vpack.c.b16 %v4933, %v4929
          %v5306 = vpack.c.b16 %v4938, %v4934
          %v5307 = vpack.c.b16 %v4939, %v4935
          %v5308 = vpack.c.b16 %v4940, %v4936
          %v5309 = vpack.c.b16 %v4941, %v4937
          %v5310 = vpack.c.b16 %v4946, %v4942
          %v5311 = vpack.c.b16 %v4947, %v4943
          %v5312 = vpack.c.b16 %v4948, %v4944
          %v5313 = vpack.c.b16 %v4949, %v4945
          %v5314 = vpack.c.b16 %v4954, %v4950
          %v5315 = vpack.c.b16 %v4955, %v4951
          %v5316 = vpack.c.b16 %v4956, %v4952
          %v5317 = vpack.c.b16 %v4957, %v4953
          %v5318 = vpack.c.b16 %v4962, %v4958
          %v5319 = vpack.c.b16 %v4963, %v4959
          %v5320 = vpack.c.b16 %v4964, %v4960
          %v5321 = vpack.c.b16 %v4965, %v4961
          %v5322 = vpack.c.b16 %v4970, %v4966
          %v5323 = vpack.c.b16 %v4971, %v4967
          %v5324 = vpack.c.b16 %v4972, %v4968
          %v5325 = vpack.c.b16 %v4973, %v4969
          %v5326 = vpack.c.b16 %v4978, %v4974
          %v5327 = vpack.c.b16 %v4979, %v4975
          %v5328 = vpack.c.b16 %v4980, %v4976
          %v5329 = vpack.c.b16 %v4981, %v4977
          %v5330 = vpack.c.b16 %v4986, %v4982
          %v5331 = vpack.c.b16 %v4987, %v4983
          %v5332 = vpack.c.b16 %v4988, %v4984
          %v5333 = vpack.c.b16 %v4989, %v4985
          %v5334 = vpack.c.b16 %v4994, %v4990
          %v5335 = vpack.c.b16 %v4995, %v4991
          %v5336 = vpack.c.b16 %v4996, %v4992
          %v5337 = vpack.c.b16 %v4997, %v4993
          %v5338 = vpack.c.b16 %v5002, %v4998
          %v5339 = vpack.c.b16 %v5003, %v4999
          %v5340 = vpack.c.b16 %v5004, %v5000
          %v5341 = vpack.c.b16 %v5005, %v5001
          %v5342 = vpack.c.b16 %v5010, %v5006
          %v5343 = vpack.c.b16 %v5011, %v5007
          %v5344 = vpack.c.b16 %v5012, %v5008
          %v5345 = vpack.c.b16 %v5013, %v5009
          %v5346 = vpack.c.b16 %v5018, %v5014
          %v5347 = vpack.c.b16 %v5019, %v5015
          %v5348 = vpack.c.b16 %v5020, %v5016
          %v5349 = vpack.c.b16 %v5021, %v5017
          %v5350 = vpack.c.b16 %v5026, %v5022
          %v5351 = vpack.c.b16 %v5027, %v5023
          %v5352 = vpack.c.b16 %v5028, %v5024
          %v5353 = vpack.c.b16 %v5029, %v5025
          %v5354 = vpack.c.b16 %v5034, %v5030
          %v5355 = vpack.c.b16 %v5035, %v5031
          %v5356 = vpack.c.b16 %v5036, %v5032
          %v5357 = vpack.c.b16 %v5037, %v5033
          %v5358 = vpack.c.b16 %v5042, %v5038
          %v5359 = vpack.c.b16 %v5043, %v5039
          %v5360 = vpack.c.b16 %v5044, %v5040
          %v5361 = vpack.c.b16 %v5045, %v5041
          %v5362 = vpack.c.b16 %v5050, %v5046
          %v5363 = vpack.c.b16 %v5051, %v5047
          %v5364 = vpack.c.b16 %v5052, %v5048
          %v5365 = vpack.c.b16 %v5053, %v5049
          %v5366 = vpack.c.b16 %v5058, %v5054
          %v5367 = vpack.c.b16 %v5059, %v5055
          %v5368 = vpack.c.b16 %v5060, %v5056
          %v5369 = vpack.c.b16 %v5061, %v5057
          %v5370 = vpack.c.b16 %v5066, %v5062
          %v5371 = vpack.c.b16 %v5067, %v5063
          %v5372 = vpack.c.b16 %v5068, %v5064
          %v5373 = vpack.c.b16 %v5069, %v5065
          %v5374 = vpack.c.b16 %v5074, %v5070
          %v5375 = vpack.c.b16 %v5075, %v5071
          %v5376 = vpack.c.b16 %v5076, %v5072
          %v5377 = vpack.c.b16 %v5077, %v5073
          %v5378 = vpack.c.b16 %v5082, %v5078
          %v5379 = vpack.c.b16 %v5083, %v5079
          %v5380 = vpack.c.b16 %v5084, %v5080
          %v5381 = vpack.c.b16 %v5085, %v5081
          %v5382 = vpack.c.b16 %v5090, %v5086
          %v5383 = vpack.c.b16 %v5091, %v5087
          %v5384 = vpack.c.b16 %v5092, %v5088
          %v5385 = vpack.c.b16 %v5093, %v5089
          %v5386 = vpack.c.b16 %v5098, %v5094
          %v5387 = vpack.c.b16 %v5099, %v5095
          %v5388 = vpack.c.b16 %v5100, %v5096
          %v5389 = vpack.c.b16 %v5101, %v5097
          %v5390 = vpack.c.b16 %v5106, %v5102
          %v5391 = vpack.c.b16 %v5107, %v5103
          %v5392 = vpack.c.b16 %v5108, %v5104
          %v5393 = vpack.c.b16 %v5109, %v5105
          %v5394 = vpack.c.b16 %v5114, %v5110
          %v5395 = vpack.c.b16 %v5115, %v5111
          %v5396 = vpack.c.b16 %v5116, %v5112
          %v5397 = vpack.c.b16 %v5117, %v5113
          %v5398 = vpack.c.b16 %v5122, %v5118
          %v5399 = vpack.c.b16 %v5123, %v5119
          %v5400 = vpack.c.b16 %v5124, %v5120
          %v5401 = vpack.c.b16 %v5125, %v5121
          %v5402 = vpack.c.b16 %v5130, %v5126
          %v5403 = vpack.c.b16 %v5131, %v5127
          %v5404 = vpack.c.b16 %v5132, %v5128
          %v5405 = vpack.c.b16 %v5133, %v5129
          %v5406 = vpack.c.b16 %v5138, %v5134
          %v5407 = vpack.c.b16 %v5139, %v5135
          %v5408 = vpack.c.b16 %v5140, %v5136
          %v5409 = vpack.c.b16 %v5141, %v5137
          %v5410 = vpack.c.b16 %v5146, %v5142
          %v5411 = vpack.c.b16 %v5147, %v5143
          %v5412 = vpack.c.b16 %v5148, %v5144
          %v5413 = vpack.c.b16 %v5149, %v5145
          %v5414 = vpack.c.b16 %v5154, %v5150
          %v5415 = vpack.c.b16 %v5155, %v5151
          %v5416 = vpack.c.b16 %v5156, %v5152
          %v5417 = vpack.c.b16 %v5157, %v5153
          %v5418 = vpack.c.b16 %v5162, %v5158
          %v5419 = vpack.c.b16 %v5163, %v5159
          %v5420 = vpack.c.b16 %v5164, %v5160
          %v5421 = vpack.c.b16 %v5165, %v5161
          %5678 = vmatprep.subr.bf16.mxu0 %v5167
          %5679 = vmatpush1.bf16.msra.mxu0 %v5166
          %5680 = vmatprep.subr.bf16.mxu0 %v5171
          %5681 = vmatpush1.bf16.msra.mxu0 %v5170
          %5682 = vmatprep.subr.bf16.mxu0 %v5175
          %5683 = vmatpush1.bf16.msra.mxu0 %v5174
          %5684 = vmatprep.subr.bf16.mxu0 %v5179
          %5685 = vmatpush1.bf16.msra.mxu0 %v5178
          %5686 = vmatprep.subr.bf16.mxu0 %v5183
          %5687 = vmatpush1.bf16.msra.mxu0 %v5182
          %5688 = vmatprep.subr.bf16.mxu0 %v5187
          %5689 = vmatpush1.bf16.msra.mxu0 %v5186
          %5690 = vmatprep.subr.bf16.mxu0 %v5191
          %5691 = vmatpush1.bf16.msra.mxu0 %v5190
          %5692 = vmatprep.subr.bf16.mxu0 %v5195
          %5693 = vmatpush1.bf16.msra.mxu0 %v5194
          %5694 = vmatprep.subr.bf16.mxu0 %v5199
          %5695 = vmatpush1.bf16.msra.mxu0 %v5198
          %5696 = vmatprep.subr.bf16.mxu0 %v5203
          %5697 = vmatpush1.bf16.msra.mxu0 %v5202
          %5698 = vmatprep.subr.bf16.mxu0 %v5207
          %5699 = vmatpush1.bf16.msra.mxu0 %v5206
          %5700 = vmatprep.subr.bf16.mxu0 %v5211
          %5701 = vmatpush1.bf16.msra.mxu0 %v5210
          %5702 = vmatprep.subr.bf16.mxu0 %v5215
          %5703 = vmatpush1.bf16.msra.mxu0 %v5214
          %5704 = vmatprep.subr.bf16.mxu0 %v5219
          %5705 = vmatpush1.bf16.msra.mxu0 %v5218
          %5706 = vmatprep.subr.bf16.mxu0 %v5223
          %5707 = vmatpush1.bf16.msra.mxu0 %v5222
          %5708 = vmatprep.subr.bf16.mxu0 %v5227
          %5709 = vmatpush1.bf16.msra.mxu0 %v5226
          %5710 = vmatprep.mubr.bf16.mxu0 %v4135
          %5711 = vmatmul.mubr.bf16.gmra.mrb[0].mxu0 %v4134
          %v5712 = vpop.f32.mrb[0].mxu0
          %v5713 = vadd.f32 0.0, %v5712
          %v5714 = vpop.f32.mrb[0].mxu0
          %v5715 = vadd.f32 0.0, %v5714
          %v5716 = vpop.f32.mrb[0].mxu0
          %v5717 = vpop.f32.mrb[0].mxu0
          %5718 = vdwg.mxu0
          %5719 = vmatprep.subr.bf16.mxu0 %v5231
          %5720 = vmatpush1.bf16.msra.mxu0 %v5230
          %5721 = vmatprep.subr.bf16.mxu0 %v5235
          %5722 = vmatpush1.bf16.msra.mxu0 %v5234
          %5723 = vmatprep.subr.bf16.mxu0 %v5239
          %5724 = vmatpush1.bf16.msra.mxu0 %v5238
          %5725 = vmatprep.subr.bf16.mxu0 %v5243
          %5726 = vmatpush1.bf16.msra.mxu0 %v5242
          %5727 = vmatprep.subr.bf16.mxu0 %v5247
          %5728 = vmatpush1.bf16.msra.mxu0 %v5246
          %5729 = vmatprep.subr.bf16.mxu0 %v5251
          %5730 = vmatpush1.bf16.msra.mxu0 %v5250
          %5731 = vmatprep.subr.bf16.mxu0 %v5255
          %5732 = vmatpush1.bf16.msra.mxu0 %v5254
          %5733 = vmatprep.subr.bf16.mxu0 %v5259
          %5734 = vmatpush1.bf16.msra.mxu0 %v5258
          %5735 = vmatprep.subr.bf16.mxu0 %v5263
          %5736 = vmatpush1.bf16.msra.mxu0 %v5262
          %5737 = vmatprep.subr.bf16.mxu0 %v5267
          %5738 = vmatpush1.bf16.msra.mxu0 %v5266
          %5739 = vmatprep.subr.bf16.mxu0 %v5271
          %5740 = vmatpush1.bf16.msra.mxu0 %v5270
          %5741 = vmatprep.subr.bf16.mxu0 %v5275
          %5742 = vmatpush1.bf16.msra.mxu0 %v5274
          %5743 = vmatprep.subr.bf16.mxu0 %v5279
          %5744 = vmatpush1.bf16.msra.mxu0 %v5278
          %5745 = vmatprep.subr.bf16.mxu0 %v5283
          %5746 = vmatpush1.bf16.msra.mxu0 %v5282
          %5747 = vmatprep.subr.bf16.mxu0 %v5287
          %5748 = vmatpush1.bf16.msra.mxu0 %v5286
          %5749 = vmatprep.subr.bf16.mxu0 %v5291
          %5750 = vmatpush1.bf16.msra.mxu0 %v5290
          %5751 = vmatprep.mubr.bf16.mxu0 %v4137
          %5752 = vmatmul.mubr.bf16.gmra.mrb[0].mxu0 %v4136
          %v5753 = vpop.f32.mrb[0].mxu0
          %v5754 = vadd.f32 %v5713, %v5753
          %v5755 = vpop.f32.mrb[0].mxu0
          %v5756 = vadd.f32 %v5715, %v5755
          %v5757 = vpop.f32.mrb[0].mxu0
          %v5758 = vpop.f32.mrb[0].mxu0
          %5759 = vdwg.mxu0
          %5760 = vmatprep.subr.bf16.mxu0 %v5295
          %5761 = vmatpush1.bf16.msra.mxu0 %v5294
          %5762 = vmatprep.subr.bf16.mxu0 %v5299
          %5763 = vmatpush1.bf16.msra.mxu0 %v5298
          %5764 = vmatprep.subr.bf16.mxu0 %v5303
          %5765 = vmatpush1.bf16.msra.mxu0 %v5302
          %5766 = vmatprep.subr.bf16.mxu0 %v5307
          %5767 = vmatpush1.bf16.msra.mxu0 %v5306
          %5768 = vmatprep.subr.bf16.mxu0 %v5311
          %5769 = vmatpush1.bf16.msra.mxu0 %v5310
          %5770 = vmatprep.subr.bf16.mxu0 %v5315
          %5771 = vmatpush1.bf16.msra.mxu0 %v5314
          %5772 = vmatprep.subr.bf16.mxu0 %v5319
          %5773 = vmatpush1.bf16.msra.mxu0 %v5318
          %5774 = vmatprep.subr.bf16.mxu0 %v5323
          %5775 = vmatpush1.bf16.msra.mxu0 %v5322
          %5776 = vmatprep.subr.bf16.mxu0 %v5327
          %5777 = vmatpush1.bf16.msra.mxu0 %v5326
          %5778 = vmatprep.subr.bf16.mxu0 %v5331
          %5779 = vmatpush1.bf16.msra.mxu0 %v5330
          %5780 = vmatprep.subr.bf16.mxu0 %v5335
          %5781 = vmatpush1.bf16.msra.mxu0 %v5334
          %5782 = vmatprep.subr.bf16.mxu0 %v5339
          %5783 = vmatpush1.bf16.msra.mxu0 %v5338
          %5784 = vmatprep.subr.bf16.mxu0 %v5343
          %5785 = vmatpush1.bf16.msra.mxu0 %v5342
          %5786 = vmatprep.subr.bf16.mxu0 %v5347
          %5787 = vmatpush1.bf16.msra.mxu0 %v5346
          %5788 = vmatprep.subr.bf16.mxu0 %v5351
          %5789 = vmatpush1.bf16.msra.mxu0 %v5350
          %5790 = vmatprep.subr.bf16.mxu0 %v5355
          %5791 = vmatpush1.bf16.msra.mxu0 %v5354
          %5792 = vmatprep.mubr.bf16.mxu0 %v4139
          %5793 = vmatmul.mubr.bf16.gmra.mrb[0].mxu0 %v4138
          %v5794 = vpop.f32.mrb[0].mxu0
          %v5795 = vadd.f32 %v5754, %v5794
          %v5796 = vpop.f32.mrb[0].mxu0
          %v5797 = vadd.f32 %v5756, %v5796
          %v5798 = vpop.f32.mrb[0].mxu0
          %v5799 = vpop.f32.mrb[0].mxu0
          %5800 = vdwg.mxu0
          %5801 = vmatprep.subr.bf16.mxu0 %v5359
          %5802 = vmatpush1.bf16.msra.mxu0 %v5358
          %5803 = vmatprep.subr.bf16.mxu0 %v5363
          %5804 = vmatpush1.bf16.msra.mxu0 %v5362
          %5805 = vmatprep.subr.bf16.mxu0 %v5367
          %5806 = vmatpush1.bf16.msra.mxu0 %v5366
          %5807 = vmatprep.subr.bf16.mxu0 %v5371
          %5808 = vmatpush1.bf16.msra.mxu0 %v5370
          %5809 = vmatprep.subr.bf16.mxu0 %v5375
          %5810 = vmatpush1.bf16.msra.mxu0 %v5374
          %5811 = vmatprep.subr.bf16.mxu0 %v5379
          %5812 = vmatpush1.bf16.msra.mxu0 %v5378
          %5813 = vmatprep.subr.bf16.mxu0 %v5383
          %5814 = vmatpush1.bf16.msra.mxu0 %v5382
          %5815 = vmatprep.subr.bf16.mxu0 %v5387
          %5816 = vmatpush1.bf16.msra.mxu0 %v5386
          %5817 = vmatprep.subr.bf16.mxu0 %v5391
          %5818 = vmatpush1.bf16.msra.mxu0 %v5390
          %5819 = vmatprep.subr.bf16.mxu0 %v5395
          %5820 = vmatpush1.bf16.msra.mxu0 %v5394
          %5821 = vmatprep.subr.bf16.mxu0 %v5399
          %5822 = vmatpush1.bf16.msra.mxu0 %v5398
          %5823 = vmatprep.subr.bf16.mxu0 %v5403
          %5824 = vmatpush1.bf16.msra.mxu0 %v5402
          %5825 = vmatprep.subr.bf16.mxu0 %v5407
          %5826 = vmatpush1.bf16.msra.mxu0 %v5406
          %5827 = vmatprep.subr.bf16.mxu0 %v5411
          %5828 = vmatpush1.bf16.msra.mxu0 %v5410
          %5829 = vmatprep.subr.bf16.mxu0 %v5415
          %5830 = vmatpush1.bf16.msra.mxu0 %v5414
          %5831 = vmatprep.subr.bf16.mxu0 %v5419
          %5832 = vmatpush1.bf16.msra.mxu0 %v5418
          %5833 = vmatprep.mubr.bf16.mxu0 %v4141
          %5834 = vmatmul.mubr.bf16.gmra.mrb[0].mxu0 %v4140
          %v5835 = vpop.f32.mrb[0].mxu0
          %v5836 = vadd.f32 %v5795, %v5835
          %v5837 = vpop.f32.mrb[0].mxu0
          %v5838 = vadd.f32 %v5797, %v5837
          %v5839 = vpop.f32.mrb[0].mxu0
          %v5840 = vpop.f32.mrb[0].mxu0
          %5841 = vdwg.mxu0
          %5842 = vmatprep.subr.bf16.mxu0 %v5169
          %5843 = vmatpush1.bf16.msra.mxu0 %v5168
          %5844 = vmatprep.subr.bf16.mxu0 %v5173
          %5845 = vmatpush1.bf16.msra.mxu0 %v5172
          %5846 = vmatprep.subr.bf16.mxu0 %v5177
          %5847 = vmatpush1.bf16.msra.mxu0 %v5176
          %5848 = vmatprep.subr.bf16.mxu0 %v5181
          %5849 = vmatpush1.bf16.msra.mxu0 %v5180
          %5850 = vmatprep.subr.bf16.mxu0 %v5185
          %5851 = vmatpush1.bf16.msra.mxu0 %v5184
          %5852 = vmatprep.subr.bf16.mxu0 %v5189
          %5853 = vmatpush1.bf16.msra.mxu0 %v5188
          %5854 = vmatprep.subr.bf16.mxu0 %v5193
          %5855 = vmatpush1.bf16.msra.mxu0 %v5192
          %5856 = vmatprep.subr.bf16.mxu0 %v5197
          %5857 = vmatpush1.bf16.msra.mxu0 %v5196
          %5858 = vmatprep.subr.bf16.mxu0 %v5201
          %5859 = vmatpush1.bf16.msra.mxu0 %v5200
          %5860 = vmatprep.subr.bf16.mxu0 %v5205
          %5861 = vmatpush1.bf16.msra.mxu0 %v5204
          %5862 = vmatprep.subr.bf16.mxu0 %v5209
          %5863 = vmatpush1.bf16.msra.mxu0 %v5208
          %5864 = vmatprep.subr.bf16.mxu0 %v5213
          %5865 = vmatpush1.bf16.msra.mxu0 %v5212
          %5866 = vmatprep.subr.bf16.mxu0 %v5217
          %5867 = vmatpush1.bf16.msra.mxu0 %v5216
          %5868 = vmatprep.subr.bf16.mxu0 %v5221
          %5869 = vmatpush1.bf16.msra.mxu0 %v5220
          %5870 = vmatprep.subr.bf16.mxu0 %v5225
          %5871 = vmatpush1.bf16.msra.mxu0 %v5224
          %5872 = vmatprep.subr.bf16.mxu0 %v5229
          %5873 = vmatpush1.bf16.msra.mxu0 %v5228
          %5874 = vmatprep.mubr.bf16.mxu0 %v4135
          %5875 = vmatmul.mubr.bf16.gmra.mrb[0].mxu0 %v4134
          %v5876 = vpop.f32.mrb[0].mxu0
          %v5877 = vadd.f32 0.0, %v5876
          %v5878 = vpop.f32.mrb[0].mxu0
          %v5879 = vadd.f32 0.0, %v5878
          %v5880 = vpop.f32.mrb[0].mxu0
          %v5881 = vpop.f32.mrb[0].mxu0
          %5882 = vdwg.mxu0
          %5883 = vmatprep.subr.bf16.mxu0 %v5233
          %5884 = vmatpush1.bf16.msra.mxu0 %v5232
          %5885 = vmatprep.subr.bf16.mxu0 %v5237
          %5886 = vmatpush1.bf16.msra.mxu0 %v5236
          %5887 = vmatprep.subr.bf16.mxu0 %v5241
          %5888 = vmatpush1.bf16.msra.mxu0 %v5240
          %5889 = vmatprep.subr.bf16.mxu0 %v5245
          %5890 = vmatpush1.bf16.msra.mxu0 %v5244
          %5891 = vmatprep.subr.bf16.mxu0 %v5249
          %5892 = vmatpush1.bf16.msra.mxu0 %v5248
          %5893 = vmatprep.subr.bf16.mxu0 %v5253
          %5894 = vmatpush1.bf16.msra.mxu0 %v5252
          %5895 = vmatprep.subr.bf16.mxu0 %v5257
          %5896 = vmatpush1.bf16.msra.mxu0 %v5256
          %5897 = vmatprep.subr.bf16.mxu0 %v5261
          %5898 = vmatpush1.bf16.msra.mxu0 %v5260
          %5899 = vmatprep.subr.bf16.mxu0 %v5265
          %5900 = vmatpush1.bf16.msra.mxu0 %v5264
          %5901 = vmatprep.subr.bf16.mxu0 %v5269
          %5902 = vmatpush1.bf16.msra.mxu0 %v5268
          %5903 = vmatprep.subr.bf16.mxu0 %v5273
          %5904 = vmatpush1.bf16.msra.mxu0 %v5272
          %5905 = vmatprep.subr.bf16.mxu0 %v5277
          %5906 = vmatpush1.bf16.msra.mxu0 %v5276
          %5907 = vmatprep.subr.bf16.mxu0 %v5281
          %5908 = vmatpush1.bf16.msra.mxu0 %v5280
          %5909 = vmatprep.subr.bf16.mxu0 %v5285
          %5910 = vmatpush1.bf16.msra.mxu0 %v5284
          %5911 = vmatprep.subr.bf16.mxu0 %v5289
          %5912 = vmatpush1.bf16.msra.mxu0 %v5288
          %5913 = vmatprep.subr.bf16.mxu0 %v5293
          %5914 = vmatpush1.bf16.msra.mxu0 %v5292
          %5915 = vmatprep.mubr.bf16.mxu0 %v4137
          %5916 = vmatmul.mubr.bf16.gmra.mrb[0].mxu0 %v4136
          %v5917 = vpop.f32.mrb[0].mxu0
          %v5918 = vadd.f32 %v5877, %v5917
          %v5919 = vpop.f32.mrb[0].mxu0
          %v5920 = vadd.f32 %v5879, %v5919
          %v5921 = vpop.f32.mrb[0].mxu0
          %v5922 = vpop.f32.mrb[0].mxu0
          %5923 = vdwg.mxu0
          %5924 = vmatprep.subr.bf16.mxu0 %v5297
          %5925 = vmatpush1.bf16.msra.mxu0 %v5296
          %5926 = vmatprep.subr.bf16.mxu0 %v5301
          %5927 = vmatpush1.bf16.msra.mxu0 %v5300
          %5928 = vmatprep.subr.bf16.mxu0 %v5305
          %5929 = vmatpush1.bf16.msra.mxu0 %v5304
          %5930 = vmatprep.subr.bf16.mxu0 %v5309
          %5931 = vmatpush1.bf16.msra.mxu0 %v5308
          %5932 = vmatprep.subr.bf16.mxu0 %v5313
          %5933 = vmatpush1.bf16.msra.mxu0 %v5312
          %5934 = vmatprep.subr.bf16.mxu0 %v5317
          %5935 = vmatpush1.bf16.msra.mxu0 %v5316
          %5936 = vmatprep.subr.bf16.mxu0 %v5321
          %5937 = vmatpush1.bf16.msra.mxu0 %v5320
          %5938 = vmatprep.subr.bf16.mxu0 %v5325
          %5939 = vmatpush1.bf16.msra.mxu0 %v5324
          %5940 = vmatprep.subr.bf16.mxu0 %v5329
          %5941 = vmatpush1.bf16.msra.mxu0 %v5328
          %5942 = vmatprep.subr.bf16.mxu0 %v5333
          %5943 = vmatpush1.bf16.msra.mxu0 %v5332
          %5944 = vmatprep.subr.bf16.mxu0 %v5337
          %5945 = vmatpush1.bf16.msra.mxu0 %v5336
          %5946 = vmatprep.subr.bf16.mxu0 %v5341
          %5947 = vmatpush1.bf16.msra.mxu0 %v5340
          %5948 = vmatprep.subr.bf16.mxu0 %v5345
          %5949 = vmatpush1.bf16.msra.mxu0 %v5344
          %5950 = vmatprep.subr.bf16.mxu0 %v5349
          %5951 = vmatpush1.bf16.msra.mxu0 %v5348
          %5952 = vmatprep.subr.bf16.mxu0 %v5353
          %5953 = vmatpush1.bf16.msra.mxu0 %v5352
          %5954 = vmatprep.subr.bf16.mxu0 %v5357
          %5955 = vmatpush1.bf16.msra.mxu0 %v5356
          %5956 = vmatprep.mubr.bf16.mxu0 %v4139
          %5957 = vmatmul.mubr.bf16.gmra.mrb[0].mxu0 %v4138
          %v5958 = vpop.f32.mrb[0].mxu0
          %v5959 = vadd.f32 %v5918, %v5958
          %v5960 = vpop.f32.mrb[0].mxu0
          %v5961 = vadd.f32 %v5920, %v5960
          %v5962 = vpop.f32.mrb[0].mxu0
          %v5963 = vpop.f32.mrb[0].mxu0
          %5964 = vdwg.mxu0
          %5965 = vmatprep.subr.bf16.mxu0 %v5361
          %5966 = vmatpush1.bf16.msra.mxu0 %v5360
          %5967 = vmatprep.subr.bf16.mxu0 %v5365
          %5968 = vmatpush1.bf16.msra.mxu0 %v5364
          %5969 = vmatprep.subr.bf16.mxu0 %v5369
          %5970 = vmatpush1.bf16.msra.mxu0 %v5368
          %5971 = vmatprep.subr.bf16.mxu0 %v5373
          %5972 = vmatpush1.bf16.msra.mxu0 %v5372
          %5973 = vmatprep.subr.bf16.mxu0 %v5377
          %5974 = vmatpush1.bf16.msra.mxu0 %v5376
          %5975 = vmatprep.subr.bf16.mxu0 %v5381
          %5976 = vmatpush1.bf16.msra.mxu0 %v5380
          %5977 = vmatprep.subr.bf16.mxu0 %v5385
          %5978 = vmatpush1.bf16.msra.mxu0 %v5384
          %5979 = vmatprep.subr.bf16.mxu0 %v5389
          %5980 = vmatpush1.bf16.msra.mxu0 %v5388
          %5981 = vmatprep.subr.bf16.mxu0 %v5393
          %5982 = vmatpush1.bf16.msra.mxu0 %v5392
          %5983 = vmatprep.subr.bf16.mxu0 %v5397
          %5984 = vmatpush1.bf16.msra.mxu0 %v5396
          %5985 = vmatprep.subr.bf16.mxu0 %v5401
          %5986 = vmatpush1.bf16.msra.mxu0 %v5400
          %5987 = vmatprep.subr.bf16.mxu0 %v5405
          %5988 = vmatpush1.bf16.msra.mxu0 %v5404
          %5989 = vmatprep.subr.bf16.mxu0 %v5409
          %5990 = vmatpush1.bf16.msra.mxu0 %v5408
          %5991 = vmatprep.subr.bf16.mxu0 %v5413
          %5992 = vmatpush1.bf16.msra.mxu0 %v5412
          %5993 = vmatprep.subr.bf16.mxu0 %v5417
          %5994 = vmatpush1.bf16.msra.mxu0 %v5416
          %5995 = vmatprep.subr.bf16.mxu0 %v5421
          %5996 = vmatpush1.bf16.msra.mxu0 %v5420
          %5997 = vmatprep.mubr.bf16.mxu0 %v4141
          %5998 = vmatmul.mubr.bf16.gmra.mrb[0].mxu0 %v4140
          %v5999 = vpop.f32.mrb[0].mxu0
          %v6000 = vadd.f32 %v5959, %v5999
          %v6001 = vpop.f32.mrb[0].mxu0
          %v6002 = vadd.f32 %v5961, %v6001
          %v6003 = vpop.f32.mrb[0].mxu0
          %v6004 = vpop.f32.mrb[0].mxu0
          %6005 = vdwg.mxu0
          %v6006 = vld [vmem:[#allocation19] sm:$0xf]
          %v6007 = vld [vmem:[#allocation21] sm:$0xf]
          %v6008 = vmul.f32 %v5836, %v3850
          %v6009 = vmul.f32 %v5838, %v3850
          %v6010 = vmul.f32 %v6000, %v3850
          %v6011 = vmul.f32 %v6002, %v3850
          %v6012 = vrot.slane %v6008, 4
          %v6013 = vadd.f32 %v6008, %v6012
          %v6014 = vrot.slane %v6013, 2
          %v6015 = vadd.f32 %v6013, %v6014
          %v6016 = vrot.slane %v6015, 1
          %v6017 = vadd.f32 %v6015, %v6016
          %v6018 = vrot.slane %v6009, 4
          %v6019 = vadd.f32 %v6009, %v6018
          %v6020 = vrot.slane %v6019, 2
          %v6021 = vadd.f32 %v6019, %v6020
          %v6022 = vrot.slane %v6021, 1
          %v6023 = vadd.f32 %v6021, %v6022
          %v6024 = vrot.slane %v6010, 4
          %v6025 = vadd.f32 %v6010, %v6024
          %v6026 = vrot.slane %v6025, 2
          %v6027 = vadd.f32 %v6025, %v6026
          %v6028 = vrot.slane %v6027, 1
          %v6029 = vadd.f32 %v6027, %v6028
          %v6030 = vrot.slane %v6011, 4
          %v6031 = vadd.f32 %v6011, %v6030
          %v6032 = vrot.slane %v6031, 2
          %v6033 = vadd.f32 %v6031, %v6032
          %v6034 = vrot.slane %v6033, 1
          %v6035 = vadd.f32 %v6033, %v6034
          %v6036 = vmul.f32 %v6017, 0.125
          %v6037 = vmul.f32 %v6023, 0.125
          %v6038 = vmul.f32 %v6029, 0.125
          %v6039 = vmul.f32 %v6035, 0.125
          %v6040 = vmul.f32 %v6008, %v5836
          %v6041 = vmul.f32 %v6009, %v5838
          %v6042 = vmul.f32 %v6010, %v6000
          %v6043 = vmul.f32 %v6011, %v6002
          %v6044 = vrot.slane %v6040, 4
          %v6045 = vadd.f32 %v6040, %v6044
          %v6046 = vrot.slane %v6045, 2
          %v6047 = vadd.f32 %v6045, %v6046
          %v6048 = vrot.slane %v6047, 1
          %v6049 = vadd.f32 %v6047, %v6048
          %v6050 = vrot.slane %v6041, 4
          %v6051 = vadd.f32 %v6041, %v6050
          %v6052 = vrot.slane %v6051, 2
          %v6053 = vadd.f32 %v6051, %v6052
          %v6054 = vrot.slane %v6053, 1
          %v6055 = vadd.f32 %v6053, %v6054
          %v6056 = vrot.slane %v6042, 4
          %v6057 = vadd.f32 %v6042, %v6056
          %v6058 = vrot.slane %v6057, 2
          %v6059 = vadd.f32 %v6057, %v6058
          %v6060 = vrot.slane %v6059, 1
          %v6061 = vadd.f32 %v6059, %v6060
          %v6062 = vrot.slane %v6043, 4
          %v6063 = vadd.f32 %v6043, %v6062
          %v6064 = vrot.slane %v6063, 2
          %v6065 = vadd.f32 %v6063, %v6064
          %v6066 = vrot.slane %v6065, 1
          %v6067 = vadd.f32 %v6065, %v6066
          %v6068 = vmul.f32 %v6049, 0.125
          %v6069 = vmul.f32 %v6055, 0.125
          %v6070 = vmul.f32 %v6061, 0.125
          %v6071 = vmul.f32 %v6067, 0.125
          %v6072 = vmul.f32 %v6036, %v6036
          %v6073 = vmul.f32 %v6037, %v6037
          %v6074 = vmul.f32 %v6038, %v6038
          %v6075 = vmul.f32 %v6039, %v6039
          %v6076 = vsub.f32 %v6068, %v6072
          %v6077 = vsub.f32 %v6069, %v6073
          %v6078 = vsub.f32 %v6070, %v6074
          %v6079 = vsub.f32 %v6071, %v6075
          %v6080 = vsub.f32 %v5836, %v6036
          %v6081 = vsub.f32 %v5838, %v6037
          %v6082 = vsub.f32 %v6000, %v6038
          %v6083 = vsub.f32 %v6002, %v6039
          %v6084 = vadd.f32 %v6076, 1e-05
          %v6085 = vadd.f32 %v6077, 1e-05
          %v6086 = vadd.f32 %v6078, 1e-05
          %v6087 = vadd.f32 %v6079, 1e-05
          %v6088 = vrsqrt.pop %v6084
          %v6089 = vrsqrt.pop %v6085
          %v6090 = vrsqrt.pop %v6086
          %v6091 = vrsqrt.pop %v6087
          %v6092 = vmul.f32 %v6080, %v6088
          %v6093 = vmul.f32 %v6081, %v6089
          %v6094 = vmul.f32 %v6082, %v6090
          %v6095 = vmul.f32 %v6083, %v6091
          %v6097 = vlaneseq
          %v6098 = vshrl.u32 %v6097, 7
          %v6099 = vsub.s32 0, %v6098
          %v6100 = vrot.slane %v6006, %v6099
          %v6101 = vlaneseq
          %v6102 = vshrl.u32 %v6101, 7
          %v6103 = vsub.s32 1, %v6102
          %v6104 = vrot.slane %v6006, %v6103
          %v6105 = vlaneseq
          %v6106 = vshrl.u32 %v6105, 7
          %v6107 = vsub.s32 2, %v6106
          %v6108 = vrot.slane %v6006, %v6107
          %v6109 = vlaneseq
          %v6110 = vshrl.u32 %v6109, 7
          %v6111 = vsub.s32 3, %v6110
          %v6112 = vrot.slane %v6006, %v6111
          %v6117 = vmul.f32 %v6092, %v6100
          %v6118 = vmul.f32 %v6093, %v6104
          %v6119 = vmul.f32 %v6094, %v6108
          %v6120 = vmul.f32 %v6095, %v6112
          %v6122 = vlaneseq
          %v6123 = vshrl.u32 %v6122, 7
          %v6124 = vsub.s32 0, %v6123
          %v6125 = vrot.slane %v6007, %v6124
          %v6126 = vlaneseq
          %v6127 = vshrl.u32 %v6126, 7
          %v6128 = vsub.s32 1, %v6127
          %v6129 = vrot.slane %v6007, %v6128
          %v6130 = vlaneseq
          %v6131 = vshrl.u32 %v6130, 7
          %v6132 = vsub.s32 2, %v6131
          %v6133 = vrot.slane %v6007, %v6132
          %v6134 = vlaneseq
          %v6135 = vshrl.u32 %v6134, 7
          %v6136 = vsub.s32 3, %v6135
          %v6137 = vrot.slane %v6007, %v6136
          %v6142 = vadd.f32 %v6117, %v6125
          %v6143 = vadd.f32 %v6118, %v6129
          %v6144 = vadd.f32 %v6119, %v6133
          %v6145 = vadd.f32 %v6120, %v6137
          %v6146 = vmax.f32 %v6142, 0.0
          %v6147 = vmax.f32 %v6143, 0.0
          %v6148 = vmax.f32 %v6144, 0.0
          %v6149 = vmax.f32 %v6145, 0.0
          %v6150 = vpack.c.bf16 %v6146, %v6146
          %v6151 = vpack.c.bf16 %v6147, %v6147
          %v6152 = vpack.c.bf16 %v6148, %v6148
          %v6153 = vpack.c.bf16 %v6149, %v6149
          %v6154 = vld [vmem:[#allocation22] sm:$0xff]
          %v6155 = vld [vmem:[#allocation22 + $0x8] sm:$0xff]
          %v6156 = vld [vmem:[#allocation22 + $0x10] sm:$0xff]
          %v6157 = vld [vmem:[#allocation22 + $0x18] sm:$0xff]
          %v6158 = vld [vmem:[#allocation22 + $0x20] sm:$0xff]
          %v6159 = vld [vmem:[#allocation22 + $0x28] sm:$0xff]
          %v6160 = vld [vmem:[#allocation22 + $0x30] sm:$0xff]
          %v6161 = vld [vmem:[#allocation22 + $0x38] sm:$0xff]
          %v6162 = vld [vmem:[#allocation22 + $0x40] sm:$0xff]
          %v6163 = vld [vmem:[#allocation22 + $0x48] sm:$0xff]
          %v6164 = vld [vmem:[#allocation22 + $0x50] sm:$0xff]
          %v6165 = vld [vmem:[#allocation22 + $0x58] sm:$0xff]
          %v6166 = vld [vmem:[#allocation22 + $0x60] sm:$0xff]
          %v6167 = vld [vmem:[#allocation22 + $0x68] sm:$0xff]
          %v6168 = vld [vmem:[#allocation22 + $0x70] sm:$0xff]
          %v6169 = vld [vmem:[#allocation22 + $0x78] sm:$0xff]
          %v6170 = vld [vmem:[#allocation22 + $0x80] sm:$0xff]
          %v6171 = vld [vmem:[#allocation22 + $0x88] sm:$0xff]
          %v6172 = vld [vmem:[#allocation22 + $0x90] sm:$0xff]
          %v6173 = vld [vmem:[#allocation22 + $0x98] sm:$0xff]
          %v6174 = vld [vmem:[#allocation22 + $0xa0] sm:$0xff]
          %v6175 = vld [vmem:[#allocation22 + $0xa8] sm:$0xff]
          %v6176 = vld [vmem:[#allocation22 + $0xb0] sm:$0xff]
          %v6177 = vld [vmem:[#allocation22 + $0xb8] sm:$0xff]
          %v6178 = vld [vmem:[#allocation22 + $0xc0] sm:$0xff]
          %v6179 = vld [vmem:[#allocation22 + $0xc8] sm:$0xff]
          %v6180 = vld [vmem:[#allocation22 + $0xd0] sm:$0xff]
          %v6181 = vld [vmem:[#allocation22 + $0xd8] sm:$0xff]
          %v6182 = vld [vmem:[#allocation22 + $0xe0] sm:$0xff]
          %v6183 = vld [vmem:[#allocation22 + $0xe8] sm:$0xff]
          %v6184 = vld [vmem:[#allocation22 + $0xf0] sm:$0xff]
          %v6185 = vld [vmem:[#allocation22 + $0xf8] sm:$0xff]
          %v6186 = vld [vmem:[#allocation22 + $0x100] sm:$0xff]
          %v6187 = vld [vmem:[#allocation22 + $0x108] sm:$0xff]
          %v6188 = vld [vmem:[#allocation22 + $0x110] sm:$0xff]
          %v6189 = vld [vmem:[#allocation22 + $0x118] sm:$0xff]
          %v6190 = vld [vmem:[#allocation22 + $0x120] sm:$0xff]
          %v6191 = vld [vmem:[#allocation22 + $0x128] sm:$0xff]
          %v6192 = vld [vmem:[#allocation22 + $0x130] sm:$0xff]
          %v6193 = vld [vmem:[#allocation22 + $0x138] sm:$0xff]
          %v6194 = vld [vmem:[#allocation22 + $0x140] sm:$0xff]
          %v6195 = vld [vmem:[#allocation22 + $0x148] sm:$0xff]
          %v6196 = vld [vmem:[#allocation22 + $0x150] sm:$0xff]
          %v6197 = vld [vmem:[#allocation22 + $0x158] sm:$0xff]
          %v6198 = vld [vmem:[#allocation22 + $0x160] sm:$0xff]
          %v6199 = vld [vmem:[#allocation22 + $0x168] sm:$0xff]
          %v6200 = vld [vmem:[#allocation22 + $0x170] sm:$0xff]
          %v6201 = vld [vmem:[#allocation22 + $0x178] sm:$0xff]
          %v6202 = vld [vmem:[#allocation22 + $0x180] sm:$0xff]
          %v6203 = vld [vmem:[#allocation22 + $0x188] sm:$0xff]
          %v6204 = vld [vmem:[#allocation22 + $0x190] sm:$0xff]
          %v6205 = vld [vmem:[#allocation22 + $0x198] sm:$0xff]
          %v6206 = vld [vmem:[#allocation22 + $0x1a0] sm:$0xff]
          %v6207 = vld [vmem:[#allocation22 + $0x1a8] sm:$0xff]
          %v6208 = vld [vmem:[#allocation22 + $0x1b0] sm:$0xff]
          %v6209 = vld [vmem:[#allocation22 + $0x1b8] sm:$0xff]
          %v6210 = vld [vmem:[#allocation22 + $0x1c0] sm:$0xff]
          %v6211 = vld [vmem:[#allocation22 + $0x1c8] sm:$0xff]
          %v6212 = vld [vmem:[#allocation22 + $0x1d0] sm:$0xff]
          %v6213 = vld [vmem:[#allocation22 + $0x1d8] sm:$0xff]
          %v6214 = vld [vmem:[#allocation22 + $0x1e0] sm:$0xff]
          %v6215 = vld [vmem:[#allocation22 + $0x1e8] sm:$0xff]
          %v6216 = vld [vmem:[#allocation22 + $0x1f0] sm:$0xff]
          %v6217 = vld [vmem:[#allocation22 + $0x1f8] sm:$0xff]
          %v6282 = vunpack.c.l.b16 %v6154
          %v6283 = vunpack.c.h.b16 %v6154
          %v6284 = vunpack.c.l.b16 %v6155
          %v6285 = vunpack.c.h.b16 %v6155
          %v6286 = vunpack.c.l.b16 %v6156
          %v6287 = vunpack.c.h.b16 %v6156
          %v6288 = vunpack.c.l.b16 %v6157
          %v6289 = vunpack.c.h.b16 %v6157
          %v6290 = vunpack.c.l.b16 %v6158
          %v6291 = vunpack.c.h.b16 %v6158
          %v6292 = vunpack.c.l.b16 %v6159
          %v6293 = vunpack.c.h.b16 %v6159
          %v6294 = vunpack.c.l.b16 %v6160
          %v6295 = vunpack.c.h.b16 %v6160
          %v6296 = vunpack.c.l.b16 %v6161
          %v6297 = vunpack.c.h.b16 %v6161
          %v6298 = vunpack.c.l.b16 %v6162
          %v6299 = vunpack.c.h.b16 %v6162
          %v6300 = vunpack.c.l.b16 %v6163
          %v6301 = vunpack.c.h.b16 %v6163
          %v6302 = vunpack.c.l.b16 %v6164
          %v6303 = vunpack.c.h.b16 %v6164
          %v6304 = vunpack.c.l.b16 %v6165
          %v6305 = vunpack.c.h.b16 %v6165
          %v6306 = vunpack.c.l.b16 %v6166
          %v6307 = vunpack.c.h.b16 %v6166
          %v6308 = vunpack.c.l.b16 %v6167
          %v6309 = vunpack.c.h.b16 %v6167
          %v6310 = vunpack.c.l.b16 %v6168
          %v6311 = vunpack.c.h.b16 %v6168
          %v6312 = vunpack.c.l.b16 %v6169
          %v6313 = vunpack.c.h.b16 %v6169
          %v6314 = vunpack.c.l.b16 %v6170
          %v6315 = vunpack.c.h.b16 %v6170
          %v6316 = vunpack.c.l.b16 %v6171
          %v6317 = vunpack.c.h.b16 %v6171
          %v6318 = vunpack.c.l.b16 %v6172
          %v6319 = vunpack.c.h.b16 %v6172
          %v6320 = vunpack.c.l.b16 %v6173
          %v6321 = vunpack.c.h.b16 %v6173
          %v6322 = vunpack.c.l.b16 %v6174
          %v6323 = vunpack.c.h.b16 %v6174
          %v6324 = vunpack.c.l.b16 %v6175
          %v6325 = vunpack.c.h.b16 %v6175
          %v6326 = vunpack.c.l.b16 %v6176
          %v6327 = vunpack.c.h.b16 %v6176
          %v6328 = vunpack.c.l.b16 %v6177
          %v6329 = vunpack.c.h.b16 %v6177
          %v6330 = vunpack.c.l.b16 %v6178
          %v6331 = vunpack.c.h.b16 %v6178
          %v6332 = vunpack.c.l.b16 %v6179
          %v6333 = vunpack.c.h.b16 %v6179
          %v6334 = vunpack.c.l.b16 %v6180
          %v6335 = vunpack.c.h.b16 %v6180
          %v6336 = vunpack.c.l.b16 %v6181
          %v6337 = vunpack.c.h.b16 %v6181
          %v6338 = vunpack.c.l.b16 %v6182
          %v6339 = vunpack.c.h.b16 %v6182
          %v6340 = vunpack.c.l.b16 %v6183
          %v6341 = vunpack.c.h.b16 %v6183
          %v6342 = vunpack.c.l.b16 %v6184
          %v6343 = vunpack.c.h.b16 %v6184
          %v6344 = vunpack.c.l.b16 %v6185
          %v6345 = vunpack.c.h.b16 %v6185
          %v6346 = vunpack.c.l.b16 %v6186
          %v6347 = vunpack.c.h.b16 %v6186
          %v6348 = vunpack.c.l.b16 %v6187
          %v6349 = vunpack.c.h.b16 %v6187
          %v6350 = vunpack.c.l.b16 %v6188
          %v6351 = vunpack.c.h.b16 %v6188
          %v6352 = vunpack.c.l.b16 %v6189
          %v6353 = vunpack.c.h.b16 %v6189
          %v6354 = vunpack.c.l.b16 %v6190
          %v6355 = vunpack.c.h.b16 %v6190
          %v6356 = vunpack.c.l.b16 %v6191
          %v6357 = vunpack.c.h.b16 %v6191
          %v6358 = vunpack.c.l.b16 %v6192
          %v6359 = vunpack.c.h.b16 %v6192
          %v6360 = vunpack.c.l.b16 %v6193
          %v6361 = vunpack.c.h.b16 %v6193
          %v6362 = vunpack.c.l.b16 %v6194
          %v6363 = vunpack.c.h.b16 %v6194
          %v6364 = vunpack.c.l.b16 %v6195
          %v6365 = vunpack.c.h.b16 %v6195
          %v6366 = vunpack.c.l.b16 %v6196
          %v6367 = vunpack.c.h.b16 %v6196
          %v6368 = vunpack.c.l.b16 %v6197
          %v6369 = vunpack.c.h.b16 %v6197
          %v6370 = vunpack.c.l.b16 %v6198
          %v6371 = vunpack.c.h.b16 %v6198
          %v6372 = vunpack.c.l.b16 %v6199
          %v6373 = vunpack.c.h.b16 %v6199
          %v6374 = vunpack.c.l.b16 %v6200
          %v6375 = vunpack.c.h.b16 %v6200
          %v6376 = vunpack.c.l.b16 %v6201
          %v6377 = vunpack.c.h.b16 %v6201
          %v6378 = vunpack.c.l.b16 %v6202
          %v6379 = vunpack.c.h.b16 %v6202
          %v6380 = vunpack.c.l.b16 %v6203
          %v6381 = vunpack.c.h.b16 %v6203
          %v6382 = vunpack.c.l.b16 %v6204
          %v6383 = vunpack.c.h.b16 %v6204
          %v6384 = vunpack.c.l.b16 %v6205
          %v6385 = vunpack.c.h.b16 %v6205
          %v6386 = vunpack.c.l.b16 %v6206
          %v6387 = vunpack.c.h.b16 %v6206
          %v6388 = vunpack.c.l.b16 %v6207
          %v6389 = vunpack.c.h.b16 %v6207
          %v6390 = vunpack.c.l.b16 %v6208
          %v6391 = vunpack.c.h.b16 %v6208
          %v6392 = vunpack.c.l.b16 %v6209
          %v6393 = vunpack.c.h.b16 %v6209
          %v6394 = vunpack.c.l.b16 %v6210
          %v6395 = vunpack.c.h.b16 %v6210
          %v6396 = vunpack.c.l.b16 %v6211
          %v6397 = vunpack.c.h.b16 %v6211
          %v6398 = vunpack.c.l.b16 %v6212
          %v6399 = vunpack.c.h.b16 %v6212
          %v6400 = vunpack.c.l.b16 %v6213
          %v6401 = vunpack.c.h.b16 %v6213
          %v6402 = vunpack.c.l.b16 %v6214
          %v6403 = vunpack.c.h.b16 %v6214
          %v6404 = vunpack.c.l.b16 %v6215
          %v6405 = vunpack.c.h.b16 %v6215
          %v6406 = vunpack.c.l.b16 %v6216
          %v6407 = vunpack.c.h.b16 %v6216
          %v6408 = vunpack.c.l.b16 %v6217
          %v6409 = vunpack.c.h.b16 %v6217
          %v6410 = vpack.c.b16 %v6284, %v6282
          %v6411 = vpack.c.b16 %v6285, %v6283
          %v6412 = vpack.c.b16 %v6288, %v6286
          %v6413 = vpack.c.b16 %v6289, %v6287
          %v6414 = vpack.c.b16 %v6292, %v6290
          %v6415 = vpack.c.b16 %v6293, %v6291
          %v6416 = vpack.c.b16 %v6296, %v6294
          %v6417 = vpack.c.b16 %v6297, %v6295
          %v6418 = vpack.c.b16 %v6300, %v6298
          %v6419 = vpack.c.b16 %v6301, %v6299
          %v6420 = vpack.c.b16 %v6304, %v6302
          %v6421 = vpack.c.b16 %v6305, %v6303
          %v6422 = vpack.c.b16 %v6308, %v6306
          %v6423 = vpack.c.b16 %v6309, %v6307
          %v6424 = vpack.c.b16 %v6312, %v6310
          %v6425 = vpack.c.b16 %v6313, %v6311
          %v6426 = vpack.c.b16 %v6316, %v6314
          %v6427 = vpack.c.b16 %v6317, %v6315
          %v6428 = vpack.c.b16 %v6320, %v6318
          %v6429 = vpack.c.b16 %v6321, %v6319
          %v6430 = vpack.c.b16 %v6324, %v6322
          %v6431 = vpack.c.b16 %v6325, %v6323
          %v6432 = vpack.c.b16 %v6328, %v6326
          %v6433 = vpack.c.b16 %v6329, %v6327
          %v6434 = vpack.c.b16 %v6332, %v6330
          %v6435 = vpack.c.b16 %v6333, %v6331
          %v6436 = vpack.c.b16 %v6336, %v6334
          %v6437 = vpack.c.b16 %v6337, %v6335
          %v6438 = vpack.c.b16 %v6340, %v6338
          %v6439 = vpack.c.b16 %v6341, %v6339
          %v6440 = vpack.c.b16 %v6344, %v6342
          %v6441 = vpack.c.b16 %v6345, %v6343
          %v6442 = vpack.c.b16 %v6348, %v6346
          %v6443 = vpack.c.b16 %v6349, %v6347
          %v6444 = vpack.c.b16 %v6352, %v6350
          %v6445 = vpack.c.b16 %v6353, %v6351
          %v6446 = vpack.c.b16 %v6356, %v6354
          %v6447 = vpack.c.b16 %v6357, %v6355
          %v6448 = vpack.c.b16 %v6360, %v6358
          %v6449 = vpack.c.b16 %v6361, %v6359
          %v6450 = vpack.c.b16 %v6364, %v6362
          %v6451 = vpack.c.b16 %v6365, %v6363
          %v6452 = vpack.c.b16 %v6368, %v6366
          %v6453 = vpack.c.b16 %v6369, %v6367
          %v6454 = vpack.c.b16 %v6372, %v6370
          %v6455 = vpack.c.b16 %v6373, %v6371
          %v6456 = vpack.c.b16 %v6376, %v6374
          %v6457 = vpack.c.b16 %v6377, %v6375
          %v6458 = vpack.c.b16 %v6380, %v6378
          %v6459 = vpack.c.b16 %v6381, %v6379
          %v6460 = vpack.c.b16 %v6384, %v6382
          %v6461 = vpack.c.b16 %v6385, %v6383
          %v6462 = vpack.c.b16 %v6388, %v6386
          %v6463 = vpack.c.b16 %v6389, %v6387
          %v6464 = vpack.c.b16 %v6392, %v6390
          %v6465 = vpack.c.b16 %v6393, %v6391
          %v6466 = vpack.c.b16 %v6396, %v6394
          %v6467 = vpack.c.b16 %v6397, %v6395
          %v6468 = vpack.c.b16 %v6400, %v6398
          %v6469 = vpack.c.b16 %v6401, %v6399
          %v6470 = vpack.c.b16 %v6404, %v6402
          %v6471 = vpack.c.b16 %v6405, %v6403
          %v6472 = vpack.c.b16 %v6408, %v6406
          %v6473 = vpack.c.b16 %v6409, %v6407
          %6538 = vmatprep.subr.bf16.mxu0 %v6411
          %6539 = vmatpush1.bf16.msra.mxu0 %v6410
          %6540 = vmatprep.subr.bf16.mxu0 %v6413
          %6541 = vmatpush1.bf16.msra.mxu0 %v6412
          %6542 = vmatprep.subr.bf16.mxu0 %v6415
          %6543 = vmatpush1.bf16.msra.mxu0 %v6414
          %6544 = vmatprep.subr.bf16.mxu0 %v6417
          %6545 = vmatpush1.bf16.msra.mxu0 %v6416
          %6546 = vmatprep.subr.bf16.mxu0 %v6419
          %6547 = vmatpush1.bf16.msra.mxu0 %v6418
          %6548 = vmatprep.subr.bf16.mxu0 %v6421
          %6549 = vmatpush1.bf16.msra.mxu0 %v6420
          %6550 = vmatprep.subr.bf16.mxu0 %v6423
          %6551 = vmatpush1.bf16.msra.mxu0 %v6422
          %6552 = vmatprep.subr.bf16.mxu0 %v6425
          %6553 = vmatpush1.bf16.msra.mxu0 %v6424
          %6554 = vmatprep.subr.bf16.mxu0 %v6427
          %6555 = vmatpush1.bf16.msra.mxu0 %v6426
          %6556 = vmatprep.subr.bf16.mxu0 %v6429
          %6557 = vmatpush1.bf16.msra.mxu0 %v6428
          %6558 = vmatprep.subr.bf16.mxu0 %v6431
          %6559 = vmatpush1.bf16.msra.mxu0 %v6430
          %6560 = vmatprep.subr.bf16.mxu0 %v6433
          %6561 = vmatpush1.bf16.msra.mxu0 %v6432
          %6562 = vmatprep.subr.bf16.mxu0 %v6435
          %6563 = vmatpush1.bf16.msra.mxu0 %v6434
          %6564 = vmatprep.subr.bf16.mxu0 %v6437
          %6565 = vmatpush1.bf16.msra.mxu0 %v6436
          %6566 = vmatprep.subr.bf16.mxu0 %v6439
          %6567 = vmatpush1.bf16.msra.mxu0 %v6438
          %6568 = vmatprep.subr.bf16.mxu0 %v6441
          %6569 = vmatpush1.bf16.msra.mxu0 %v6440
          %6570 = vmatprep.mubr.bf16.mxu0 %v6151
          %6571 = vmatmul.mubr.bf16.gmra.mrb[0].mxu0 %v6150
          %v6572 = vpop.f32.mrb[0].mxu0
          %v6573 = vadd.f32 0.0, %v6572
          %v6574 = vpop.f32.mrb[0].mxu0
          %v6575 = vadd.f32 0.0, %v6574
          %v6576 = vpop.f32.mrb[0].mxu0
          %v6577 = vpop.f32.mrb[0].mxu0
          %6578 = vdwg.mxu0
          %6579 = vmatprep.subr.bf16.mxu0 %v6443
          %6580 = vmatpush1.bf16.msra.mxu0 %v6442
          %6581 = vmatprep.subr.bf16.mxu0 %v6445
          %6582 = vmatpush1.bf16.msra.mxu0 %v6444
          %6583 = vmatprep.subr.bf16.mxu0 %v6447
          %6584 = vmatpush1.bf16.msra.mxu0 %v6446
          %6585 = vmatprep.subr.bf16.mxu0 %v6449
          %6586 = vmatpush1.bf16.msra.mxu0 %v6448
          %6587 = vmatprep.subr.bf16.mxu0 %v6451
          %6588 = vmatpush1.bf16.msra.mxu0 %v6450
          %6589 = vmatprep.subr.bf16.mxu0 %v6453
          %6590 = vmatpush1.bf16.msra.mxu0 %v6452
          %6591 = vmatprep.subr.bf16.mxu0 %v6455
          %6592 = vmatpush1.bf16.msra.mxu0 %v6454
          %6593 = vmatprep.subr.bf16.mxu0 %v6457
          %6594 = vmatpush1.bf16.msra.mxu0 %v6456
          %6595 = vmatprep.subr.bf16.mxu0 %v6459
          %6596 = vmatpush1.bf16.msra.mxu0 %v6458
          %6597 = vmatprep.subr.bf16.mxu0 %v6461
          %6598 = vmatpush1.bf16.msra.mxu0 %v6460
          %6599 = vmatprep.subr.bf16.mxu0 %v6463
          %6600 = vmatpush1.bf16.msra.mxu0 %v6462
          %6601 = vmatprep.subr.bf16.mxu0 %v6465
          %6602 = vmatpush1.bf16.msra.mxu0 %v6464
          %6603 = vmatprep.subr.bf16.mxu0 %v6467
          %6604 = vmatpush1.bf16.msra.mxu0 %v6466
          %6605 = vmatprep.subr.bf16.mxu0 %v6469
          %6606 = vmatpush1.bf16.msra.mxu0 %v6468
          %6607 = vmatprep.subr.bf16.mxu0 %v6471
          %6608 = vmatpush1.bf16.msra.mxu0 %v6470
          %6609 = vmatprep.subr.bf16.mxu0 %v6473
          %6610 = vmatpush1.bf16.msra.mxu0 %v6472
          %6611 = vmatprep.mubr.bf16.mxu0 %v6153
          %6612 = vmatmul.mubr.bf16.gmra.mrb[0].mxu0 %v6152
          %v6613 = vpop.f32.mrb[0].mxu0
          %v6614 = vadd.f32 %v6573, %v6613
          %v6615 = vpop.f32.mrb[0].mxu0
          %v6616 = vadd.f32 %v6575, %v6615
          %v6617 = vpop.f32.mrb[0].mxu0
          %v6618 = vpop.f32.mrb[0].mxu0
          %6619 = vdwg.mxu0
          %v6620 = vld [vmem:[#allocation24] sm:$0x3]
          %v6621 = vld [vmem:[#allocation25] sm:$0x3]
          %v6622 = vmul.f32 %v6614, %v3850
          %v6623 = vmul.f32 %v6616, %v3850
          %v6624 = vrot.slane %v6622, 4
          %v6625 = vadd.f32 %v6622, %v6624
          %v6626 = vrot.slane %v6625, 2
          %v6627 = vadd.f32 %v6625, %v6626
          %v6628 = vrot.slane %v6627, 1
          %v6629 = vadd.f32 %v6627, %v6628
          %v6630 = vrot.slane %v6623, 4
          %v6631 = vadd.f32 %v6623, %v6630
          %v6632 = vrot.slane %v6631, 2
          %v6633 = vadd.f32 %v6631, %v6632
          %v6634 = vrot.slane %v6633, 1
          %v6635 = vadd.f32 %v6633, %v6634
          %v6636 = vmul.f32 %v6629, 0.125
          %v6637 = vmul.f32 %v6635, 0.125
          %v6638 = vmul.f32 %v6622, %v6614
          %v6639 = vmul.f32 %v6623, %v6616
          %v6640 = vrot.slane %v6638, 4
          %v6641 = vadd.f32 %v6638, %v6640
          %v6642 = vrot.slane %v6641, 2
          %v6643 = vadd.f32 %v6641, %v6642
          %v6644 = vrot.slane %v6643, 1
          %v6645 = vadd.f32 %v6643, %v6644
          %v6646 = vrot.slane %v6639, 4
          %v6647 = vadd.f32 %v6639, %v6646
          %v6648 = vrot.slane %v6647, 2
          %v6649 = vadd.f32 %v6647, %v6648
          %v6650 = vrot.slane %v6649, 1
          %v6651 = vadd.f32 %v6649, %v6650
          %v6652 = vmul.f32 %v6645, 0.125
          %v6653 = vmul.f32 %v6651, 0.125
          %v6654 = vmul.f32 %v6636, %v6636
          %v6655 = vmul.f32 %v6637, %v6637
          %v6656 = vsub.f32 %v6652, %v6654
          %v6657 = vsub.f32 %v6653, %v6655
          %v6658 = vsub.f32 %v6614, %v6636
          %v6659 = vsub.f32 %v6616, %v6637
          %v6660 = vadd.f32 %v6656, 1e-05
          %v6661 = vadd.f32 %v6657, 1e-05
          %v6662 = vrsqrt.pop %v6660
          %v6663 = vrsqrt.pop %v6661
          %v6664 = vmul.f32 %v6658, %v6662
          %v6665 = vmul.f32 %v6659, %v6663
          %v6667 = vlaneseq
          %v6668 = vshrl.u32 %v6667, 7
          %v6669 = vsub.s32 0, %v6668
          %v6670 = vrot.slane %v6620, %v6669
          %v6671 = vlaneseq
          %v6672 = vshrl.u32 %v6671, 7
          %v6673 = vsub.s32 1, %v6672
          %v6674 = vrot.slane %v6620, %v6673
          %v6677 = vmul.f32 %v6664, %v6670
          %v6678 = vmul.f32 %v6665, %v6674
          %v6680 = vlaneseq
          %v6681 = vshrl.u32 %v6680, 7
          %v6682 = vsub.s32 0, %v6681
          %v6683 = vrot.slane %v6621, %v6682
          %v6684 = vlaneseq
          %v6685 = vshrl.u32 %v6684, 7
          %v6686 = vsub.s32 1, %v6685
          %v6687 = vrot.slane %v6621, %v6686
          %v6690 = vadd.f32 %v6677, %v6683
          %v6691 = vadd.f32 %v6678, %v6687
          %v6692 = vmax.f32 %v6690, 0.0
          %v6693 = vmax.f32 %v6691, 0.0
          %v6694 = vpack.c.bf16 %v6692, %v6692
          %v6695 = vpack.c.bf16 %v6693, %v6693
          %v6696 = vld [vmem:[#allocation27] sm:$0xf]
          %v6697 = vld [vmem:[#allocation27 + $0x4] sm:$0xf]
          %v6698 = vld [vmem:[#allocation27 + $0x8] sm:$0xf]
          %v6699 = vld [vmem:[#allocation27 + $0xc] sm:$0xf]
          %v6700 = vld [vmem:[#allocation27 + $0x10] sm:$0xf]
          %v6701 = vld [vmem:[#allocation27 + $0x14] sm:$0xf]
          %v6702 = vld [vmem:[#allocation27 + $0x18] sm:$0xf]
          %v6703 = vld [vmem:[#allocation27 + $0x1c] sm:$0xf]
          %v6704 = vld [vmem:[#allocation27 + $0x20] sm:$0xf]
          %v6705 = vld [vmem:[#allocation27 + $0x24] sm:$0xf]
          %v6706 = vld [vmem:[#allocation27 + $0x28] sm:$0xf]
          %v6707 = vld [vmem:[#allocation27 + $0x2c] sm:$0xf]
          %v6708 = vld [vmem:[#allocation27 + $0x30] sm:$0xf]
          %v6709 = vld [vmem:[#allocation27 + $0x34] sm:$0xf]
          %v6710 = vld [vmem:[#allocation27 + $0x38] sm:$0xf]
          %v6711 = vld [vmem:[#allocation27 + $0x3c] sm:$0xf]
          %v6712 = vld [vmem:[#allocation27 + $0x40] sm:$0xf]
          %v6713 = vld [vmem:[#allocation27 + $0x44] sm:$0xf]
          %v6714 = vld [vmem:[#allocation27 + $0x48] sm:$0xf]
          %v6715 = vld [vmem:[#allocation27 + $0x4c] sm:$0xf]
          %v6716 = vld [vmem:[#allocation27 + $0x50] sm:$0xf]
          %v6717 = vld [vmem:[#allocation27 + $0x54] sm:$0xf]
          %v6718 = vld [vmem:[#allocation27 + $0x58] sm:$0xf]
          %v6719 = vld [vmem:[#allocation27 + $0x5c] sm:$0xf]
          %v6720 = vld [vmem:[#allocation27 + $0x60] sm:$0xf]
          %v6721 = vld [vmem:[#allocation27 + $0x64] sm:$0xf]
          %v6722 = vld [vmem:[#allocation27 + $0x68] sm:$0xf]
          %v6723 = vld [vmem:[#allocation27 + $0x6c] sm:$0xf]
          %v6724 = vld [vmem:[#allocation27 + $0x70] sm:$0xf]
          %v6725 = vld [vmem:[#allocation27 + $0x74] sm:$0xf]
          %v6726 = vld [vmem:[#allocation27 + $0x78] sm:$0xf]
          %v6727 = vld [vmem:[#allocation27 + $0x7c] sm:$0xf]
          %v6728 = vld [vmem:[#allocation28] sm:$0x1]
          %v6730 = vlaneseq
          %v6731 = vshrl.u32 %v6730, 7
          %v6732 = vsub.s32 0, %v6731
          %v6733 = vrot.slane %v6728, %v6732
          %v6767 = vunpack.c.l.b16 %v6696
          %v6768 = vunpack.c.l.b16 %v6697
          %v6769 = vunpack.c.l.b16 %v6698
          %v6770 = vunpack.c.l.b16 %v6699
          %v6771 = vunpack.c.l.b16 %v6700
          %v6772 = vunpack.c.l.b16 %v6701
          %v6773 = vunpack.c.l.b16 %v6702
          %v6774 = vunpack.c.l.b16 %v6703
          %v6775 = vunpack.c.l.b16 %v6704
          %v6776 = vunpack.c.l.b16 %v6705
          %v6777 = vunpack.c.l.b16 %v6706
          %v6778 = vunpack.c.l.b16 %v6707
          %v6779 = vunpack.c.l.b16 %v6708
          %v6780 = vunpack.c.l.b16 %v6709
          %v6781 = vunpack.c.l.b16 %v6710
          %v6782 = vunpack.c.l.b16 %v6711
          %v6783 = vunpack.c.l.b16 %v6712
          %v6784 = vunpack.c.l.b16 %v6713
          %v6785 = vunpack.c.l.b16 %v6714
          %v6786 = vunpack.c.l.b16 %v6715
          %v6787 = vunpack.c.l.b16 %v6716
          %v6788 = vunpack.c.l.b16 %v6717
          %v6789 = vunpack.c.l.b16 %v6718
          %v6790 = vunpack.c.l.b16 %v6719
          %v6791 = vunpack.c.l.b16 %v6720
          %v6792 = vunpack.c.l.b16 %v6721
          %v6793 = vunpack.c.l.b16 %v6722
          %v6794 = vunpack.c.l.b16 %v6723
          %v6795 = vunpack.c.l.b16 %v6724
          %v6796 = vunpack.c.l.b16 %v6725
          %v6797 = vunpack.c.l.b16 %v6726
          %v6798 = vunpack.c.l.b16 %v6727
          %v6799 = vpack.c.b16 %v6768, %v6767
          %v6800 = vpack.c.b16 %v6770, %v6769
          %v6801 = vpack.c.b16 %v6772, %v6771
          %v6802 = vpack.c.b16 %v6774, %v6773
          %v6803 = vpack.c.b16 %v6776, %v6775
          %v6804 = vpack.c.b16 %v6778, %v6777
          %v6805 = vpack.c.b16 %v6780, %v6779
          %v6806 = vpack.c.b16 %v6782, %v6781
          %v6807 = vpack.c.b16 %v6784, %v6783
          %v6808 = vpack.c.b16 %v6786, %v6785
          %v6809 = vpack.c.b16 %v6788, %v6787
          %v6810 = vpack.c.b16 %v6790, %v6789
          %v6811 = vpack.c.b16 %v6792, %v6791
          %v6812 = vpack.c.b16 %v6794, %v6793
          %v6813 = vpack.c.b16 %v6796, %v6795
          %v6814 = vpack.c.b16 %v6798, %v6797
          %6831 = vmatprep.subr.bf16.mxu0 0
          %6832 = vmatpush1.bf16.msra.mxu0 %v6799
          %6833 = vmatprep.subr.bf16.mxu0 0
          %6834 = vmatpush1.bf16.msra.mxu0 %v6800
          %6835 = vmatprep.subr.bf16.mxu0 0
          %6836 = vmatpush1.bf16.msra.mxu0 %v6801
          %6837 = vmatprep.subr.bf16.mxu0 0
          %6838 = vmatpush1.bf16.msra.mxu0 %v6802
          %6839 = vmatprep.subr.bf16.mxu0 0
          %6840 = vmatpush1.bf16.msra.mxu0 %v6803
          %6841 = vmatprep.subr.bf16.mxu0 0
          %6842 = vmatpush1.bf16.msra.mxu0 %v6804
          %6843 = vmatprep.subr.bf16.mxu0 0
          %6844 = vmatpush1.bf16.msra.mxu0 %v6805
          %6845 = vmatprep.subr.bf16.mxu0 0
          %6846 = vmatpush1.bf16.msra.mxu0 %v6806
          %6847 = vmatprep.subr.bf16.mxu0 0
          %6848 = vmatpush1.bf16.msra.mxu0 %v6807
          %6849 = vmatprep.subr.bf16.mxu0 0
          %6850 = vmatpush1.bf16.msra.mxu0 %v6808
          %6851 = vmatprep.subr.bf16.mxu0 0
          %6852 = vmatpush1.bf16.msra.mxu0 %v6809
          %6853 = vmatprep.subr.bf16.mxu0 0
          %6854 = vmatpush1.bf16.msra.mxu0 %v6810
          %6855 = vmatprep.subr.bf16.mxu0 0
          %6856 = vmatpush1.bf16.msra.mxu0 %v6811
          %6857 = vmatprep.subr.bf16.mxu0 0
          %6858 = vmatpush1.bf16.msra.mxu0 %v6812
          %6859 = vmatprep.subr.bf16.mxu0 0
          %6860 = vmatpush1.bf16.msra.mxu0 %v6813
          %6861 = vmatprep.subr.bf16.mxu0 0
          %6862 = vmatpush1.bf16.msra.mxu0 %v6814
          %6863 = vmatprep.mubr.bf16.mxu0 %v6695
          %6864 = vmatmul.mubr.bf16.gmra.mrb[0].mxu0 %v6694
          %v6865 = vpop.f32.mrb[0].mxu0
          %v6866 = vadd.f32 %v6733, %v6865
          %v6867 = vpop.f32.mrb[0].mxu0
          %v6868 = vpop.f32.mrb[0].mxu0
          %v6869 = vpop.f32.mrb[0].mxu0
          %6870 = vdwg.mxu0
          %6871 = vst [vmem:[#allocation30] sm:$0xff] %v6866
        $region160: #{tpu_custom_call.1} parent=87 // pred_fallthru
          _
        // Predicated region
        $region161: #{tpu_custom_call.1} parent=87 // pred_check
          %p6872 = pneg %p415
        $region162: #{tpu_custom_call.1} parent=87 // pred_check_branch
          %6874 = sbr.rel (%p6872) target = $region164
        $region163: #{tpu_custom_call.1} parent=87 // pred_region
          %s6876 = ssub.s32 128, 128
          %6877 = vsyncadd [#allocation6], %s6876
          %s6879 = sshll.u32 [#allocation30], 4
          %s6880 = int_to_ptr.vmem [resolvable:$true] %s6879
          %6882 = dma.vmem_to_hbm [thread:$0]  %s6880, 128, %s17, [#allocation6]
        $region164: #{tpu_custom_call.1} parent=87 // pred_fallthru
          _
        // Predicated region
        $region165: #{tpu_custom_call.1} parent=87 // pred_check
          %p6883 = pneg %p415
        $region166: #{tpu_custom_call.1} parent=87 // pred_check_branch
          %6885 = sbr.rel (%p6883) target = $region168
        $region167: #{tpu_custom_call.1} parent=87 // pred_region
          %6886 = dma.done [#allocation6], 128
        $region168: #{tpu_custom_call.1} parent=87 // pred_fallthru
          _
      $region88: #{tpu_custom_call.1} parent=5 // pred_fallthru
        _
      %p6887 = scmp.le.s32.totalorder 2, %s35
      // Predicated region
      $region169: #{tpu_custom_call.1} parent=5 // pred_check
        %p6888 = pneg %p6887
      $region170: #{tpu_custom_call.1} parent=5 // pred_check_branch
        %6890 = sbr.rel (%p6888) target = $region172
      $region171: #{tpu_custom_call.1} parent=5 // pred_region
        %s6891 = ssub.s32 %s35, 2
      $region172: #{tpu_custom_call.1} parent=5 // pred_fallthru
        _
    $region6: #{tpu_custom_call.1} parent=1 // loop_footer
      %s39 = sadd.s32 1, %s35
    $region7: #{tpu_custom_call.1} parent=1 // loop_footer_branch
      %34 = sbr.rel target = $region3
    $region8: #{tpu_custom_call.1} parent=1 // loop_exit
      _
    %6892 = vsyncpa [#allocation5], 1
    %s6893 = scalar_lea.sflag [#allocation5], 1
    %6894 = vsyncpa %s6893, 1
    %6895 = vsyncpa [#allocation8], 1
    %6896 = vsyncpa [#allocation11], 1
    %6897 = vsyncpa [#allocation14], 1
    %s6898 = scalar_lea.sflag [#allocation14], 1
    %6899 = vsyncpa %s6898, 1
    %6900 = vsyncpa [#allocation17], 1
    %6901 = vsyncpa [#allocation20], 1
    %6902 = vsyncpa [#allocation23], 1
    %6903 = vsyncpa [#allocation26], 1
    %6904 = vsyncpa [#allocation29], 1
    %6905 = vsyncpa [#allocation6], 1
    %s6906 = scalar_lea.sflag [#allocation6], 1
    %6907 = vsyncpa %s6906, 1

</llo_original>
